<compile_context>
chip_gen: v6e
topology: v6e:2x2x1
jax: 0.10.0
libtpu: 0.0.40
codegen_flags: <defaults>
</compile_context>

<pallas_src>
import functools

import jax
import jax.numpy as jnp
from jax import lax
from jax.experimental import pallas as pl
from jax.experimental.pallas import tpu as pltpu


# ------------------------------ Pallas kernel ------------------------------

def _dot_nt(a_bf16, b_bf16):
    """a @ b^T on the MXU with f32 accumulation, no explicit transpose."""
    return lax.dot_general(
        a_bf16, b_bf16,
        dimension_numbers=(((1,), (1,)), ((), ())),
        preferred_element_type=jnp.float32)


def _fused_attention_kernel(xq_ref, xk_ref, xv_ref,
                            wq_ref, bq_ref, wk_ref, bk_ref, wv_ref, bv_ref,
                            wo_ref, bo_ref, pos_ref,
                            o_ref,
                            *, batch, seq_len, heads, head_dim, query_seq_len):
    L, D = seq_len, head_dim
    max_rel = query_seq_len - 1
    bf16 = jnp.bfloat16
    scale = 1.0 / (D ** 0.5)

    # Batch-folded Q/K/V projections: (B*L, H) @ (H, H) on the MXU, f32 acc.
    q = jnp.dot(xq_ref[...].astype(bf16), wq_ref[...],
                preferred_element_type=jnp.float32) + bq_ref[...]
    k = jnp.dot(xk_ref[...].astype(bf16), wk_ref[...],
                preferred_element_type=jnp.float32) + bk_ref[...]
    v = jnp.dot(xv_ref[...].astype(bf16), wv_ref[...],
                preferred_element_type=jnp.float32) + bv_ref[...]
    q = q * scale                                        # scaled query (f32)

    pos = pos_ref[...]                                   # (rel_num, D) f32

    batch_outs = []
    for b in range(batch):                               # static unroll (small B)
        rs = slice(b * L, (b + 1) * L)
        head_outs = []
        for h in range(heads):                           # static unroll over heads
            cs = slice(h * D, (h + 1) * D)
            qh = q[rs, cs].astype(bf16)                  # (L, D)
            vh = v[rs, cs].astype(bf16)                  # (L, D)

            # One MXU issue per head: scores AND relative-position logits.
            #   rhs = [kh ; pos_emb]  -> fused = qh @ rhs^T = [scores | rel]
            rhs = jnp.concatenate([k[rs, cs], pos], axis=0).astype(bf16)
            fused = _dot_nt(qh, rhs)                     # (L, L + rel_num) f32
            scores = fused[:, :L]

            # Skew the relative logits onto diagonals:
            #   bias[i, j] = rel[i, j - i + max_rel] = fused[i, L + max_rel - i + j]
            # (L <= query_seq_len so the clamp in the reference is a no-op and
            #  every window is a contiguous in-bounds slice.)
            bias_rows = [
                fused[i:i + 1, L + max_rel - i: L + max_rel - i + L]
                for i in range(L)
            ]
            bias = jnp.concatenate(bias_rows, axis=0)    # (L, L)

            s = scores + bias
            m = jnp.max(s, axis=-1, keepdims=True)
            e = jnp.exp(s - m)
            denom = jnp.sum(e, axis=-1, keepdims=True)
            probs = e * pl.reciprocal(denom, approx=True)

            head_outs.append(
                jnp.dot(probs.astype(bf16), vh,
                        preferred_element_type=jnp.float32))     # (L, D)
        batch_outs.append(jnp.concatenate(head_outs, axis=1))    # (L, H)

    attn = jnp.concatenate(batch_outs, axis=0)           # (B*L, H) f32, lane-dense

    out = jnp.dot(attn.astype(bf16), wo_ref[...],
                  preferred_element_type=jnp.float32) + bo_ref[...]
    o_ref[...] = out.astype(o_ref.dtype)                 # one lane-dense store


# ----------------------------- module wrapper ------------------------------

def init_params(key, query_seq_len, hidden_size, heads):
    head_dim = hidden_size // heads
    rel_num = 2 * (query_seq_len - 1) + 1
    ks = jax.random.split(key, 9)

    def lin_init(kw, kb, fan_in, fan_out):
        bound = 1.0 / (fan_in ** 0.5)
        w = jax.random.uniform(kw, (fan_in, fan_out), jnp.float32, -bound, bound)
        b = jax.random.uniform(kb, (fan_out,), jnp.float32, -bound, bound)
        return w, b

    wq, bq = lin_init(ks[0], ks[1], hidden_size, hidden_size)
    wk, bk = lin_init(ks[2], ks[3], hidden_size, hidden_size)
    wv, bv = lin_init(ks[4], ks[5], hidden_size, hidden_size)
    wo, bo = lin_init(ks[6], ks[7], hidden_size, hidden_size)
    xav = (6.0 / (rel_num + head_dim)) ** 0.5                # xavier_uniform
    pos_emb = jax.random.uniform(ks[8], (rel_num, head_dim), jnp.float32, -xav, xav)
    return dict(wq=wq, bq=bq, wk=wk, bk=bk, wv=wv, bv=bv, wo=wo, bo=bo,
                pos_emb=pos_emb)


def prepare_params(params):
    """One-time kernel-ready param prep: bf16 weights, (1, H) f32 biases."""
    bf16 = jnp.bfloat16
    H = params["wq"].shape[0]
    return dict(
        wq=params["wq"].astype(bf16), wk=params["wk"].astype(bf16),
        wv=params["wv"].astype(bf16), wo=params["wo"].astype(bf16),
        bq=params["bq"].reshape(1, H), bk=params["bk"].reshape(1, H),
        bv=params["bv"].reshape(1, H), bo=params["bo"].reshape(1, H),
        pos=params["pos_emb"],                       # (rel_num, D) f32
    )


def transformer_attention_forward(kparams, query, key, value, *,
                                  query_seq_len, heads):
    B, L, H = query.shape
    D = H // heads
    rel_num = 2 * (query_seq_len - 1) + 1
    assert L <= query_seq_len, "relative-position table sized for query_seq_len"

    # Fold batch into rows outside the kernel (free reshape in XLA).
    xq = query.reshape(B * L, H)
    xk = key.reshape(B * L, H)
    xv = value.reshape(B * L, H)

    kernel = functools.partial(_fused_attention_kernel, batch=B, seq_len=L,
                               heads=heads, head_dim=D,
                               query_seq_len=query_seq_len)
    full = lambda i: (0, 0)

    out = pl.pallas_call(
        kernel,
        out_shape=jax.ShapeDtypeStruct((B * L, H), jnp.float32),
        grid=(1,),
        in_specs=[
            pl.BlockSpec((B * L, H), full),      # query  (rows-folded)
            pl.BlockSpec((B * L, H), full),      # key
            pl.BlockSpec((B * L, H), full),      # value
            pl.BlockSpec((H, H), full),          # Wq
            pl.BlockSpec((1, H), full),          # bq
            pl.BlockSpec((H, H), full),          # Wk
            pl.BlockSpec((1, H), full),          # bk
            pl.BlockSpec((H, H), full),          # Wv
            pl.BlockSpec((1, H), full),          # bv
            pl.BlockSpec((H, H), full),          # Wo
            pl.BlockSpec((1, H), full),          # bo
            pl.BlockSpec((rel_num, D), full),    # pos_emb
        ],
        out_specs=pl.BlockSpec((B * L, H), full),
        compiler_params=pltpu.CompilerParams(
            dimension_semantics=("arbitrary",)),
    )(xq, xk, xv,
      kparams["wq"], kparams["bq"], kparams["wk"], kparams["bk"],
      kparams["wv"], kparams["bv"], kparams["wo"], kparams["bo"],
      kparams["pos"])
    return out.reshape(B, L, H)


# ------------------------- pure-JAX reference check ------------------------

def reference_forward(params, query, key, value, *, query_seq_len, heads,
                      mm_dtype=jnp.float32):
    """Mirror of the PyTorch forward (gather-table relative bias).

    mm_dtype=float32  -> exact module semantics.
    mm_dtype=bfloat16 -> matmul operands rounded to bf16 with f32
                         accumulation, matching the kernel's precision.
    """
    B, L, H = query.shape
    D = H // heads
    f32 = jnp.float32
    c = lambda x: x.astype(mm_dtype)

    def lin(x, w, b):
        return jnp.einsum("blh,hk->blk", c(x), c(w),
                          preferred_element_type=f32) + b

    q = lin(query, params["wq"], params["bq"])
    k = lin(key, params["wk"], params["bk"])
    v = lin(value, params["wv"], params["bv"])

    def split(x):   # (B, L, H) -> (B, heads, L, D)
        return x.reshape(B, L, heads, D).transpose(0, 2, 1, 3)

    q, k, v = split(q), split(k), split(v)
    q = q / (D ** 0.5)
    attn = jnp.einsum("bhid,bhjd->bhij", c(q), c(k), preferred_element_type=f32)

    positions = jnp.arange(L)
    relpos = positions[None, :] - positions[:, None]
    maxrel = query_seq_len - 1
    relpos = jnp.clip(relpos, -maxrel, maxrel) + maxrel
    rel_emb = params["pos_emb"][relpos]                       # (L, L, D)
    attn = attn + jnp.einsum("bhqd,qkd->bhqk", c(q), c(rel_emb),
                             preferred_element_type=f32)

    probs = jax.nn.softmax(attn, axis=-1)
    out = jnp.einsum("bhqk,bhkd->bhqd", c(probs), c(v),
                     preferred_element_type=f32)
    out = out.transpose(0, 2, 1, 3).reshape(B, L, H)
    return jnp.einsum("blh,hk->blk", c(out), c(params["wo"]),
                      preferred_element_type=f32) + params["bo"]


# --------------------------------- main -------------------------------------

if __name__ == "__main__":
    B, L, H, heads = 2, 8, 64, 8   # query_seq_len=8, hidden_size=64, head_dim=8

    root = jax.random.PRNGKey(0)
    k_params, k_q, k_k, k_v = jax.random.split(root, 4)
    params = init_params(k_params, query_seq_len=L, hidden_size=H, heads=heads)
    kparams = prepare_params(params)          # one-time bf16 weight cast

    query = jax.random.normal(k_q, (B, L, H), jnp.float32)
    key_t = jax.random.normal(k_k, (B, L, H), jnp.float32)
    value = jax.random.normal(k_v, (B, L, H), jnp.float32)

    out = transformer_attention_forward(
        kparams, query, key_t, value, query_seq_len=L, heads=heads)
    out = jax.block_until_ready(out)
    assert out.shape == (B, L, H)

    # Tight check vs a precision-matched (bf16 matmul operands) reference that
    # uses the independent gather-table formulation of the relative bias.
    ref_bf16 = reference_forward(params, query, key_t, value,
                                 query_seq_len=L, heads=heads,
                                 mm_dtype=jnp.bfloat16)
    assert jnp.allclose(out, ref_bf16, atol=1e-2, rtol=1e-2), (
        float(jnp.max(jnp.abs(out - ref_bf16))))

    # Loose check vs the exact float32 module semantics (bf16 MXU rounding).
    ref_f32 = reference_forward(params, query, key_t, value,
                                query_seq_len=L, heads=heads,
                                mm_dtype=jnp.float32)
    assert jnp.allclose(out, ref_f32, atol=5e-2, rtol=5e-2), (
        float(jnp.max(jnp.abs(out - ref_f32))))

    print("KERNEL_OK")
</pallas_src>

<mosaic_0001>
module attributes {stable_mosaic.version = 11 : i64} {
  func.func @_fused_attention_kernel(%arg0: i32, %arg1: memref<16x64xf32, #tpu.memory_space<vmem>>, %arg2: memref<16x64xf32, #tpu.memory_space<vmem>>, %arg3: memref<16x64xf32, #tpu.memory_space<vmem>>, %arg4: memref<64x64xbf16, #tpu.memory_space<vmem>>, %arg5: memref<1x64xf32, #tpu.memory_space<vmem>>, %arg6: memref<64x64xbf16, #tpu.memory_space<vmem>>, %arg7: memref<1x64xf32, #tpu.memory_space<vmem>>, %arg8: memref<64x64xbf16, #tpu.memory_space<vmem>>, %arg9: memref<1x64xf32, #tpu.memory_space<vmem>>, %arg10: memref<64x64xbf16, #tpu.memory_space<vmem>>, %arg11: memref<1x64xf32, #tpu.memory_space<vmem>>, %arg12: memref<15x8xf32, #tpu.memory_space<vmem>>, %arg13: memref<16x64xf32, #tpu.memory_space<vmem>>) attributes {dimension_semantics = [#tpu.dimension_semantics<arbitrary>], iteration_bounds = array<i64: 1>, scalar_prefetch = 0 : i64, scratch_operands = 0 : i64, tpu.core_type = #tpu.core_type<tc>, window_params = [{pipeline_mode = #tpu.pipeline_mode<synchronous>, transform_indices = @transform_0, window_bounds = array<i64: 16, 64>}, {pipeline_mode = #tpu.pipeline_mode<synchronous>, transform_indices = @transform_1, window_bounds = array<i64: 16, 64>}, {pipeline_mode = #tpu.pipeline_mode<synchronous>, transform_indices = @transform_2, window_bounds = array<i64: 16, 64>}, {pipeline_mode = #tpu.pipeline_mode<synchronous>, transform_indices = @transform_3, window_bounds = array<i64: 64, 64>}, {pipeline_mode = #tpu.pipeline_mode<synchronous>, transform_indices = @transform_4, window_bounds = array<i64: 1, 64>}, {pipeline_mode = #tpu.pipeline_mode<synchronous>, transform_indices = @transform_5, window_bounds = array<i64: 64, 64>}, {pipeline_mode = #tpu.pipeline_mode<synchronous>, transform_indices = @transform_6, window_bounds = array<i64: 1, 64>}, {pipeline_mode = #tpu.pipeline_mode<synchronous>, transform_indices = @transform_7, window_bounds = array<i64: 64, 64>}, {pipeline_mode = #tpu.pipeline_mode<synchronous>, transform_indices = @transform_8, window_bounds = array<i64: 1, 64>}, {pipeline_mode = #tpu.pipeline_mode<synchronous>, transform_indices = @transform_9, window_bounds = array<i64: 64, 64>}, {pipeline_mode = #tpu.pipeline_mode<synchronous>, transform_indices = @transform_10, window_bounds = array<i64: 1, 64>}, {pipeline_mode = #tpu.pipeline_mode<synchronous>, transform_indices = @transform_11, window_bounds = array<i64: 15, 8>}, {pipeline_mode = #tpu.pipeline_mode<synchronous>, transform_indices = @transform_12, window_bounds = array<i64: 16, 64>}]} {
    %c0 = arith.constant 0 : index
    %c0_0 = arith.constant 0 : index
    %0 = vector.load %arg1[%c0, %c0_0] : memref<16x64xf32, #tpu.memory_space<vmem>>, vector<16x64xf32>
    %1 = arith.truncf %0 : vector<16x64xf32> to vector<16x64xbf16>
    %c0_1 = arith.constant 0 : index
    %c0_2 = arith.constant 0 : index
    %2 = vector.load %arg4[%c0_1, %c0_2] : memref<64x64xbf16, #tpu.memory_space<vmem>>, vector<64x64xbf16>
    %cst = arith.constant dense<0.000000e+00> : vector<16x64xf32>
    %3 = tpu.matmul %1, %2, %cst {dimension_numbers = #tpu.dot_dimension_numbers<[1], [0], [0], [1], [0, 0, 1, 1], [], []>} : vector<16x64xbf16>, vector<64x64xbf16>, vector<16x64xf32> -> vector<16x64xf32>
    %c0_3 = arith.constant 0 : index
    %c0_4 = arith.constant 0 : index
    %4 = vector.load %arg5[%c0_3, %c0_4] : memref<1x64xf32, #tpu.memory_space<vmem>>, vector<1x64xf32>
    %5 = vector.broadcast %4 : vector<1x64xf32> to vector<16x64xf32>
    %6 = arith.addf %3, %5 : vector<16x64xf32>
    %c0_5 = arith.constant 0 : index
    %c0_6 = arith.constant 0 : index
    %7 = vector.load %arg2[%c0_5, %c0_6] : memref<16x64xf32, #tpu.memory_space<vmem>>, vector<16x64xf32>
    %8 = arith.truncf %7 : vector<16x64xf32> to vector<16x64xbf16>
    %c0_7 = arith.constant 0 : index
    %c0_8 = arith.constant 0 : index
    %9 = vector.load %arg6[%c0_7, %c0_8] : memref<64x64xbf16, #tpu.memory_space<vmem>>, vector<64x64xbf16>
    %cst_9 = arith.constant dense<0.000000e+00> : vector<16x64xf32>
    %10 = tpu.matmul %8, %9, %cst_9 {dimension_numbers = #tpu.dot_dimension_numbers<[1], [0], [0], [1], [0, 0, 1, 1], [], []>} : vector<16x64xbf16>, vector<64x64xbf16>, vector<16x64xf32> -> vector<16x64xf32>
    %c0_10 = arith.constant 0 : index
    %c0_11 = arith.constant 0 : index
    %11 = vector.load %arg7[%c0_10, %c0_11] : memref<1x64xf32, #tpu.memory_space<vmem>>, vector<1x64xf32>
    %12 = vector.broadcast %11 : vector<1x64xf32> to vector<16x64xf32>
    %13 = arith.addf %10, %12 : vector<16x64xf32>
    %c0_12 = arith.constant 0 : index
    %c0_13 = arith.constant 0 : index
    %14 = vector.load %arg3[%c0_12, %c0_13] : memref<16x64xf32, #tpu.memory_space<vmem>>, vector<16x64xf32>
    %15 = arith.truncf %14 : vector<16x64xf32> to vector<16x64xbf16>
    %c0_14 = arith.constant 0 : index
    %c0_15 = arith.constant 0 : index
    %16 = vector.load %arg8[%c0_14, %c0_15] : memref<64x64xbf16, #tpu.memory_space<vmem>>, vector<64x64xbf16>
    %cst_16 = arith.constant dense<0.000000e+00> : vector<16x64xf32>
    %17 = tpu.matmul %15, %16, %cst_16 {dimension_numbers = #tpu.dot_dimension_numbers<[1], [0], [0], [1], [0, 0, 1, 1], [], []>} : vector<16x64xbf16>, vector<64x64xbf16>, vector<16x64xf32> -> vector<16x64xf32>
    %c0_17 = arith.constant 0 : index
    %c0_18 = arith.constant 0 : index
    %18 = vector.load %arg9[%c0_17, %c0_18] : memref<1x64xf32, #tpu.memory_space<vmem>>, vector<1x64xf32>
    %19 = vector.broadcast %18 : vector<1x64xf32> to vector<16x64xf32>
    %20 = arith.addf %17, %19 : vector<16x64xf32>
    %cst_19 = arith.constant 0.353553385 : f32
    %21 = vector.broadcast %cst_19 : f32 to vector<16x64xf32>
    %22 = arith.mulf %6, %21 : vector<16x64xf32>
    %c0_20 = arith.constant 0 : index
    %c0_21 = arith.constant 0 : index
    %23 = vector.load %arg12[%c0_20, %c0_21] : memref<15x8xf32, #tpu.memory_space<vmem>>, vector<15x8xf32>
    %24 = vector.extract_strided_slice %22 {offsets = [0, 0], sizes = [8, 8], strides = [1, 1]} : vector<16x64xf32> to vector<8x8xf32>
    %25 = arith.truncf %24 : vector<8x8xf32> to vector<8x8xbf16>
    %26 = vector.extract_strided_slice %20 {offsets = [0, 0], sizes = [8, 8], strides = [1, 1]} : vector<16x64xf32> to vector<8x8xf32>
    %27 = arith.truncf %26 : vector<8x8xf32> to vector<8x8xbf16>
    %28 = vector.extract_strided_slice %13 {offsets = [0, 0], sizes = [8, 8], strides = [1, 1]} : vector<16x64xf32> to vector<8x8xf32>
    %29 = tpu.concatenate %28, %23 in 0 : vector<8x8xf32>, vector<15x8xf32> -> vector<23x8xf32>
    %30 = arith.truncf %29 : vector<23x8xf32> to vector<23x8xbf16>
    %cst_22 = arith.constant dense<0.000000e+00> : vector<8x23xf32>
    %31 = tpu.matmul %25, %30, %cst_22 {dimension_numbers = #tpu.dot_dimension_numbers<[1], [1], [0], [0], [0, 0, 1, 0], [], []>} : vector<8x8xbf16>, vector<23x8xbf16>, vector<8x23xf32> -> vector<8x23xf32>
    %32 = vector.extract_strided_slice %31 {offsets = [0, 0], sizes = [8, 8], strides = [1, 1]} : vector<8x23xf32> to vector<8x8xf32>
    %33 = vector.extract_strided_slice %31 {offsets = [0, 15], sizes = [1, 8], strides = [1, 1]} : vector<8x23xf32> to vector<1x8xf32>
    %34 = vector.extract_strided_slice %31 {offsets = [1, 14], sizes = [1, 8], strides = [1, 1]} : vector<8x23xf32> to vector<1x8xf32>
    %35 = vector.extract_strided_slice %31 {offsets = [2, 13], sizes = [1, 8], strides = [1, 1]} : vector<8x23xf32> to vector<1x8xf32>
    %36 = vector.extract_strided_slice %31 {offsets = [3, 12], sizes = [1, 8], strides = [1, 1]} : vector<8x23xf32> to vector<1x8xf32>
    %37 = vector.extract_strided_slice %31 {offsets = [4, 11], sizes = [1, 8], strides = [1, 1]} : vector<8x23xf32> to vector<1x8xf32>
    %38 = vector.extract_strided_slice %31 {offsets = [5, 10], sizes = [1, 8], strides = [1, 1]} : vector<8x23xf32> to vector<1x8xf32>
    %39 = vector.extract_strided_slice %31 {offsets = [6, 9], sizes = [1, 8], strides = [1, 1]} : vector<8x23xf32> to vector<1x8xf32>
    %40 = vector.extract_strided_slice %31 {offsets = [7, 8], sizes = [1, 8], strides = [1, 1]} : vector<8x23xf32> to vector<1x8xf32>
    %41 = tpu.concatenate %33, %34, %35, %36, %37, %38, %39, %40 in 0 : vector<1x8xf32>, vector<1x8xf32>, vector<1x8xf32>, vector<1x8xf32>, vector<1x8xf32>, vector<1x8xf32>, vector<1x8xf32>, vector<1x8xf32> -> vector<8x8xf32>
    %42 = arith.addf %32, %41 : vector<8x8xf32>
    %cst_23 = arith.constant dense<0xFF800000> : vector<8xf32>
    %43 = vector.multi_reduction <maximumf>, %42, %cst_23 [1] : vector<8x8xf32> to vector<8xf32>
    %44 = vector.shape_cast %43 : vector<8xf32> to vector<8x1xf32>
    %45 = vector.broadcast %44 : vector<8x1xf32> to vector<8x8xf32>
    %46 = arith.subf %42, %45 : vector<8x8xf32>
    %47 = math.exp %46 : vector<8x8xf32>
    %cst_24 = arith.constant dense<0.000000e+00> : vector<8xf32>
    %48 = vector.multi_reduction <add>, %47, %cst_24 [1] : vector<8x8xf32> to vector<8xf32>
    %49 = vector.shape_cast %48 : vector<8xf32> to vector<8x1xf32>
    %50 = tpu.reciprocal %49 {approx = true} : vector<8x1xf32> -> vector<8x1xf32>
    %51 = vector.broadcast %50 : vector<8x1xf32> to vector<8x8xf32>
    %52 = arith.mulf %47, %51 : vector<8x8xf32>
    %53 = arith.truncf %52 : vector<8x8xf32> to vector<8x8xbf16>
    %cst_25 = arith.constant dense<0.000000e+00> : vector<8x8xf32>
    %54 = tpu.matmul %53, %27, %cst_25 {dimension_numbers = #tpu.dot_dimension_numbers<[1], [0], [0], [1], [0, 0, 1, 1], [], []>} : vector<8x8xbf16>, vector<8x8xbf16>, vector<8x8xf32> -> vector<8x8xf32>
    %55 = vector.extract_strided_slice %22 {offsets = [0, 8], sizes = [8, 8], strides = [1, 1]} : vector<16x64xf32> to vector<8x8xf32>
    %56 = arith.truncf %55 : vector<8x8xf32> to vector<8x8xbf16>
    %57 = vector.extract_strided_slice %20 {offsets = [0, 8], sizes = [8, 8], strides = [1, 1]} : vector<16x64xf32> to vector<8x8xf32>
    %58 = arith.truncf %57 : vector<8x8xf32> to vector<8x8xbf16>
    %59 = vector.extract_strided_slice %13 {offsets = [0, 8], sizes = [8, 8], strides = [1, 1]} : vector<16x64xf32> to vector<8x8xf32>
    %60 = tpu.concatenate %59, %23 in 0 : vector<8x8xf32>, vector<15x8xf32> -> vector<23x8xf32>
    %61 = arith.truncf %60 : vector<23x8xf32> to vector<23x8xbf16>
    %cst_26 = arith.constant dense<0.000000e+00> : vector<8x23xf32>
    %62 = tpu.matmul %56, %61, %cst_26 {dimension_numbers = #tpu.dot_dimension_numbers<[1], [1], [0], [0], [0, 0, 1, 0], [], []>} : vector<8x8xbf16>, vector<23x8xbf16>, vector<8x23xf32> -> vector<8x23xf32>
    %63 = vector.extract_strided_slice %62 {offsets = [0, 0], sizes = [8, 8], strides = [1, 1]} : vector<8x23xf32> to vector<8x8xf32>
    %64 = vector.extract_strided_slice %62 {offsets = [0, 15], sizes = [1, 8], strides = [1, 1]} : vector<8x23xf32> to vector<1x8xf32>
    %65 = vector.extract_strided_slice %62 {offsets = [1, 14], sizes = [1, 8], strides = [1, 1]} : vector<8x23xf32> to vector<1x8xf32>
    %66 = vector.extract_strided_slice %62 {offsets = [2, 13], sizes = [1, 8], strides = [1, 1]} : vector<8x23xf32> to vector<1x8xf32>
    %67 = vector.extract_strided_slice %62 {offsets = [3, 12], sizes = [1, 8], strides = [1, 1]} : vector<8x23xf32> to vector<1x8xf32>
    %68 = vector.extract_strided_slice %62 {offsets = [4, 11], sizes = [1, 8], strides = [1, 1]} : vector<8x23xf32> to vector<1x8xf32>
    %69 = vector.extract_strided_slice %62 {offsets = [5, 10], sizes = [1, 8], strides = [1, 1]} : vector<8x23xf32> to vector<1x8xf32>
    %70 = vector.extract_strided_slice %62 {offsets = [6, 9], sizes = [1, 8], strides = [1, 1]} : vector<8x23xf32> to vector<1x8xf32>
    %71 = vector.extract_strided_slice %62 {offsets = [7, 8], sizes = [1, 8], strides = [1, 1]} : vector<8x23xf32> to vector<1x8xf32>
    %72 = tpu.concatenate %64, %65, %66, %67, %68, %69, %70, %71 in 0 : vector<1x8xf32>, vector<1x8xf32>, vector<1x8xf32>, vector<1x8xf32>, vector<1x8xf32>, vector<1x8xf32>, vector<1x8xf32>, vector<1x8xf32> -> vector<8x8xf32>
    %73 = arith.addf %63, %72 : vector<8x8xf32>
    %cst_27 = arith.constant dense<0xFF800000> : vector<8xf32>
    %74 = vector.multi_reduction <maximumf>, %73, %cst_27 [1] : vector<8x8xf32> to vector<8xf32>
    %75 = vector.shape_cast %74 : vector<8xf32> to vector<8x1xf32>
    %76 = vector.broadcast %75 : vector<8x1xf32> to vector<8x8xf32>
    %77 = arith.subf %73, %76 : vector<8x8xf32>
    %78 = math.exp %77 : vector<8x8xf32>
    %cst_28 = arith.constant dense<0.000000e+00> : vector<8xf32>
    %79 = vector.multi_reduction <add>, %78, %cst_28 [1] : vector<8x8xf32> to vector<8xf32>
    %80 = vector.shape_cast %79 : vector<8xf32> to vector<8x1xf32>
    %81 = tpu.reciprocal %80 {approx = true} : vector<8x1xf32> -> vector<8x1xf32>
    %82 = vector.broadcast %81 : vector<8x1xf32> to vector<8x8xf32>
    %83 = arith.mulf %78, %82 : vector<8x8xf32>
    %84 = arith.truncf %83 : vector<8x8xf32> to vector<8x8xbf16>
    %cst_29 = arith.constant dense<0.000000e+00> : vector<8x8xf32>
    %85 = tpu.matmul %84, %58, %cst_29 {dimension_numbers = #tpu.dot_dimension_numbers<[1], [0], [0], [1], [0, 0, 1, 1], [], []>} : vector<8x8xbf16>, vector<8x8xbf16>, vector<8x8xf32> -> vector<8x8xf32>
    %86 = vector.extract_strided_slice %22 {offsets = [0, 16], sizes = [8, 8], strides = [1, 1]} : vector<16x64xf32> to vector<8x8xf32>
    %87 = arith.truncf %86 : vector<8x8xf32> to vector<8x8xbf16>
    %88 = vector.extract_strided_slice %20 {offsets = [0, 16], sizes = [8, 8], strides = [1, 1]} : vector<16x64xf32> to vector<8x8xf32>
    %89 = arith.truncf %88 : vector<8x8xf32> to vector<8x8xbf16>
    %90 = vector.extract_strided_slice %13 {offsets = [0, 16], sizes = [8, 8], strides = [1, 1]} : vector<16x64xf32> to vector<8x8xf32>
    %91 = tpu.concatenate %90, %23 in 0 : vector<8x8xf32>, vector<15x8xf32> -> vector<23x8xf32>
    %92 = arith.truncf %91 : vector<23x8xf32> to vector<23x8xbf16>
    %cst_30 = arith.constant dense<0.000000e+00> : vector<8x23xf32>
    %93 = tpu.matmul %87, %92, %cst_30 {dimension_numbers = #tpu.dot_dimension_numbers<[1], [1], [0], [0], [0, 0, 1, 0], [], []>} : vector<8x8xbf16>, vector<23x8xbf16>, vector<8x23xf32> -> vector<8x23xf32>
    %94 = vector.extract_strided_slice %93 {offsets = [0, 0], sizes = [8, 8], strides = [1, 1]} : vector<8x23xf32> to vector<8x8xf32>
    %95 = vector.extract_strided_slice %93 {offsets = [0, 15], sizes = [1, 8], strides = [1, 1]} : vector<8x23xf32> to vector<1x8xf32>
    %96 = vector.extract_strided_slice %93 {offsets = [1, 14], sizes = [1, 8], strides = [1, 1]} : vector<8x23xf32> to vector<1x8xf32>
    %97 = vector.extract_strided_slice %93 {offsets = [2, 13], sizes = [1, 8], strides = [1, 1]} : vector<8x23xf32> to vector<1x8xf32>
    %98 = vector.extract_strided_slice %93 {offsets = [3, 12], sizes = [1, 8], strides = [1, 1]} : vector<8x23xf32> to vector<1x8xf32>
    %99 = vector.extract_strided_slice %93 {offsets = [4, 11], sizes = [1, 8], strides = [1, 1]} : vector<8x23xf32> to vector<1x8xf32>
    %100 = vector.extract_strided_slice %93 {offsets = [5, 10], sizes = [1, 8], strides = [1, 1]} : vector<8x23xf32> to vector<1x8xf32>
    %101 = vector.extract_strided_slice %93 {offsets = [6, 9], sizes = [1, 8], strides = [1, 1]} : vector<8x23xf32> to vector<1x8xf32>
    %102 = vector.extract_strided_slice %93 {offsets = [7, 8], sizes = [1, 8], strides = [1, 1]} : vector<8x23xf32> to vector<1x8xf32>
    %103 = tpu.concatenate %95, %96, %97, %98, %99, %100, %101, %102 in 0 : vector<1x8xf32>, vector<1x8xf32>, vector<1x8xf32>, vector<1x8xf32>, vector<1x8xf32>, vector<1x8xf32>, vector<1x8xf32>, vector<1x8xf32> -> vector<8x8xf32>
    %104 = arith.addf %94, %103 : vector<8x8xf32>
    %cst_31 = arith.constant dense<0xFF800000> : vector<8xf32>
    %105 = vector.multi_reduction <maximumf>, %104, %cst_31 [1] : vector<8x8xf32> to vector<8xf32>
    %106 = vector.shape_cast %105 : vector<8xf32> to vector<8x1xf32>
    %107 = vector.broadcast %106 : vector<8x1xf32> to vector<8x8xf32>
    %108 = arith.subf %104, %107 : vector<8x8xf32>
    %109 = math.exp %108 : vector<8x8xf32>
    %cst_32 = arith.constant dense<0.000000e+00> : vector<8xf32>
    %110 = vector.multi_reduction <add>, %109, %cst_32 [1] : vector<8x8xf32> to vector<8xf32>
    %111 = vector.shape_cast %110 : vector<8xf32> to vector<8x1xf32>
    %112 = tpu.reciprocal %111 {approx = true} : vector<8x1xf32> -> vector<8x1xf32>
    %113 = vector.broadcast %112 : vector<8x1xf32> to vector<8x8xf32>
    %114 = arith.mulf %109, %113 : vector<8x8xf32>
    %115 = arith.truncf %114 : vector<8x8xf32> to vector<8x8xbf16>
    %cst_33 = arith.constant dense<0.000000e+00> : vector<8x8xf32>
    %116 = tpu.matmul %115, %89, %cst_33 {dimension_numbers = #tpu.dot_dimension_numbers<[1], [0], [0], [1], [0, 0, 1, 1], [], []>} : vector<8x8xbf16>, vector<8x8xbf16>, vector<8x8xf32> -> vector<8x8xf32>
    %117 = vector.extract_strided_slice %22 {offsets = [0, 24], sizes = [8, 8], strides = [1, 1]} : vector<16x64xf32> to vector<8x8xf32>
    %118 = arith.truncf %117 : vector<8x8xf32> to vector<8x8xbf16>
    %119 = vector.extract_strided_slice %20 {offsets = [0, 24], sizes = [8, 8], strides = [1, 1]} : vector<16x64xf32> to vector<8x8xf32>
    %120 = arith.truncf %119 : vector<8x8xf32> to vector<8x8xbf16>
    %121 = vector.extract_strided_slice %13 {offsets = [0, 24], sizes = [8, 8], strides = [1, 1]} : vector<16x64xf32> to vector<8x8xf32>
    %122 = tpu.concatenate %121, %23 in 0 : vector<8x8xf32>, vector<15x8xf32> -> vector<23x8xf32>
    %123 = arith.truncf %122 : vector<23x8xf32> to vector<23x8xbf16>
    %cst_34 = arith.constant dense<0.000000e+00> : vector<8x23xf32>
    %124 = tpu.matmul %118, %123, %cst_34 {dimension_numbers = #tpu.dot_dimension_numbers<[1], [1], [0], [0], [0, 0, 1, 0], [], []>} : vector<8x8xbf16>, vector<23x8xbf16>, vector<8x23xf32> -> vector<8x23xf32>
    %125 = vector.extract_strided_slice %124 {offsets = [0, 0], sizes = [8, 8], strides = [1, 1]} : vector<8x23xf32> to vector<8x8xf32>
    %126 = vector.extract_strided_slice %124 {offsets = [0, 15], sizes = [1, 8], strides = [1, 1]} : vector<8x23xf32> to vector<1x8xf32>
    %127 = vector.extract_strided_slice %124 {offsets = [1, 14], sizes = [1, 8], strides = [1, 1]} : vector<8x23xf32> to vector<1x8xf32>
    %128 = vector.extract_strided_slice %124 {offsets = [2, 13], sizes = [1, 8], strides = [1, 1]} : vector<8x23xf32> to vector<1x8xf32>
    %129 = vector.extract_strided_slice %124 {offsets = [3, 12], sizes = [1, 8], strides = [1, 1]} : vector<8x23xf32> to vector<1x8xf32>
    %130 = vector.extract_strided_slice %124 {offsets = [4, 11], sizes = [1, 8], strides = [1, 1]} : vector<8x23xf32> to vector<1x8xf32>
    %131 = vector.extract_strided_slice %124 {offsets = [5, 10], sizes = [1, 8], strides = [1, 1]} : vector<8x23xf32> to vector<1x8xf32>
    %132 = vector.extract_strided_slice %124 {offsets = [6, 9], sizes = [1, 8], strides = [1, 1]} : vector<8x23xf32> to vector<1x8xf32>
    %133 = vector.extract_strided_slice %124 {offsets = [7, 8], sizes = [1, 8], strides = [1, 1]} : vector<8x23xf32> to vector<1x8xf32>
    %134 = tpu.concatenate %126, %127, %128, %129, %130, %131, %132, %133 in 0 : vector<1x8xf32>, vector<1x8xf32>, vector<1x8xf32>, vector<1x8xf32>, vector<1x8xf32>, vector<1x8xf32>, vector<1x8xf32>, vector<1x8xf32> -> vector<8x8xf32>
    %135 = arith.addf %125, %134 : vector<8x8xf32>
    %cst_35 = arith.constant dense<0xFF800000> : vector<8xf32>
    %136 = vector.multi_reduction <maximumf>, %135, %cst_35 [1] : vector<8x8xf32> to vector<8xf32>
    %137 = vector.shape_cast %136 : vector<8xf32> to vector<8x1xf32>
    %138 = vector.broadcast %137 : vector<8x1xf32> to vector<8x8xf32>
    %139 = arith.subf %135, %138 : vector<8x8xf32>
    %140 = math.exp %139 : vector<8x8xf32>
    %cst_36 = arith.constant dense<0.000000e+00> : vector<8xf32>
    %141 = vector.multi_reduction <add>, %140, %cst_36 [1] : vector<8x8xf32> to vector<8xf32>
    %142 = vector.shape_cast %141 : vector<8xf32> to vector<8x1xf32>
    %143 = tpu.reciprocal %142 {approx = true} : vector<8x1xf32> -> vector<8x1xf32>
    %144 = vector.broadcast %143 : vector<8x1xf32> to vector<8x8xf32>
    %145 = arith.mulf %140, %144 : vector<8x8xf32>
    %146 = arith.truncf %145 : vector<8x8xf32> to vector<8x8xbf16>
    %cst_37 = arith.constant dense<0.000000e+00> : vector<8x8xf32>
    %147 = tpu.matmul %146, %120, %cst_37 {dimension_numbers = #tpu.dot_dimension_numbers<[1], [0], [0], [1], [0, 0, 1, 1], [], []>} : vector<8x8xbf16>, vector<8x8xbf16>, vector<8x8xf32> -> vector<8x8xf32>
    %148 = vector.extract_strided_slice %22 {offsets = [0, 32], sizes = [8, 8], strides = [1, 1]} : vector<16x64xf32> to vector<8x8xf32>
    %149 = arith.truncf %148 : vector<8x8xf32> to vector<8x8xbf16>
    %150 = vector.extract_strided_slice %20 {offsets = [0, 32], sizes = [8, 8], strides = [1, 1]} : vector<16x64xf32> to vector<8x8xf32>
    %151 = arith.truncf %150 : vector<8x8xf32> to vector<8x8xbf16>
    %152 = vector.extract_strided_slice %13 {offsets = [0, 32], sizes = [8, 8], strides = [1, 1]} : vector<16x64xf32> to vector<8x8xf32>
    %153 = tpu.concatenate %152, %23 in 0 : vector<8x8xf32>, vector<15x8xf32> -> vector<23x8xf32>
    %154 = arith.truncf %153 : vector<23x8xf32> to vector<23x8xbf16>
    %cst_38 = arith.constant dense<0.000000e+00> : vector<8x23xf32>
    %155 = tpu.matmul %149, %154, %cst_38 {dimension_numbers = #tpu.dot_dimension_numbers<[1], [1], [0], [0], [0, 0, 1, 0], [], []>} : vector<8x8xbf16>, vector<23x8xbf16>, vector<8x23xf32> -> vector<8x23xf32>
    %156 = vector.extract_strided_slice %155 {offsets = [0, 0], sizes = [8, 8], strides = [1, 1]} : vector<8x23xf32> to vector<8x8xf32>
    %157 = vector.extract_strided_slice %155 {offsets = [0, 15], sizes = [1, 8], strides = [1, 1]} : vector<8x23xf32> to vector<1x8xf32>
    %158 = vector.extract_strided_slice %155 {offsets = [1, 14], sizes = [1, 8], strides = [1, 1]} : vector<8x23xf32> to vector<1x8xf32>
    %159 = vector.extract_strided_slice %155 {offsets = [2, 13], sizes = [1, 8], strides = [1, 1]} : vector<8x23xf32> to vector<1x8xf32>
    %160 = vector.extract_strided_slice %155 {offsets = [3, 12], sizes = [1, 8], strides = [1, 1]} : vector<8x23xf32> to vector<1x8xf32>
    %161 = vector.extract_strided_slice %155 {offsets = [4, 11], sizes = [1, 8], strides = [1, 1]} : vector<8x23xf32> to vector<1x8xf32>
    %162 = vector.extract_strided_slice %155 {offsets = [5, 10], sizes = [1, 8], strides = [1, 1]} : vector<8x23xf32> to vector<1x8xf32>
    %163 = vector.extract_strided_slice %155 {offsets = [6, 9], sizes = [1, 8], strides = [1, 1]} : vector<8x23xf32> to vector<1x8xf32>
    %164 = vector.extract_strided_slice %155 {offsets = [7, 8], sizes = [1, 8], strides = [1, 1]} : vector<8x23xf32> to vector<1x8xf32>
    %165 = tpu.concatenate %157, %158, %159, %160, %161, %162, %163, %164 in 0 : vector<1x8xf32>, vector<1x8xf32>, vector<1x8xf32>, vector<1x8xf32>, vector<1x8xf32>, vector<1x8xf32>, vector<1x8xf32>, vector<1x8xf32> -> vector<8x8xf32>
    %166 = arith.addf %156, %165 : vector<8x8xf32>
    %cst_39 = arith.constant dense<0xFF800000> : vector<8xf32>
    %167 = vector.multi_reduction <maximumf>, %166, %cst_39 [1] : vector<8x8xf32> to vector<8xf32>
    %168 = vector.shape_cast %167 : vector<8xf32> to vector<8x1xf32>
    %169 = vector.broadcast %168 : vector<8x1xf32> to vector<8x8xf32>
    %170 = arith.subf %166, %169 : vector<8x8xf32>
    %171 = math.exp %170 : vector<8x8xf32>
    %cst_40 = arith.constant dense<0.000000e+00> : vector<8xf32>
    %172 = vector.multi_reduction <add>, %171, %cst_40 [1] : vector<8x8xf32> to vector<8xf32>
    %173 = vector.shape_cast %172 : vector<8xf32> to vector<8x1xf32>
    %174 = tpu.reciprocal %173 {approx = true} : vector<8x1xf32> -> vector<8x1xf32>
    %175 = vector.broadcast %174 : vector<8x1xf32> to vector<8x8xf32>
    %176 = arith.mulf %171, %175 : vector<8x8xf32>
    %177 = arith.truncf %176 : vector<8x8xf32> to vector<8x8xbf16>
    %cst_41 = arith.constant dense<0.000000e+00> : vector<8x8xf32>
    %178 = tpu.matmul %177, %151, %cst_41 {dimension_numbers = #tpu.dot_dimension_numbers<[1], [0], [0], [1], [0, 0, 1, 1], [], []>} : vector<8x8xbf16>, vector<8x8xbf16>, vector<8x8xf32> -> vector<8x8xf32>
    %179 = vector.extract_strided_slice %22 {offsets = [0, 40], sizes = [8, 8], strides = [1, 1]} : vector<16x64xf32> to vector<8x8xf32>
    %180 = arith.truncf %179 : vector<8x8xf32> to vector<8x8xbf16>
    %181 = vector.extract_strided_slice %20 {offsets = [0, 40], sizes = [8, 8], strides = [1, 1]} : vector<16x64xf32> to vector<8x8xf32>
    %182 = arith.truncf %181 : vector<8x8xf32> to vector<8x8xbf16>
    %183 = vector.extract_strided_slice %13 {offsets = [0, 40], sizes = [8, 8], strides = [1, 1]} : vector<16x64xf32> to vector<8x8xf32>
    %184 = tpu.concatenate %183, %23 in 0 : vector<8x8xf32>, vector<15x8xf32> -> vector<23x8xf32>
    %185 = arith.truncf %184 : vector<23x8xf32> to vector<23x8xbf16>
    %cst_42 = arith.constant dense<0.000000e+00> : vector<8x23xf32>
    %186 = tpu.matmul %180, %185, %cst_42 {dimension_numbers = #tpu.dot_dimension_numbers<[1], [1], [0], [0], [0, 0, 1, 0], [], []>} : vector<8x8xbf16>, vector<23x8xbf16>, vector<8x23xf32> -> vector<8x23xf32>
    %187 = vector.extract_strided_slice %186 {offsets = [0, 0], sizes = [8, 8], strides = [1, 1]} : vector<8x23xf32> to vector<8x8xf32>
    %188 = vector.extract_strided_slice %186 {offsets = [0, 15], sizes = [1, 8], strides = [1, 1]} : vector<8x23xf32> to vector<1x8xf32>
    %189 = vector.extract_strided_slice %186 {offsets = [1, 14], sizes = [1, 8], strides = [1, 1]} : vector<8x23xf32> to vector<1x8xf32>
    %190 = vector.extract_strided_slice %186 {offsets = [2, 13], sizes = [1, 8], strides = [1, 1]} : vector<8x23xf32> to vector<1x8xf32>
    %191 = vector.extract_strided_slice %186 {offsets = [3, 12], sizes = [1, 8], strides = [1, 1]} : vector<8x23xf32> to vector<1x8xf32>
    %192 = vector.extract_strided_slice %186 {offsets = [4, 11], sizes = [1, 8], strides = [1, 1]} : vector<8x23xf32> to vector<1x8xf32>
    %193 = vector.extract_strided_slice %186 {offsets = [5, 10], sizes = [1, 8], strides = [1, 1]} : vector<8x23xf32> to vector<1x8xf32>
    %194 = vector.extract_strided_slice %186 {offsets = [6, 9], sizes = [1, 8], strides = [1, 1]} : vector<8x23xf32> to vector<1x8xf32>
    %195 = vector.extract_strided_slice %186 {offsets = [7, 8], sizes = [1, 8], strides = [1, 1]} : vector<8x23xf32> to vector<1x8xf32>
    %196 = tpu.concatenate %188, %189, %190, %191, %192, %193, %194, %195 in 0 : vector<1x8xf32>, vector<1x8xf32>, vector<1x8xf32>, vector<1x8xf32>, vector<1x8xf32>, vector<1x8xf32>, vector<1x8xf32>, vector<1x8xf32> -> vector<8x8xf32>
    %197 = arith.addf %187, %196 : vector<8x8xf32>
    %cst_43 = arith.constant dense<0xFF800000> : vector<8xf32>
    %198 = vector.multi_reduction <maximumf>, %197, %cst_43 [1] : vector<8x8xf32> to vector<8xf32>
    %199 = vector.shape_cast %198 : vector<8xf32> to vector<8x1xf32>
    %200 = vector.broadcast %199 : vector<8x1xf32> to vector<8x8xf32>
    %201 = arith.subf %197, %200 : vector<8x8xf32>
    %202 = math.exp %201 : vector<8x8xf32>
    %cst_44 = arith.constant dense<0.000000e+00> : vector<8xf32>
    %203 = vector.multi_reduction <add>, %202, %cst_44 [1] : vector<8x8xf32> to vector<8xf32>
    %204 = vector.shape_cast %203 : vector<8xf32> to vector<8x1xf32>
    %205 = tpu.reciprocal %204 {approx = true} : vector<8x1xf32> -> vector<8x1xf32>
    %206 = vector.broadcast %205 : vector<8x1xf32> to vector<8x8xf32>
    %207 = arith.mulf %202, %206 : vector<8x8xf32>
    %208 = arith.truncf %207 : vector<8x8xf32> to vector<8x8xbf16>
    %cst_45 = arith.constant dense<0.000000e+00> : vector<8x8xf32>
    %209 = tpu.matmul %208, %182, %cst_45 {dimension_numbers = #tpu.dot_dimension_numbers<[1], [0], [0], [1], [0, 0, 1, 1], [], []>} : vector<8x8xbf16>, vector<8x8xbf16>, vector<8x8xf32> -> vector<8x8xf32>
    %210 = vector.extract_strided_slice %22 {offsets = [0, 48], sizes = [8, 8], strides = [1, 1]} : vector<16x64xf32> to vector<8x8xf32>
    %211 = arith.truncf %210 : vector<8x8xf32> to vector<8x8xbf16>
    %212 = vector.extract_strided_slice %20 {offsets = [0, 48], sizes = [8, 8], strides = [1, 1]} : vector<16x64xf32> to vector<8x8xf32>
    %213 = arith.truncf %212 : vector<8x8xf32> to vector<8x8xbf16>
    %214 = vector.extract_strided_slice %13 {offsets = [0, 48], sizes = [8, 8], strides = [1, 1]} : vector<16x64xf32> to vector<8x8xf32>
    %215 = tpu.concatenate %214, %23 in 0 : vector<8x8xf32>, vector<15x8xf32> -> vector<23x8xf32>
    %216 = arith.truncf %215 : vector<23x8xf32> to vector<23x8xbf16>
    %cst_46 = arith.constant dense<0.000000e+00> : vector<8x23xf32>
    %217 = tpu.matmul %211, %216, %cst_46 {dimension_numbers = #tpu.dot_dimension_numbers<[1], [1], [0], [0], [0, 0, 1, 0], [], []>} : vector<8x8xbf16>, vector<23x8xbf16>, vector<8x23xf32> -> vector<8x23xf32>
    %218 = vector.extract_strided_slice %217 {offsets = [0, 0], sizes = [8, 8], strides = [1, 1]} : vector<8x23xf32> to vector<8x8xf32>
    %219 = vector.extract_strided_slice %217 {offsets = [0, 15], sizes = [1, 8], strides = [1, 1]} : vector<8x23xf32> to vector<1x8xf32>
    %220 = vector.extract_strided_slice %217 {offsets = [1, 14], sizes = [1, 8], strides = [1, 1]} : vector<8x23xf32> to vector<1x8xf32>
    %221 = vector.extract_strided_slice %217 {offsets = [2, 13], sizes = [1, 8], strides = [1, 1]} : vector<8x23xf32> to vector<1x8xf32>
    %222 = vector.extract_strided_slice %217 {offsets = [3, 12], sizes = [1, 8], strides = [1, 1]} : vector<8x23xf32> to vector<1x8xf32>
    %223 = vector.extract_strided_slice %217 {offsets = [4, 11], sizes = [1, 8], strides = [1, 1]} : vector<8x23xf32> to vector<1x8xf32>
    %224 = vector.extract_strided_slice %217 {offsets = [5, 10], sizes = [1, 8], strides = [1, 1]} : vector<8x23xf32> to vector<1x8xf32>
    %225 = vector.extract_strided_slice %217 {offsets = [6, 9], sizes = [1, 8], strides = [1, 1]} : vector<8x23xf32> to vector<1x8xf32>
    %226 = vector.extract_strided_slice %217 {offsets = [7, 8], sizes = [1, 8], strides = [1, 1]} : vector<8x23xf32> to vector<1x8xf32>
    %227 = tpu.concatenate %219, %220, %221, %222, %223, %224, %225, %226 in 0 : vector<1x8xf32>, vector<1x8xf32>, vector<1x8xf32>, vector<1x8xf32>, vector<1x8xf32>, vector<1x8xf32>, vector<1x8xf32>, vector<1x8xf32> -> vector<8x8xf32>
    %228 = arith.addf %218, %227 : vector<8x8xf32>
    %cst_47 = arith.constant dense<0xFF800000> : vector<8xf32>
    %229 = vector.multi_reduction <maximumf>, %228, %cst_47 [1] : vector<8x8xf32> to vector<8xf32>
    %230 = vector.shape_cast %229 : vector<8xf32> to vector<8x1xf32>
    %231 = vector.broadcast %230 : vector<8x1xf32> to vector<8x8xf32>
    %232 = arith.subf %228, %231 : vector<8x8xf32>
    %233 = math.exp %232 : vector<8x8xf32>
    %cst_48 = arith.constant dense<0.000000e+00> : vector<8xf32>
    %234 = vector.multi_reduction <add>, %233, %cst_48 [1] : vector<8x8xf32> to vector<8xf32>
    %235 = vector.shape_cast %234 : vector<8xf32> to vector<8x1xf32>
    %236 = tpu.reciprocal %235 {approx = true} : vector<8x1xf32> -> vector<8x1xf32>
    %237 = vector.broadcast %236 : vector<8x1xf32> to vector<8x8xf32>
    %238 = arith.mulf %233, %237 : vector<8x8xf32>
    %239 = arith.truncf %238 : vector<8x8xf32> to vector<8x8xbf16>
    %cst_49 = arith.constant dense<0.000000e+00> : vector<8x8xf32>
    %240 = tpu.matmul %239, %213, %cst_49 {dimension_numbers = #tpu.dot_dimension_numbers<[1], [0], [0], [1], [0, 0, 1, 1], [], []>} : vector<8x8xbf16>, vector<8x8xbf16>, vector<8x8xf32> -> vector<8x8xf32>
    %241 = vector.extract_strided_slice %22 {offsets = [0, 56], sizes = [8, 8], strides = [1, 1]} : vector<16x64xf32> to vector<8x8xf32>
    %242 = arith.truncf %241 : vector<8x8xf32> to vector<8x8xbf16>
    %243 = vector.extract_strided_slice %20 {offsets = [0, 56], sizes = [8, 8], strides = [1, 1]} : vector<16x64xf32> to vector<8x8xf32>
    %244 = arith.truncf %243 : vector<8x8xf32> to vector<8x8xbf16>
    %245 = vector.extract_strided_slice %13 {offsets = [0, 56], sizes = [8, 8], strides = [1, 1]} : vector<16x64xf32> to vector<8x8xf32>
    %246 = tpu.concatenate %245, %23 in 0 : vector<8x8xf32>, vector<15x8xf32> -> vector<23x8xf32>
    %247 = arith.truncf %246 : vector<23x8xf32> to vector<23x8xbf16>
    %cst_50 = arith.constant dense<0.000000e+00> : vector<8x23xf32>
    %248 = tpu.matmul %242, %247, %cst_50 {dimension_numbers = #tpu.dot_dimension_numbers<[1], [1], [0], [0], [0, 0, 1, 0], [], []>} : vector<8x8xbf16>, vector<23x8xbf16>, vector<8x23xf32> -> vector<8x23xf32>
    %249 = vector.extract_strided_slice %248 {offsets = [0, 0], sizes = [8, 8], strides = [1, 1]} : vector<8x23xf32> to vector<8x8xf32>
    %250 = vector.extract_strided_slice %248 {offsets = [0, 15], sizes = [1, 8], strides = [1, 1]} : vector<8x23xf32> to vector<1x8xf32>
    %251 = vector.extract_strided_slice %248 {offsets = [1, 14], sizes = [1, 8], strides = [1, 1]} : vector<8x23xf32> to vector<1x8xf32>
    %252 = vector.extract_strided_slice %248 {offsets = [2, 13], sizes = [1, 8], strides = [1, 1]} : vector<8x23xf32> to vector<1x8xf32>
    %253 = vector.extract_strided_slice %248 {offsets = [3, 12], sizes = [1, 8], strides = [1, 1]} : vector<8x23xf32> to vector<1x8xf32>
    %254 = vector.extract_strided_slice %248 {offsets = [4, 11], sizes = [1, 8], strides = [1, 1]} : vector<8x23xf32> to vector<1x8xf32>
    %255 = vector.extract_strided_slice %248 {offsets = [5, 10], sizes = [1, 8], strides = [1, 1]} : vector<8x23xf32> to vector<1x8xf32>
    %256 = vector.extract_strided_slice %248 {offsets = [6, 9], sizes = [1, 8], strides = [1, 1]} : vector<8x23xf32> to vector<1x8xf32>
    %257 = vector.extract_strided_slice %248 {offsets = [7, 8], sizes = [1, 8], strides = [1, 1]} : vector<8x23xf32> to vector<1x8xf32>
    %258 = tpu.concatenate %250, %251, %252, %253, %254, %255, %256, %257 in 0 : vector<1x8xf32>, vector<1x8xf32>, vector<1x8xf32>, vector<1x8xf32>, vector<1x8xf32>, vector<1x8xf32>, vector<1x8xf32>, vector<1x8xf32> -> vector<8x8xf32>
    %259 = arith.addf %249, %258 : vector<8x8xf32>
    %cst_51 = arith.constant dense<0xFF800000> : vector<8xf32>
    %260 = vector.multi_reduction <maximumf>, %259, %cst_51 [1] : vector<8x8xf32> to vector<8xf32>
    %261 = vector.shape_cast %260 : vector<8xf32> to vector<8x1xf32>
    %262 = vector.broadcast %261 : vector<8x1xf32> to vector<8x8xf32>
    %263 = arith.subf %259, %262 : vector<8x8xf32>
    %264 = math.exp %263 : vector<8x8xf32>
    %cst_52 = arith.constant dense<0.000000e+00> : vector<8xf32>
    %265 = vector.multi_reduction <add>, %264, %cst_52 [1] : vector<8x8xf32> to vector<8xf32>
    %266 = vector.shape_cast %265 : vector<8xf32> to vector<8x1xf32>
    %267 = tpu.reciprocal %266 {approx = true} : vector<8x1xf32> -> vector<8x1xf32>
    %268 = vector.broadcast %267 : vector<8x1xf32> to vector<8x8xf32>
    %269 = arith.mulf %264, %268 : vector<8x8xf32>
    %270 = arith.truncf %269 : vector<8x8xf32> to vector<8x8xbf16>
    %cst_53 = arith.constant dense<0.000000e+00> : vector<8x8xf32>
    %271 = tpu.matmul %270, %244, %cst_53 {dimension_numbers = #tpu.dot_dimension_numbers<[1], [0], [0], [1], [0, 0, 1, 1], [], []>} : vector<8x8xbf16>, vector<8x8xbf16>, vector<8x8xf32> -> vector<8x8xf32>
    %272 = tpu.concatenate %54, %85, %116, %147, %178, %209, %240, %271 in 1 : vector<8x8xf32>, vector<8x8xf32>, vector<8x8xf32>, vector<8x8xf32>, vector<8x8xf32>, vector<8x8xf32>, vector<8x8xf32>, vector<8x8xf32> -> vector<8x64xf32>
    %273 = vector.extract_strided_slice %22 {offsets = [8, 0], sizes = [8, 8], strides = [1, 1]} : vector<16x64xf32> to vector<8x8xf32>
    %274 = arith.truncf %273 : vector<8x8xf32> to vector<8x8xbf16>
    %275 = vector.extract_strided_slice %20 {offsets = [8, 0], sizes = [8, 8], strides = [1, 1]} : vector<16x64xf32> to vector<8x8xf32>
    %276 = arith.truncf %275 : vector<8x8xf32> to vector<8x8xbf16>
    %277 = vector.extract_strided_slice %13 {offsets = [8, 0], sizes = [8, 8], strides = [1, 1]} : vector<16x64xf32> to vector<8x8xf32>
    %278 = tpu.concatenate %277, %23 in 0 : vector<8x8xf32>, vector<15x8xf32> -> vector<23x8xf32>
    %279 = arith.truncf %278 : vector<23x8xf32> to vector<23x8xbf16>
    %cst_54 = arith.constant dense<0.000000e+00> : vector<8x23xf32>
    %280 = tpu.matmul %274, %279, %cst_54 {dimension_numbers = #tpu.dot_dimension_numbers<[1], [1], [0], [0], [0, 0, 1, 0], [], []>} : vector<8x8xbf16>, vector<23x8xbf16>, vector<8x23xf32> -> vector<8x23xf32>
    %281 = vector.extract_strided_slice %280 {offsets = [0, 0], sizes = [8, 8], strides = [1, 1]} : vector<8x23xf32> to vector<8x8xf32>
    %282 = vector.extract_strided_slice %280 {offsets = [0, 15], sizes = [1, 8], strides = [1, 1]} : vector<8x23xf32> to vector<1x8xf32>
    %283 = vector.extract_strided_slice %280 {offsets = [1, 14], sizes = [1, 8], strides = [1, 1]} : vector<8x23xf32> to vector<1x8xf32>
    %284 = vector.extract_strided_slice %280 {offsets = [2, 13], sizes = [1, 8], strides = [1, 1]} : vector<8x23xf32> to vector<1x8xf32>
    %285 = vector.extract_strided_slice %280 {offsets = [3, 12], sizes = [1, 8], strides = [1, 1]} : vector<8x23xf32> to vector<1x8xf32>
    %286 = vector.extract_strided_slice %280 {offsets = [4, 11], sizes = [1, 8], strides = [1, 1]} : vector<8x23xf32> to vector<1x8xf32>
    %287 = vector.extract_strided_slice %280 {offsets = [5, 10], sizes = [1, 8], strides = [1, 1]} : vector<8x23xf32> to vector<1x8xf32>
    %288 = vector.extract_strided_slice %280 {offsets = [6, 9], sizes = [1, 8], strides = [1, 1]} : vector<8x23xf32> to vector<1x8xf32>
    %289 = vector.extract_strided_slice %280 {offsets = [7, 8], sizes = [1, 8], strides = [1, 1]} : vector<8x23xf32> to vector<1x8xf32>
    %290 = tpu.concatenate %282, %283, %284, %285, %286, %287, %288, %289 in 0 : vector<1x8xf32>, vector<1x8xf32>, vector<1x8xf32>, vector<1x8xf32>, vector<1x8xf32>, vector<1x8xf32>, vector<1x8xf32>, vector<1x8xf32> -> vector<8x8xf32>
    %291 = arith.addf %281, %290 : vector<8x8xf32>
    %cst_55 = arith.constant dense<0xFF800000> : vector<8xf32>
    %292 = vector.multi_reduction <maximumf>, %291, %cst_55 [1] : vector<8x8xf32> to vector<8xf32>
    %293 = vector.shape_cast %292 : vector<8xf32> to vector<8x1xf32>
    %294 = vector.broadcast %293 : vector<8x1xf32> to vector<8x8xf32>
    %295 = arith.subf %291, %294 : vector<8x8xf32>
    %296 = math.exp %295 : vector<8x8xf32>
    %cst_56 = arith.constant dense<0.000000e+00> : vector<8xf32>
    %297 = vector.multi_reduction <add>, %296, %cst_56 [1] : vector<8x8xf32> to vector<8xf32>
    %298 = vector.shape_cast %297 : vector<8xf32> to vector<8x1xf32>
    %299 = tpu.reciprocal %298 {approx = true} : vector<8x1xf32> -> vector<8x1xf32>
    %300 = vector.broadcast %299 : vector<8x1xf32> to vector<8x8xf32>
    %301 = arith.mulf %296, %300 : vector<8x8xf32>
    %302 = arith.truncf %301 : vector<8x8xf32> to vector<8x8xbf16>
    %cst_57 = arith.constant dense<0.000000e+00> : vector<8x8xf32>
    %303 = tpu.matmul %302, %276, %cst_57 {dimension_numbers = #tpu.dot_dimension_numbers<[1], [0], [0], [1], [0, 0, 1, 1], [], []>} : vector<8x8xbf16>, vector<8x8xbf16>, vector<8x8xf32> -> vector<8x8xf32>
    %304 = vector.extract_strided_slice %22 {offsets = [8, 8], sizes = [8, 8], strides = [1, 1]} : vector<16x64xf32> to vector<8x8xf32>
    %305 = arith.truncf %304 : vector<8x8xf32> to vector<8x8xbf16>
    %306 = vector.extract_strided_slice %20 {offsets = [8, 8], sizes = [8, 8], strides = [1, 1]} : vector<16x64xf32> to vector<8x8xf32>
    %307 = arith.truncf %306 : vector<8x8xf32> to vector<8x8xbf16>
    %308 = vector.extract_strided_slice %13 {offsets = [8, 8], sizes = [8, 8], strides = [1, 1]} : vector<16x64xf32> to vector<8x8xf32>
    %309 = tpu.concatenate %308, %23 in 0 : vector<8x8xf32>, vector<15x8xf32> -> vector<23x8xf32>
    %310 = arith.truncf %309 : vector<23x8xf32> to vector<23x8xbf16>
    %cst_58 = arith.constant dense<0.000000e+00> : vector<8x23xf32>
    %311 = tpu.matmul %305, %310, %cst_58 {dimension_numbers = #tpu.dot_dimension_numbers<[1], [1], [0], [0], [0, 0, 1, 0], [], []>} : vector<8x8xbf16>, vector<23x8xbf16>, vector<8x23xf32> -> vector<8x23xf32>
    %312 = vector.extract_strided_slice %311 {offsets = [0, 0], sizes = [8, 8], strides = [1, 1]} : vector<8x23xf32> to vector<8x8xf32>
    %313 = vector.extract_strided_slice %311 {offsets = [0, 15], sizes = [1, 8], strides = [1, 1]} : vector<8x23xf32> to vector<1x8xf32>
    %314 = vector.extract_strided_slice %311 {offsets = [1, 14], sizes = [1, 8], strides = [1, 1]} : vector<8x23xf32> to vector<1x8xf32>
    %315 = vector.extract_strided_slice %311 {offsets = [2, 13], sizes = [1, 8], strides = [1, 1]} : vector<8x23xf32> to vector<1x8xf32>
    %316 = vector.extract_strided_slice %311 {offsets = [3, 12], sizes = [1, 8], strides = [1, 1]} : vector<8x23xf32> to vector<1x8xf32>
    %317 = vector.extract_strided_slice %311 {offsets = [4, 11], sizes = [1, 8], strides = [1, 1]} : vector<8x23xf32> to vector<1x8xf32>
    %318 = vector.extract_strided_slice %311 {offsets = [5, 10], sizes = [1, 8], strides = [1, 1]} : vector<8x23xf32> to vector<1x8xf32>
    %319 = vector.extract_strided_slice %311 {offsets = [6, 9], sizes = [1, 8], strides = [1, 1]} : vector<8x23xf32> to vector<1x8xf32>
    %320 = vector.extract_strided_slice %311 {offsets = [7, 8], sizes = [1, 8], strides = [1, 1]} : vector<8x23xf32> to vector<1x8xf32>
    %321 = tpu.concatenate %313, %314, %315, %316, %317, %318, %319, %320 in 0 : vector<1x8xf32>, vector<1x8xf32>, vector<1x8xf32>, vector<1x8xf32>, vector<1x8xf32>, vector<1x8xf32>, vector<1x8xf32>, vector<1x8xf32> -> vector<8x8xf32>
    %322 = arith.addf %312, %321 : vector<8x8xf32>
    %cst_59 = arith.constant dense<0xFF800000> : vector<8xf32>
    %323 = vector.multi_reduction <maximumf>, %322, %cst_59 [1] : vector<8x8xf32> to vector<8xf32>
    %324 = vector.shape_cast %323 : vector<8xf32> to vector<8x1xf32>
    %325 = vector.broadcast %324 : vector<8x1xf32> to vector<8x8xf32>
    %326 = arith.subf %322, %325 : vector<8x8xf32>
    %327 = math.exp %326 : vector<8x8xf32>
    %cst_60 = arith.constant dense<0.000000e+00> : vector<8xf32>
    %328 = vector.multi_reduction <add>, %327, %cst_60 [1] : vector<8x8xf32> to vector<8xf32>
    %329 = vector.shape_cast %328 : vector<8xf32> to vector<8x1xf32>
    %330 = tpu.reciprocal %329 {approx = true} : vector<8x1xf32> -> vector<8x1xf32>
    %331 = vector.broadcast %330 : vector<8x1xf32> to vector<8x8xf32>
    %332 = arith.mulf %327, %331 : vector<8x8xf32>
    %333 = arith.truncf %332 : vector<8x8xf32> to vector<8x8xbf16>
    %cst_61 = arith.constant dense<0.000000e+00> : vector<8x8xf32>
    %334 = tpu.matmul %333, %307, %cst_61 {dimension_numbers = #tpu.dot_dimension_numbers<[1], [0], [0], [1], [0, 0, 1, 1], [], []>} : vector<8x8xbf16>, vector<8x8xbf16>, vector<8x8xf32> -> vector<8x8xf32>
    %335 = vector.extract_strided_slice %22 {offsets = [8, 16], sizes = [8, 8], strides = [1, 1]} : vector<16x64xf32> to vector<8x8xf32>
    %336 = arith.truncf %335 : vector<8x8xf32> to vector<8x8xbf16>
    %337 = vector.extract_strided_slice %20 {offsets = [8, 16], sizes = [8, 8], strides = [1, 1]} : vector<16x64xf32> to vector<8x8xf32>
    %338 = arith.truncf %337 : vector<8x8xf32> to vector<8x8xbf16>
    %339 = vector.extract_strided_slice %13 {offsets = [8, 16], sizes = [8, 8], strides = [1, 1]} : vector<16x64xf32> to vector<8x8xf32>
    %340 = tpu.concatenate %339, %23 in 0 : vector<8x8xf32>, vector<15x8xf32> -> vector<23x8xf32>
    %341 = arith.truncf %340 : vector<23x8xf32> to vector<23x8xbf16>
    %cst_62 = arith.constant dense<0.000000e+00> : vector<8x23xf32>
    %342 = tpu.matmul %336, %341, %cst_62 {dimension_numbers = #tpu.dot_dimension_numbers<[1], [1], [0], [0], [0, 0, 1, 0], [], []>} : vector<8x8xbf16>, vector<23x8xbf16>, vector<8x23xf32> -> vector<8x23xf32>
    %343 = vector.extract_strided_slice %342 {offsets = [0, 0], sizes = [8, 8], strides = [1, 1]} : vector<8x23xf32> to vector<8x8xf32>
    %344 = vector.extract_strided_slice %342 {offsets = [0, 15], sizes = [1, 8], strides = [1, 1]} : vector<8x23xf32> to vector<1x8xf32>
    %345 = vector.extract_strided_slice %342 {offsets = [1, 14], sizes = [1, 8], strides = [1, 1]} : vector<8x23xf32> to vector<1x8xf32>
    %346 = vector.extract_strided_slice %342 {offsets = [2, 13], sizes = [1, 8], strides = [1, 1]} : vector<8x23xf32> to vector<1x8xf32>
    %347 = vector.extract_strided_slice %342 {offsets = [3, 12], sizes = [1, 8], strides = [1, 1]} : vector<8x23xf32> to vector<1x8xf32>
    %348 = vector.extract_strided_slice %342 {offsets = [4, 11], sizes = [1, 8], strides = [1, 1]} : vector<8x23xf32> to vector<1x8xf32>
    %349 = vector.extract_strided_slice %342 {offsets = [5, 10], sizes = [1, 8], strides = [1, 1]} : vector<8x23xf32> to vector<1x8xf32>
    %350 = vector.extract_strided_slice %342 {offsets = [6, 9], sizes = [1, 8], strides = [1, 1]} : vector<8x23xf32> to vector<1x8xf32>
    %351 = vector.extract_strided_slice %342 {offsets = [7, 8], sizes = [1, 8], strides = [1, 1]} : vector<8x23xf32> to vector<1x8xf32>
    %352 = tpu.concatenate %344, %345, %346, %347, %348, %349, %350, %351 in 0 : vector<1x8xf32>, vector<1x8xf32>, vector<1x8xf32>, vector<1x8xf32>, vector<1x8xf32>, vector<1x8xf32>, vector<1x8xf32>, vector<1x8xf32> -> vector<8x8xf32>
    %353 = arith.addf %343, %352 : vector<8x8xf32>
    %cst_63 = arith.constant dense<0xFF800000> : vector<8xf32>
    %354 = vector.multi_reduction <maximumf>, %353, %cst_63 [1] : vector<8x8xf32> to vector<8xf32>
    %355 = vector.shape_cast %354 : vector<8xf32> to vector<8x1xf32>
    %356 = vector.broadcast %355 : vector<8x1xf32> to vector<8x8xf32>
    %357 = arith.subf %353, %356 : vector<8x8xf32>
    %358 = math.exp %357 : vector<8x8xf32>
    %cst_64 = arith.constant dense<0.000000e+00> : vector<8xf32>
    %359 = vector.multi_reduction <add>, %358, %cst_64 [1] : vector<8x8xf32> to vector<8xf32>
    %360 = vector.shape_cast %359 : vector<8xf32> to vector<8x1xf32>
    %361 = tpu.reciprocal %360 {approx = true} : vector<8x1xf32> -> vector<8x1xf32>
    %362 = vector.broadcast %361 : vector<8x1xf32> to vector<8x8xf32>
    %363 = arith.mulf %358, %362 : vector<8x8xf32>
    %364 = arith.truncf %363 : vector<8x8xf32> to vector<8x8xbf16>
    %cst_65 = arith.constant dense<0.000000e+00> : vector<8x8xf32>
    %365 = tpu.matmul %364, %338, %cst_65 {dimension_numbers = #tpu.dot_dimension_numbers<[1], [0], [0], [1], [0, 0, 1, 1], [], []>} : vector<8x8xbf16>, vector<8x8xbf16>, vector<8x8xf32> -> vector<8x8xf32>
    %366 = vector.extract_strided_slice %22 {offsets = [8, 24], sizes = [8, 8], strides = [1, 1]} : vector<16x64xf32> to vector<8x8xf32>
    %367 = arith.truncf %366 : vector<8x8xf32> to vector<8x8xbf16>
    %368 = vector.extract_strided_slice %20 {offsets = [8, 24], sizes = [8, 8], strides = [1, 1]} : vector<16x64xf32> to vector<8x8xf32>
    %369 = arith.truncf %368 : vector<8x8xf32> to vector<8x8xbf16>
    %370 = vector.extract_strided_slice %13 {offsets = [8, 24], sizes = [8, 8], strides = [1, 1]} : vector<16x64xf32> to vector<8x8xf32>
    %371 = tpu.concatenate %370, %23 in 0 : vector<8x8xf32>, vector<15x8xf32> -> vector<23x8xf32>
    %372 = arith.truncf %371 : vector<23x8xf32> to vector<23x8xbf16>
    %cst_66 = arith.constant dense<0.000000e+00> : vector<8x23xf32>
    %373 = tpu.matmul %367, %372, %cst_66 {dimension_numbers = #tpu.dot_dimension_numbers<[1], [1], [0], [0], [0, 0, 1, 0], [], []>} : vector<8x8xbf16>, vector<23x8xbf16>, vector<8x23xf32> -> vector<8x23xf32>
    %374 = vector.extract_strided_slice %373 {offsets = [0, 0], sizes = [8, 8], strides = [1, 1]} : vector<8x23xf32> to vector<8x8xf32>
    %375 = vector.extract_strided_slice %373 {offsets = [0, 15], sizes = [1, 8], strides = [1, 1]} : vector<8x23xf32> to vector<1x8xf32>
    %376 = vector.extract_strided_slice %373 {offsets = [1, 14], sizes = [1, 8], strides = [1, 1]} : vector<8x23xf32> to vector<1x8xf32>
    %377 = vector.extract_strided_slice %373 {offsets = [2, 13], sizes = [1, 8], strides = [1, 1]} : vector<8x23xf32> to vector<1x8xf32>
    %378 = vector.extract_strided_slice %373 {offsets = [3, 12], sizes = [1, 8], strides = [1, 1]} : vector<8x23xf32> to vector<1x8xf32>
    %379 = vector.extract_strided_slice %373 {offsets = [4, 11], sizes = [1, 8], strides = [1, 1]} : vector<8x23xf32> to vector<1x8xf32>
    %380 = vector.extract_strided_slice %373 {offsets = [5, 10], sizes = [1, 8], strides = [1, 1]} : vector<8x23xf32> to vector<1x8xf32>
    %381 = vector.extract_strided_slice %373 {offsets = [6, 9], sizes = [1, 8], strides = [1, 1]} : vector<8x23xf32> to vector<1x8xf32>
    %382 = vector.extract_strided_slice %373 {offsets = [7, 8], sizes = [1, 8], strides = [1, 1]} : vector<8x23xf32> to vector<1x8xf32>
    %383 = tpu.concatenate %375, %376, %377, %378, %379, %380, %381, %382 in 0 : vector<1x8xf32>, vector<1x8xf32>, vector<1x8xf32>, vector<1x8xf32>, vector<1x8xf32>, vector<1x8xf32>, vector<1x8xf32>, vector<1x8xf32> -> vector<8x8xf32>
    %384 = arith.addf %374, %383 : vector<8x8xf32>
    %cst_67 = arith.constant dense<0xFF800000> : vector<8xf32>
    %385 = vector.multi_reduction <maximumf>, %384, %cst_67 [1] : vector<8x8xf32> to vector<8xf32>
    %386 = vector.shape_cast %385 : vector<8xf32> to vector<8x1xf32>
    %387 = vector.broadcast %386 : vector<8x1xf32> to vector<8x8xf32>
    %388 = arith.subf %384, %387 : vector<8x8xf32>
    %389 = math.exp %388 : vector<8x8xf32>
    %cst_68 = arith.constant dense<0.000000e+00> : vector<8xf32>
    %390 = vector.multi_reduction <add>, %389, %cst_68 [1] : vector<8x8xf32> to vector<8xf32>
    %391 = vector.shape_cast %390 : vector<8xf32> to vector<8x1xf32>
    %392 = tpu.reciprocal %391 {approx = true} : vector<8x1xf32> -> vector<8x1xf32>
    %393 = vector.broadcast %392 : vector<8x1xf32> to vector<8x8xf32>
    %394 = arith.mulf %389, %393 : vector<8x8xf32>
    %395 = arith.truncf %394 : vector<8x8xf32> to vector<8x8xbf16>
    %cst_69 = arith.constant dense<0.000000e+00> : vector<8x8xf32>
    %396 = tpu.matmul %395, %369, %cst_69 {dimension_numbers = #tpu.dot_dimension_numbers<[1], [0], [0], [1], [0, 0, 1, 1], [], []>} : vector<8x8xbf16>, vector<8x8xbf16>, vector<8x8xf32> -> vector<8x8xf32>
    %397 = vector.extract_strided_slice %22 {offsets = [8, 32], sizes = [8, 8], strides = [1, 1]} : vector<16x64xf32> to vector<8x8xf32>
    %398 = arith.truncf %397 : vector<8x8xf32> to vector<8x8xbf16>
    %399 = vector.extract_strided_slice %20 {offsets = [8, 32], sizes = [8, 8], strides = [1, 1]} : vector<16x64xf32> to vector<8x8xf32>
    %400 = arith.truncf %399 : vector<8x8xf32> to vector<8x8xbf16>
    %401 = vector.extract_strided_slice %13 {offsets = [8, 32], sizes = [8, 8], strides = [1, 1]} : vector<16x64xf32> to vector<8x8xf32>
    %402 = tpu.concatenate %401, %23 in 0 : vector<8x8xf32>, vector<15x8xf32> -> vector<23x8xf32>
    %403 = arith.truncf %402 : vector<23x8xf32> to vector<23x8xbf16>
    %cst_70 = arith.constant dense<0.000000e+00> : vector<8x23xf32>
    %404 = tpu.matmul %398, %403, %cst_70 {dimension_numbers = #tpu.dot_dimension_numbers<[1], [1], [0], [0], [0, 0, 1, 0], [], []>} : vector<8x8xbf16>, vector<23x8xbf16>, vector<8x23xf32> -> vector<8x23xf32>
    %405 = vector.extract_strided_slice %404 {offsets = [0, 0], sizes = [8, 8], strides = [1, 1]} : vector<8x23xf32> to vector<8x8xf32>
    %406 = vector.extract_strided_slice %404 {offsets = [0, 15], sizes = [1, 8], strides = [1, 1]} : vector<8x23xf32> to vector<1x8xf32>
    %407 = vector.extract_strided_slice %404 {offsets = [1, 14], sizes = [1, 8], strides = [1, 1]} : vector<8x23xf32> to vector<1x8xf32>
    %408 = vector.extract_strided_slice %404 {offsets = [2, 13], sizes = [1, 8], strides = [1, 1]} : vector<8x23xf32> to vector<1x8xf32>
    %409 = vector.extract_strided_slice %404 {offsets = [3, 12], sizes = [1, 8], strides = [1, 1]} : vector<8x23xf32> to vector<1x8xf32>
    %410 = vector.extract_strided_slice %404 {offsets = [4, 11], sizes = [1, 8], strides = [1, 1]} : vector<8x23xf32> to vector<1x8xf32>
    %411 = vector.extract_strided_slice %404 {offsets = [5, 10], sizes = [1, 8], strides = [1, 1]} : vector<8x23xf32> to vector<1x8xf32>
    %412 = vector.extract_strided_slice %404 {offsets = [6, 9], sizes = [1, 8], strides = [1, 1]} : vector<8x23xf32> to vector<1x8xf32>
    %413 = vector.extract_strided_slice %404 {offsets = [7, 8], sizes = [1, 8], strides = [1, 1]} : vector<8x23xf32> to vector<1x8xf32>
    %414 = tpu.concatenate %406, %407, %408, %409, %410, %411, %412, %413 in 0 : vector<1x8xf32>, vector<1x8xf32>, vector<1x8xf32>, vector<1x8xf32>, vector<1x8xf32>, vector<1x8xf32>, vector<1x8xf32>, vector<1x8xf32> -> vector<8x8xf32>
    %415 = arith.addf %405, %414 : vector<8x8xf32>
    %cst_71 = arith.constant dense<0xFF800000> : vector<8xf32>
    %416 = vector.multi_reduction <maximumf>, %415, %cst_71 [1] : vector<8x8xf32> to vector<8xf32>
    %417 = vector.shape_cast %416 : vector<8xf32> to vector<8x1xf32>
    %418 = vector.broadcast %417 : vector<8x1xf32> to vector<8x8xf32>
    %419 = arith.subf %415, %418 : vector<8x8xf32>
    %420 = math.exp %419 : vector<8x8xf32>
    %cst_72 = arith.constant dense<0.000000e+00> : vector<8xf32>
    %421 = vector.multi_reduction <add>, %420, %cst_72 [1] : vector<8x8xf32> to vector<8xf32>
    %422 = vector.shape_cast %421 : vector<8xf32> to vector<8x1xf32>
    %423 = tpu.reciprocal %422 {approx = true} : vector<8x1xf32> -> vector<8x1xf32>
    %424 = vector.broadcast %423 : vector<8x1xf32> to vector<8x8xf32>
    %425 = arith.mulf %420, %424 : vector<8x8xf32>
    %426 = arith.truncf %425 : vector<8x8xf32> to vector<8x8xbf16>
    %cst_73 = arith.constant dense<0.000000e+00> : vector<8x8xf32>
    %427 = tpu.matmul %426, %400, %cst_73 {dimension_numbers = #tpu.dot_dimension_numbers<[1], [0], [0], [1], [0, 0, 1, 1], [], []>} : vector<8x8xbf16>, vector<8x8xbf16>, vector<8x8xf32> -> vector<8x8xf32>
    %428 = vector.extract_strided_slice %22 {offsets = [8, 40], sizes = [8, 8], strides = [1, 1]} : vector<16x64xf32> to vector<8x8xf32>
    %429 = arith.truncf %428 : vector<8x8xf32> to vector<8x8xbf16>
    %430 = vector.extract_strided_slice %20 {offsets = [8, 40], sizes = [8, 8], strides = [1, 1]} : vector<16x64xf32> to vector<8x8xf32>
    %431 = arith.truncf %430 : vector<8x8xf32> to vector<8x8xbf16>
    %432 = vector.extract_strided_slice %13 {offsets = [8, 40], sizes = [8, 8], strides = [1, 1]} : vector<16x64xf32> to vector<8x8xf32>
    %433 = tpu.concatenate %432, %23 in 0 : vector<8x8xf32>, vector<15x8xf32> -> vector<23x8xf32>
    %434 = arith.truncf %433 : vector<23x8xf32> to vector<23x8xbf16>
    %cst_74 = arith.constant dense<0.000000e+00> : vector<8x23xf32>
    %435 = tpu.matmul %429, %434, %cst_74 {dimension_numbers = #tpu.dot_dimension_numbers<[1], [1], [0], [0], [0, 0, 1, 0], [], []>} : vector<8x8xbf16>, vector<23x8xbf16>, vector<8x23xf32> -> vector<8x23xf32>
    %436 = vector.extract_strided_slice %435 {offsets = [0, 0], sizes = [8, 8], strides = [1, 1]} : vector<8x23xf32> to vector<8x8xf32>
    %437 = vector.extract_strided_slice %435 {offsets = [0, 15], sizes = [1, 8], strides = [1, 1]} : vector<8x23xf32> to vector<1x8xf32>
    %438 = vector.extract_strided_slice %435 {offsets = [1, 14], sizes = [1, 8], strides = [1, 1]} : vector<8x23xf32> to vector<1x8xf32>
    %439 = vector.extract_strided_slice %435 {offsets = [2, 13], sizes = [1, 8], strides = [1, 1]} : vector<8x23xf32> to vector<1x8xf32>
    %440 = vector.extract_strided_slice %435 {offsets = [3, 12], sizes = [1, 8], strides = [1, 1]} : vector<8x23xf32> to vector<1x8xf32>
    %441 = vector.extract_strided_slice %435 {offsets = [4, 11], sizes = [1, 8], strides = [1, 1]} : vector<8x23xf32> to vector<1x8xf32>
    %442 = vector.extract_strided_slice %435 {offsets = [5, 10], sizes = [1, 8], strides = [1, 1]} : vector<8x23xf32> to vector<1x8xf32>
    %443 = vector.extract_strided_slice %435 {offsets = [6, 9], sizes = [1, 8], strides = [1, 1]} : vector<8x23xf32> to vector<1x8xf32>
    %444 = vector.extract_strided_slice %435 {offsets = [7, 8], sizes = [1, 8], strides = [1, 1]} : vector<8x23xf32> to vector<1x8xf32>
    %445 = tpu.concatenate %437, %438, %439, %440, %441, %442, %443, %444 in 0 : vector<1x8xf32>, vector<1x8xf32>, vector<1x8xf32>, vector<1x8xf32>, vector<1x8xf32>, vector<1x8xf32>, vector<1x8xf32>, vector<1x8xf32> -> vector<8x8xf32>
    %446 = arith.addf %436, %445 : vector<8x8xf32>
    %cst_75 = arith.constant dense<0xFF800000> : vector<8xf32>
    %447 = vector.multi_reduction <maximumf>, %446, %cst_75 [1] : vector<8x8xf32> to vector<8xf32>
    %448 = vector.shape_cast %447 : vector<8xf32> to vector<8x1xf32>
    %449 = vector.broadcast %448 : vector<8x1xf32> to vector<8x8xf32>
    %450 = arith.subf %446, %449 : vector<8x8xf32>
    %451 = math.exp %450 : vector<8x8xf32>
    %cst_76 = arith.constant dense<0.000000e+00> : vector<8xf32>
    %452 = vector.multi_reduction <add>, %451, %cst_76 [1] : vector<8x8xf32> to vector<8xf32>
    %453 = vector.shape_cast %452 : vector<8xf32> to vector<8x1xf32>
    %454 = tpu.reciprocal %453 {approx = true} : vector<8x1xf32> -> vector<8x1xf32>
    %455 = vector.broadcast %454 : vector<8x1xf32> to vector<8x8xf32>
    %456 = arith.mulf %451, %455 : vector<8x8xf32>
    %457 = arith.truncf %456 : vector<8x8xf32> to vector<8x8xbf16>
    %cst_77 = arith.constant dense<0.000000e+00> : vector<8x8xf32>
    %458 = tpu.matmul %457, %431, %cst_77 {dimension_numbers = #tpu.dot_dimension_numbers<[1], [0], [0], [1], [0, 0, 1, 1], [], []>} : vector<8x8xbf16>, vector<8x8xbf16>, vector<8x8xf32> -> vector<8x8xf32>
    %459 = vector.extract_strided_slice %22 {offsets = [8, 48], sizes = [8, 8], strides = [1, 1]} : vector<16x64xf32> to vector<8x8xf32>
    %460 = arith.truncf %459 : vector<8x8xf32> to vector<8x8xbf16>
    %461 = vector.extract_strided_slice %20 {offsets = [8, 48], sizes = [8, 8], strides = [1, 1]} : vector<16x64xf32> to vector<8x8xf32>
    %462 = arith.truncf %461 : vector<8x8xf32> to vector<8x8xbf16>
    %463 = vector.extract_strided_slice %13 {offsets = [8, 48], sizes = [8, 8], strides = [1, 1]} : vector<16x64xf32> to vector<8x8xf32>
    %464 = tpu.concatenate %463, %23 in 0 : vector<8x8xf32>, vector<15x8xf32> -> vector<23x8xf32>
    %465 = arith.truncf %464 : vector<23x8xf32> to vector<23x8xbf16>
    %cst_78 = arith.constant dense<0.000000e+00> : vector<8x23xf32>
    %466 = tpu.matmul %460, %465, %cst_78 {dimension_numbers = #tpu.dot_dimension_numbers<[1], [1], [0], [0], [0, 0, 1, 0], [], []>} : vector<8x8xbf16>, vector<23x8xbf16>, vector<8x23xf32> -> vector<8x23xf32>
    %467 = vector.extract_strided_slice %466 {offsets = [0, 0], sizes = [8, 8], strides = [1, 1]} : vector<8x23xf32> to vector<8x8xf32>
    %468 = vector.extract_strided_slice %466 {offsets = [0, 15], sizes = [1, 8], strides = [1, 1]} : vector<8x23xf32> to vector<1x8xf32>
    %469 = vector.extract_strided_slice %466 {offsets = [1, 14], sizes = [1, 8], strides = [1, 1]} : vector<8x23xf32> to vector<1x8xf32>
    %470 = vector.extract_strided_slice %466 {offsets = [2, 13], sizes = [1, 8], strides = [1, 1]} : vector<8x23xf32> to vector<1x8xf32>
    %471 = vector.extract_strided_slice %466 {offsets = [3, 12], sizes = [1, 8], strides = [1, 1]} : vector<8x23xf32> to vector<1x8xf32>
    %472 = vector.extract_strided_slice %466 {offsets = [4, 11], sizes = [1, 8], strides = [1, 1]} : vector<8x23xf32> to vector<1x8xf32>
    %473 = vector.extract_strided_slice %466 {offsets = [5, 10], sizes = [1, 8], strides = [1, 1]} : vector<8x23xf32> to vector<1x8xf32>
    %474 = vector.extract_strided_slice %466 {offsets = [6, 9], sizes = [1, 8], strides = [1, 1]} : vector<8x23xf32> to vector<1x8xf32>
    %475 = vector.extract_strided_slice %466 {offsets = [7, 8], sizes = [1, 8], strides = [1, 1]} : vector<8x23xf32> to vector<1x8xf32>
    %476 = tpu.concatenate %468, %469, %470, %471, %472, %473, %474, %475 in 0 : vector<1x8xf32>, vector<1x8xf32>, vector<1x8xf32>, vector<1x8xf32>, vector<1x8xf32>, vector<1x8xf32>, vector<1x8xf32>, vector<1x8xf32> -> vector<8x8xf32>
    %477 = arith.addf %467, %476 : vector<8x8xf32>
    %cst_79 = arith.constant dense<0xFF800000> : vector<8xf32>
    %478 = vector.multi_reduction <maximumf>, %477, %cst_79 [1] : vector<8x8xf32> to vector<8xf32>
    %479 = vector.shape_cast %478 : vector<8xf32> to vector<8x1xf32>
    %480 = vector.broadcast %479 : vector<8x1xf32> to vector<8x8xf32>
    %481 = arith.subf %477, %480 : vector<8x8xf32>
    %482 = math.exp %481 : vector<8x8xf32>
    %cst_80 = arith.constant dense<0.000000e+00> : vector<8xf32>
    %483 = vector.multi_reduction <add>, %482, %cst_80 [1] : vector<8x8xf32> to vector<8xf32>
    %484 = vector.shape_cast %483 : vector<8xf32> to vector<8x1xf32>
    %485 = tpu.reciprocal %484 {approx = true} : vector<8x1xf32> -> vector<8x1xf32>
    %486 = vector.broadcast %485 : vector<8x1xf32> to vector<8x8xf32>
    %487 = arith.mulf %482, %486 : vector<8x8xf32>
    %488 = arith.truncf %487 : vector<8x8xf32> to vector<8x8xbf16>
    %cst_81 = arith.constant dense<0.000000e+00> : vector<8x8xf32>
    %489 = tpu.matmul %488, %462, %cst_81 {dimension_numbers = #tpu.dot_dimension_numbers<[1], [0], [0], [1], [0, 0, 1, 1], [], []>} : vector<8x8xbf16>, vector<8x8xbf16>, vector<8x8xf32> -> vector<8x8xf32>
    %490 = vector.extract_strided_slice %22 {offsets = [8, 56], sizes = [8, 8], strides = [1, 1]} : vector<16x64xf32> to vector<8x8xf32>
    %491 = arith.truncf %490 : vector<8x8xf32> to vector<8x8xbf16>
    %492 = vector.extract_strided_slice %20 {offsets = [8, 56], sizes = [8, 8], strides = [1, 1]} : vector<16x64xf32> to vector<8x8xf32>
    %493 = arith.truncf %492 : vector<8x8xf32> to vector<8x8xbf16>
    %494 = vector.extract_strided_slice %13 {offsets = [8, 56], sizes = [8, 8], strides = [1, 1]} : vector<16x64xf32> to vector<8x8xf32>
    %495 = tpu.concatenate %494, %23 in 0 : vector<8x8xf32>, vector<15x8xf32> -> vector<23x8xf32>
    %496 = arith.truncf %495 : vector<23x8xf32> to vector<23x8xbf16>
    %cst_82 = arith.constant dense<0.000000e+00> : vector<8x23xf32>
    %497 = tpu.matmul %491, %496, %cst_82 {dimension_numbers = #tpu.dot_dimension_numbers<[1], [1], [0], [0], [0, 0, 1, 0], [], []>} : vector<8x8xbf16>, vector<23x8xbf16>, vector<8x23xf32> -> vector<8x23xf32>
    %498 = vector.extract_strided_slice %497 {offsets = [0, 0], sizes = [8, 8], strides = [1, 1]} : vector<8x23xf32> to vector<8x8xf32>
    %499 = vector.extract_strided_slice %497 {offsets = [0, 15], sizes = [1, 8], strides = [1, 1]} : vector<8x23xf32> to vector<1x8xf32>
    %500 = vector.extract_strided_slice %497 {offsets = [1, 14], sizes = [1, 8], strides = [1, 1]} : vector<8x23xf32> to vector<1x8xf32>
    %501 = vector.extract_strided_slice %497 {offsets = [2, 13], sizes = [1, 8], strides = [1, 1]} : vector<8x23xf32> to vector<1x8xf32>
    %502 = vector.extract_strided_slice %497 {offsets = [3, 12], sizes = [1, 8], strides = [1, 1]} : vector<8x23xf32> to vector<1x8xf32>
    %503 = vector.extract_strided_slice %497 {offsets = [4, 11], sizes = [1, 8], strides = [1, 1]} : vector<8x23xf32> to vector<1x8xf32>
    %504 = vector.extract_strided_slice %497 {offsets = [5, 10], sizes = [1, 8], strides = [1, 1]} : vector<8x23xf32> to vector<1x8xf32>
    %505 = vector.extract_strided_slice %497 {offsets = [6, 9], sizes = [1, 8], strides = [1, 1]} : vector<8x23xf32> to vector<1x8xf32>
    %506 = vector.extract_strided_slice %497 {offsets = [7, 8], sizes = [1, 8], strides = [1, 1]} : vector<8x23xf32> to vector<1x8xf32>
    %507 = tpu.concatenate %499, %500, %501, %502, %503, %504, %505, %506 in 0 : vector<1x8xf32>, vector<1x8xf32>, vector<1x8xf32>, vector<1x8xf32>, vector<1x8xf32>, vector<1x8xf32>, vector<1x8xf32>, vector<1x8xf32> -> vector<8x8xf32>
    %508 = arith.addf %498, %507 : vector<8x8xf32>
    %cst_83 = arith.constant dense<0xFF800000> : vector<8xf32>
    %509 = vector.multi_reduction <maximumf>, %508, %cst_83 [1] : vector<8x8xf32> to vector<8xf32>
    %510 = vector.shape_cast %509 : vector<8xf32> to vector<8x1xf32>
    %511 = vector.broadcast %510 : vector<8x1xf32> to vector<8x8xf32>
    %512 = arith.subf %508, %511 : vector<8x8xf32>
    %513 = math.exp %512 : vector<8x8xf32>
    %cst_84 = arith.constant dense<0.000000e+00> : vector<8xf32>
    %514 = vector.multi_reduction <add>, %513, %cst_84 [1] : vector<8x8xf32> to vector<8xf32>
    %515 = vector.shape_cast %514 : vector<8xf32> to vector<8x1xf32>
    %516 = tpu.reciprocal %515 {approx = true} : vector<8x1xf32> -> vector<8x1xf32>
    %517 = vector.broadcast %516 : vector<8x1xf32> to vector<8x8xf32>
    %518 = arith.mulf %513, %517 : vector<8x8xf32>
    %519 = arith.truncf %518 : vector<8x8xf32> to vector<8x8xbf16>
    %cst_85 = arith.constant dense<0.000000e+00> : vector<8x8xf32>
    %520 = tpu.matmul %519, %493, %cst_85 {dimension_numbers = #tpu.dot_dimension_numbers<[1], [0], [0], [1], [0, 0, 1, 1], [], []>} : vector<8x8xbf16>, vector<8x8xbf16>, vector<8x8xf32> -> vector<8x8xf32>
    %521 = tpu.concatenate %303, %334, %365, %396, %427, %458, %489, %520 in 1 : vector<8x8xf32>, vector<8x8xf32>, vector<8x8xf32>, vector<8x8xf32>, vector<8x8xf32>, vector<8x8xf32>, vector<8x8xf32>, vector<8x8xf32> -> vector<8x64xf32>
    %522 = tpu.concatenate %272, %521 in 0 : vector<8x64xf32>, vector<8x64xf32> -> vector<16x64xf32>
    %523 = arith.truncf %522 : vector<16x64xf32> to vector<16x64xbf16>
    %c0_86 = arith.constant 0 : index
    %c0_87 = arith.constant 0 : index
    %524 = vector.load %arg10[%c0_86, %c0_87] : memref<64x64xbf16, #tpu.memory_space<vmem>>, vector<64x64xbf16>
    %cst_88 = arith.constant dense<0.000000e+00> : vector<16x64xf32>
    %525 = tpu.matmul %523, %524, %cst_88 {dimension_numbers = #tpu.dot_dimension_numbers<[1], [0], [0], [1], [0, 0, 1, 1], [], []>} : vector<16x64xbf16>, vector<64x64xbf16>, vector<16x64xf32> -> vector<16x64xf32>
    %c0_89 = arith.constant 0 : index
    %c0_90 = arith.constant 0 : index
    %526 = vector.load %arg11[%c0_89, %c0_90] : memref<1x64xf32, #tpu.memory_space<vmem>>, vector<1x64xf32>
    %527 = vector.broadcast %526 : vector<1x64xf32> to vector<16x64xf32>
    %528 = arith.addf %525, %527 : vector<16x64xf32>
    %c0_91 = arith.constant 0 : index
    %c0_92 = arith.constant 0 : index
    %529 = vector.load %arg13[%c0_91, %c0_92] : memref<16x64xf32, #tpu.memory_space<vmem>>, vector<16x64xf32>
    tpu.vector_store %arg13[%c0_91, %c0_92], %528 {strides = array<i32>} : memref<16x64xf32, #tpu.memory_space<vmem>>, vector<16x64xf32>,
    return
  }
  func.func @transform_0(%arg0: i32) -> (i32, i32) {
    %c0_i32 = arith.constant 0 : i32
    %c0_i32_0 = arith.constant 0 : i32
    %c0_i32_1 = arith.constant 0 : i32
    return %c0_i32, %c0_i32_0 : i32, i32
  }
  func.func @transform_1(%arg0: i32) -> (i32, i32) {
    %c0_i32 = arith.constant 0 : i32
    %c0_i32_0 = arith.constant 0 : i32
    %c0_i32_1 = arith.constant 0 : i32
    return %c0_i32, %c0_i32_0 : i32, i32
  }
  func.func @transform_2(%arg0: i32) -> (i32, i32) {
    %c0_i32 = arith.constant 0 : i32
    %c0_i32_0 = arith.constant 0 : i32
    %c0_i32_1 = arith.constant 0 : i32
    return %c0_i32, %c0_i32_0 : i32, i32
  }
  func.func @transform_3(%arg0: i32) -> (i32, i32) {
    %c0_i32 = arith.constant 0 : i32
    %c0_i32_0 = arith.constant 0 : i32
    %c0_i32_1 = arith.constant 0 : i32
    return %c0_i32, %c0_i32_0 : i32, i32
  }
  func.func @transform_4(%arg0: i32) -> (i32, i32) {
    %c0_i32 = arith.constant 0 : i32
    %c0_i32_0 = arith.constant 0 : i32
    %c0_i32_1 = arith.constant 0 : i32
    return %c0_i32, %c0_i32_0 : i32, i32
  }
  func.func @transform_5(%arg0: i32) -> (i32, i32) {
    %c0_i32 = arith.constant 0 : i32
    %c0_i32_0 = arith.constant 0 : i32
    %c0_i32_1 = arith.constant 0 : i32
    return %c0_i32, %c0_i32_0 : i32, i32
  }
  func.func @transform_6(%arg0: i32) -> (i32, i32) {
    %c0_i32 = arith.constant 0 : i32
    %c0_i32_0 = arith.constant 0 : i32
    %c0_i32_1 = arith.constant 0 : i32
    return %c0_i32, %c0_i32_0 : i32, i32
  }
  func.func @transform_7(%arg0: i32) -> (i32, i32) {
    %c0_i32 = arith.constant 0 : i32
    %c0_i32_0 = arith.constant 0 : i32
    %c0_i32_1 = arith.constant 0 : i32
    return %c0_i32, %c0_i32_0 : i32, i32
  }
  func.func @transform_8(%arg0: i32) -> (i32, i32) {
    %c0_i32 = arith.constant 0 : i32
    %c0_i32_0 = arith.constant 0 : i32
    %c0_i32_1 = arith.constant 0 : i32
    return %c0_i32, %c0_i32_0 : i32, i32
  }
  func.func @transform_9(%arg0: i32) -> (i32, i32) {
    %c0_i32 = arith.constant 0 : i32
    %c0_i32_0 = arith.constant 0 : i32
    %c0_i32_1 = arith.constant 0 : i32
    return %c0_i32, %c0_i32_0 : i32, i32
  }
  func.func @transform_10(%arg0: i32) -> (i32, i32) {
    %c0_i32 = arith.constant 0 : i32
    %c0_i32_0 = arith.constant 0 : i32
    %c0_i32_1 = arith.constant 0 : i32
    return %c0_i32, %c0_i32_0 : i32, i32
  }
  func.func @transform_11(%arg0: i32) -> (i32, i32) {
    %c0_i32 = arith.constant 0 : i32
    %c0_i32_0 = arith.constant 0 : i32
    %c0_i32_1 = arith.constant 0 : i32
    return %c0_i32, %c0_i32_0 : i32, i32
  }
  func.func @transform_12(%arg0: i32) -> (i32, i32) {
    %c0_i32 = arith.constant 0 : i32
    %c0_i32_0 = arith.constant 0 : i32
    %c0_i32_1 = arith.constant 0 : i32
    return %c0_i32, %c0_i32_0 : i32, i32
  }
}

</mosaic_0001>

<llo_original>
// kernel: tpu_custom_call.1
$region0: #{tpu_custom_call.1}
  #allocation0 [shape = 'u32[]', space=smem, size = 0x4, offset = 0x4, fixed_abs, tag = 'smem constant byte address 0x4 - core index']
  #allocation1 [shape = 'u32[144,128]{1,0:T(1,128)}', space=vmem, size = 0x12000, scoped, tag = 'internal scratch']
  %s0 = inlined_call_operand.hbm [shape: f32[16,64], index: 0, kind: input, shape index: {}]
  %s1 = inlined_call_operand.hbm [shape: f32[16,64], index: 1, kind: input, shape index: {}]
  %s2 = inlined_call_operand.hbm [shape: f32[16,64], index: 2, kind: input, shape index: {}]
  %s3 = inlined_call_operand.hbm [shape: bf16[64,64], index: 3, kind: input, shape index: {}]
  %s4 = inlined_call_operand.hbm [shape: f32[1,64], index: 4, kind: input, shape index: {}]
  %s5 = inlined_call_operand.vmem [shape: bf16[64,64], index: 5, kind: input, shape index: {}]
  %s6 = inlined_call_operand.hbm [shape: f32[1,64], index: 6, kind: input, shape index: {}]
  %s7 = inlined_call_operand.hbm [shape: bf16[64,64], index: 7, kind: input, shape index: {}]
  %s8 = inlined_call_operand.hbm [shape: f32[1,64], index: 8, kind: input, shape index: {}]
  %s9 = inlined_call_operand.hbm [shape: bf16[64,64], index: 9, kind: input, shape index: {}]
  %s10 = inlined_call_operand.vmem [shape: f32[1,64], index: 10, kind: input, shape index: {}]
  %s11 = inlined_call_operand.vmem [shape: f32[15,8], index: 11, kind: input, shape index: {}]
  %s12 = inlined_call_operand.hbm [shape: f32[16,64], index: 12, kind: output, shape index: {}]
  %s13 = sld [smem:[#allocation0]]
  $region94: #{tpu_custom_call.1} parent=0
    _
  %s15 = ssub.s32 1, %s13
  %s16 = scalar_select 0, %s15, %s13
  $region1: #{tpu_custom_call.1} parent=0
    #allocation2 [shape = 'u8[8192]{0}', space=vmem, size = 0x2000, scoped, tag = 'input window, operand 0, single buffered']
    #allocation3 [shape = 's32[1]{0}', space=sflag, size = 0x4, scoped, tag = 'scoped memory for tpu_custom_call.1']
    #allocation4 [shape = 's32[1]{0}', space=sflag, size = 0x4, scoped, tag = 'scoped memory for tpu_custom_call.1']
    #allocation5 [shape = 'u8[8192]{0}', space=vmem, size = 0x2000, scoped, tag = 'input window, operand 1, single buffered']
    #allocation6 [shape = 's32[1]{0}', space=sflag, size = 0x4, scoped, tag = 'scoped memory for tpu_custom_call.1']
    #allocation7 [shape = 'u8[8192]{0}', space=vmem, size = 0x2000, scoped, tag = 'input window, operand 2, single buffered']
    #allocation8 [shape = 'u8[16384]{0}', space=vmem, size = 0x4000, scoped, tag = 'input window, operand 3, single buffered']
    #allocation9 [shape = 's32[1]{0}', space=sflag, size = 0x4, scoped, tag = 'scoped memory for tpu_custom_call.1']
    #allocation10 [shape = 'u8[512]{0}', space=vmem, size = 0x400, scoped, tag = 'input window, operand 4, single buffered']
    #allocation11 [shape = 'u8[512]{0}', space=vmem, size = 0x400, scoped, tag = 'input window, operand 6, single buffered']
    #allocation12 [shape = 's32[1]{0}', space=sflag, size = 0x4, scoped, tag = 'scoped memory for tpu_custom_call.1']
    #allocation13 [shape = 'u8[16384]{0}', space=vmem, size = 0x4000, scoped, tag = 'input window, operand 7, single buffered']
    #allocation14 [shape = 'u8[512]{0}', space=vmem, size = 0x400, scoped, tag = 'input window, operand 8, single buffered']
    #allocation15 [shape = 's32[1]{0}', space=sflag, size = 0x4, scoped, tag = 'scoped memory for tpu_custom_call.1']
    #allocation16 [shape = 'u8[16384]{0}', space=vmem, size = 0x4000, scoped, tag = 'input window, operand 9, single buffered']
    #allocation17 [shape = 'u8[8192]{0}', space=vmem, size = 0x2000, scoped, tag = 'output window, operand 0, single buffered']
    %17 = vsyncpa [#allocation3], 0
    %18 = vsyncpa [#allocation6], 0
    %19 = vsyncpa [#allocation9], 0
    %20 = vsyncpa [#allocation12], 0
    %21 = vsyncpa [#allocation15], 0
    %22 = vsyncpa [#allocation4], 0
    // Predicated region
    $region2: #{tpu_custom_call.1} parent=1 // pred_check
      _
    $region3: #{tpu_custom_call.1} parent=1 // pred_check_branch
      %24 = sbr.rel (0) target = $region5
    $region4: #{tpu_custom_call.1} parent=1 // pred_region
      %s26 = ssub.s32 256, 256
      %27 = vsyncadd [#allocation3], %s26
      %s28 = sshll.u32 [#allocation2], 4
      %s29 = int_to_ptr.vmem [resolvable:$true] %s28
      %34 = dma.hbm_to_vmem [thread:$0]  %s0, 256, %s29, [#allocation3], 128, 128, 8
    $region5: #{tpu_custom_call.1} parent=1 // pred_fallthru
      _
    // Predicated region
    $region6: #{tpu_custom_call.1} parent=1 // pred_check
      _
    $region7: #{tpu_custom_call.1} parent=1 // pred_check_branch
      %36 = sbr.rel (0) target = $region9
    $region8: #{tpu_custom_call.1} parent=1 // pred_region
      %s38 = ssub.s32 256, 256
      %39 = vsyncadd [#allocation6], %s38
      %s40 = sshll.u32 [#allocation5], 4
      %s41 = int_to_ptr.vmem [resolvable:$true] %s40
      %46 = dma.hbm_to_vmem [thread:$0]  %s1, 256, %s41, [#allocation6], 128, 128, 8
    $region9: #{tpu_custom_call.1} parent=1 // pred_fallthru
      _
    // Predicated region
    $region10: #{tpu_custom_call.1} parent=1 // pred_check
      _
    $region11: #{tpu_custom_call.1} parent=1 // pred_check_branch
      %48 = sbr.rel (0) target = $region13
    $region12: #{tpu_custom_call.1} parent=1 // pred_region
      %s50 = ssub.s32 256, 256
      %51 = vsyncadd [#allocation6], %s50
      %s52 = sshll.u32 [#allocation7], 4
      %s53 = int_to_ptr.vmem [resolvable:$true] %s52
      %58 = dma.hbm_to_vmem [thread:$0]  %s2, 256, %s53, [#allocation6], 128, 128, 8
    $region13: #{tpu_custom_call.1} parent=1 // pred_fallthru
      _
    // Predicated region
    $region14: #{tpu_custom_call.1} parent=1 // pred_check
      _
    $region15: #{tpu_custom_call.1} parent=1 // pred_check_branch
      %60 = sbr.rel (0) target = $region17
    $region16: #{tpu_custom_call.1} parent=1 // pred_region
      %s62 = ssub.s32 512, 512
      %63 = vsyncadd [#allocation9], %s62
      %s64 = sshll.u32 [#allocation8], 4
      %s65 = int_to_ptr.vmem [resolvable:$true] %s64
      %70 = dma.hbm_to_vmem [thread:$0]  %s3, 512, %s65, [#allocation9], 64, 64, 4
    $region17: #{tpu_custom_call.1} parent=1 // pred_fallthru
      _
    // Predicated region
    $region18: #{tpu_custom_call.1} parent=1 // pred_check
      _
    $region19: #{tpu_custom_call.1} parent=1 // pred_check_branch
      %72 = sbr.rel (0) target = $region21
    $region20: #{tpu_custom_call.1} parent=1 // pred_region
      %s74 = ssub.s32 16, 16
      %75 = vsyncadd [#allocation9], %s74
      %s77 = sshll.u32 [#allocation10], 4
      %s78 = int_to_ptr.vmem [resolvable:$true] %s77
      %80 = dma.hbm_to_vmem [thread:$0]  %s4, 16, %s78, [#allocation9]
    $region21: #{tpu_custom_call.1} parent=1 // pred_fallthru
      _
    // Predicated region
    $region22: #{tpu_custom_call.1} parent=1 // pred_check
      _
    $region23: #{tpu_custom_call.1} parent=1 // pred_check_branch
      %82 = sbr.rel (0) target = $region25
    $region24: #{tpu_custom_call.1} parent=1 // pred_region
      _
    $region25: #{tpu_custom_call.1} parent=1 // pred_fallthru
      _
    // Predicated region
    $region26: #{tpu_custom_call.1} parent=1 // pred_check
      _
    $region27: #{tpu_custom_call.1} parent=1 // pred_check_branch
      %84 = sbr.rel (0) target = $region29
    $region28: #{tpu_custom_call.1} parent=1 // pred_region
      %s86 = ssub.s32 16, 16
      %87 = vsyncadd [#allocation12], %s86
      %s89 = sshll.u32 [#allocation11], 4
      %s90 = int_to_ptr.vmem [resolvable:$true] %s89
      %92 = dma.hbm_to_vmem [thread:$0]  %s6, 16, %s90, [#allocation12]
    $region29: #{tpu_custom_call.1} parent=1 // pred_fallthru
      _
    // Predicated region
    $region30: #{tpu_custom_call.1} parent=1 // pred_check
      _
    $region31: #{tpu_custom_call.1} parent=1 // pred_check_branch
      %94 = sbr.rel (0) target = $region33
    $region32: #{tpu_custom_call.1} parent=1 // pred_region
      %s96 = ssub.s32 512, 512
      %97 = vsyncadd [#allocation12], %s96
      %s98 = sshll.u32 [#allocation13], 4
      %s99 = int_to_ptr.vmem [resolvable:$true] %s98
      %104 = dma.hbm_to_vmem [thread:$0]  %s7, 512, %s99, [#allocation12], 64, 64, 4
    $region33: #{tpu_custom_call.1} parent=1 // pred_fallthru
      _
    // Predicated region
    $region34: #{tpu_custom_call.1} parent=1 // pred_check
      _
    $region35: #{tpu_custom_call.1} parent=1 // pred_check_branch
      %106 = sbr.rel (0) target = $region37
    $region36: #{tpu_custom_call.1} parent=1 // pred_region
      %s108 = ssub.s32 16, 16
      %109 = vsyncadd [#allocation15], %s108
      %s111 = sshll.u32 [#allocation14], 4
      %s112 = int_to_ptr.vmem [resolvable:$true] %s111
      %114 = dma.hbm_to_vmem [thread:$0]  %s8, 16, %s112, [#allocation15]
    $region37: #{tpu_custom_call.1} parent=1 // pred_fallthru
      _
    // Predicated region
    $region38: #{tpu_custom_call.1} parent=1 // pred_check
      _
    $region39: #{tpu_custom_call.1} parent=1 // pred_check_branch
      %116 = sbr.rel (0) target = $region41
    $region40: #{tpu_custom_call.1} parent=1 // pred_region
      %s118 = ssub.s32 512, 512
      %119 = vsyncadd [#allocation15], %s118
      %s120 = sshll.u32 [#allocation16], 4
      %s121 = int_to_ptr.vmem [resolvable:$true] %s120
      %126 = dma.hbm_to_vmem [thread:$0]  %s9, 512, %s121, [#allocation15], 64, 64, 4
    $region41: #{tpu_custom_call.1} parent=1 // pred_fallthru
      _
    // Predicated region
    $region42: #{tpu_custom_call.1} parent=1 // pred_check
      _
    $region43: #{tpu_custom_call.1} parent=1 // pred_check_branch
      %128 = sbr.rel (0) target = $region45
    $region44: #{tpu_custom_call.1} parent=1 // pred_region
      _
    $region45: #{tpu_custom_call.1} parent=1 // pred_fallthru
      _
    // Predicated region
    $region46: #{tpu_custom_call.1} parent=1 // pred_check
      _
    $region47: #{tpu_custom_call.1} parent=1 // pred_check_branch
      %130 = sbr.rel (0) target = $region49
    $region48: #{tpu_custom_call.1} parent=1 // pred_region
      _
    $region49: #{tpu_custom_call.1} parent=1 // pred_fallthru
      _
    // Predicated region
    $region50: #{tpu_custom_call.1} parent=1 // pred_check
      _
    $region51: #{tpu_custom_call.1} parent=1 // pred_check_branch
      %132 = sbr.rel (0) target = $region53
    $region52: #{tpu_custom_call.1} parent=1 // pred_region
      %133 = dma.done [#allocation3], 256
    $region53: #{tpu_custom_call.1} parent=1 // pred_fallthru
      _
    // Predicated region
    $region54: #{tpu_custom_call.1} parent=1 // pred_check
      _
    $region55: #{tpu_custom_call.1} parent=1 // pred_check_branch
      %135 = sbr.rel (0) target = $region57
    $region56: #{tpu_custom_call.1} parent=1 // pred_region
      %136 = dma.done [#allocation6], 256
    $region57: #{tpu_custom_call.1} parent=1 // pred_fallthru
      _
    // Predicated region
    $region58: #{tpu_custom_call.1} parent=1 // pred_check
      _
    $region59: #{tpu_custom_call.1} parent=1 // pred_check_branch
      %138 = sbr.rel (0) target = $region61
    $region60: #{tpu_custom_call.1} parent=1 // pred_region
      %139 = dma.done [#allocation6], 256
    $region61: #{tpu_custom_call.1} parent=1 // pred_fallthru
      _
    // Predicated region
    $region62: #{tpu_custom_call.1} parent=1 // pred_check
      _
    $region63: #{tpu_custom_call.1} parent=1 // pred_check_branch
      %141 = sbr.rel (0) target = $region65
    $region64: #{tpu_custom_call.1} parent=1 // pred_region
      %142 = dma.done [#allocation9], 512
    $region65: #{tpu_custom_call.1} parent=1 // pred_fallthru
      _
    // Predicated region
    $region66: #{tpu_custom_call.1} parent=1 // pred_check
      _
    $region67: #{tpu_custom_call.1} parent=1 // pred_check_branch
      %144 = sbr.rel (0) target = $region69
    $region68: #{tpu_custom_call.1} parent=1 // pred_region
      %145 = dma.done [#allocation9], 16
    $region69: #{tpu_custom_call.1} parent=1 // pred_fallthru
      _
    // Predicated region
    $region70: #{tpu_custom_call.1} parent=1 // pred_check
      _
    $region71: #{tpu_custom_call.1} parent=1 // pred_check_branch
      %147 = sbr.rel (0) target = $region73
    $region72: #{tpu_custom_call.1} parent=1 // pred_region
      %148 = dma.done [#allocation12], 16
    $region73: #{tpu_custom_call.1} parent=1 // pred_fallthru
      _
    // Predicated region
    $region74: #{tpu_custom_call.1} parent=1 // pred_check
      _
    $region75: #{tpu_custom_call.1} parent=1 // pred_check_branch
      %150 = sbr.rel (0) target = $region77
    $region76: #{tpu_custom_call.1} parent=1 // pred_region
      %151 = dma.done [#allocation12], 512
    $region77: #{tpu_custom_call.1} parent=1 // pred_fallthru
      _
    // Predicated region
    $region78: #{tpu_custom_call.1} parent=1 // pred_check
      _
    $region79: #{tpu_custom_call.1} parent=1 // pred_check_branch
      %153 = sbr.rel (0) target = $region81
    $region80: #{tpu_custom_call.1} parent=1 // pred_region
      %154 = dma.done [#allocation15], 16
    $region81: #{tpu_custom_call.1} parent=1 // pred_fallthru
      _
    // Predicated region
    $region82: #{tpu_custom_call.1} parent=1 // pred_check
      _
    $region83: #{tpu_custom_call.1} parent=1 // pred_check_branch
      %156 = sbr.rel (0) target = $region85
    $region84: #{tpu_custom_call.1} parent=1 // pred_region
      %157 = dma.done [#allocation15], 512
    $region85: #{tpu_custom_call.1} parent=1 // pred_fallthru
      _
    %v159 = vld [vmem:[#allocation2] sm:$0xff]
    %v160 = vld [vmem:[#allocation2 + $0x8] sm:$0xff]
    %v161 = vpack.c.bf16 %v160, %v159
    %v162 = vld [vmem:[#allocation8] sm:$0xf]
    %v163 = vld [vmem:[#allocation8 + $0x4] sm:$0xf]
    %v164 = vld [vmem:[#allocation8 + $0x8] sm:$0xf]
    %v165 = vld [vmem:[#allocation8 + $0xc] sm:$0xf]
    %v166 = vld [vmem:[#allocation8 + $0x10] sm:$0xf]
    %v167 = vld [vmem:[#allocation8 + $0x14] sm:$0xf]
    %v168 = vld [vmem:[#allocation8 + $0x18] sm:$0xf]
    %v169 = vld [vmem:[#allocation8 + $0x1c] sm:$0xf]
    %v170 = vld [vmem:[#allocation10] sm:$0x1]
    %v172 = vlaneseq
    %v173 = vshrl.u32 %v172, 7
    %v174 = vsub.s32 0, %v173
    %v175 = vrot.slane %v170, %v174
    %v185 = vunpack.c.l.b16 %v162
    %v186 = vunpack.c.l.b16 %v163
    %v187 = vunpack.c.l.b16 %v164
    %v188 = vunpack.c.l.b16 %v165
    %v189 = vunpack.c.l.b16 %v166
    %v190 = vunpack.c.l.b16 %v167
    %v191 = vunpack.c.l.b16 %v168
    %v192 = vunpack.c.l.b16 %v169
    %v193 = vpack.c.b16 %v186, %v185
    %v194 = vpack.c.b16 %v188, %v187
    %v195 = vpack.c.b16 %v190, %v189
    %v196 = vpack.c.b16 %v192, %v191
    %vm201 = vcmask 523264
    %v203 = vsel %vm201, %v161, 0
    %205 = vmatprep.subr.bf16.mxu0 0
    %206 = vmatpush1.bf16.msra.mxu0 0
    %207 = vmatprep.subr.bf16.mxu0 0
    %208 = vmatpush1.bf16.msra.mxu0 0
    %209 = vmatprep.subr.bf16.mxu0 0
    %210 = vmatpush1.bf16.msra.mxu0 0
    %211 = vmatprep.subr.bf16.mxu0 0
    %212 = vmatpush1.bf16.msra.mxu0 0
    %213 = vmatprep.subr.bf16.mxu0 0
    %214 = vmatpush1.bf16.msra.mxu0 %v196
    %215 = vmatprep.subr.bf16.mxu0 0
    %216 = vmatpush1.bf16.msra.mxu0 %v195
    %217 = vmatprep.subr.bf16.mxu0 0
    %218 = vmatpush1.bf16.msra.mxu0 %v194
    %219 = vmatprep.subr.bf16.mxu0 0
    %220 = vmatpush1.bf16.msra.mxu0 %v193
    %221 = vmatprep.subr.bf16.mxu0 0
    %222 = vmatpush2.bf16.msra.mxu0 0
    %223 = vmatprep.subr.bf16.mxu0 0
    %224 = vmatpush2.bf16.msra.mxu0 0
    %225 = vmatprep.subr.bf16.mxu0 0
    %226 = vmatpush2.bf16.msra.mxu0 0
    %227 = vmatprep.subr.bf16.mxu0 0
    %228 = vmatpush2.bf16.msra.mxu0 0
    %229 = vmatprep.subr.bf16.mxu0 0
    %230 = vmatpush2.bf16.msra.mxu0 0
    %231 = vmatprep.subr.bf16.mxu0 0
    %232 = vmatpush2.bf16.msra.mxu0 0
    %233 = vmatprep.subr.bf16.mxu0 0
    %234 = vmatpush2.bf16.msra.mxu0 0
    %235 = vmatprep.subr.bf16.mxu0 0
    %236 = vmatpush2.bf16.msra.mxu0 0
    %237 = vmatprep.mubr.bf16.mxu0 0
    %238 = vmatmul.mubr.bf16.gmra.mxu0 %v203
    %v239 = vpop.f32.mrf.mxu0
    %v240 = vadd.f32 %v175, %v239
    %v241 = vpop.f32.mrf.mxu0
    %v242 = vpop.f32.mrf.mxu0
    %v243 = vadd.f32 %v175, %v242
    %v244 = vpop.f32.mrf.mxu0
    %245 = vdwg.mxu0
    %v246 = vld [vmem:[#allocation5] sm:$0xff]
    %v247 = vld [vmem:[#allocation5 + $0x8] sm:$0xff]
    %v248 = vpack.c.bf16 %v247, %v246
    %v249 = vld [vmem:[%s5] sm:$0xf]
    %v250 = vld [vmem:[%s5 + $0x4] sm:$0xf]
    %v251 = vld [vmem:[%s5 + $0x8] sm:$0xf]
    %v252 = vld [vmem:[%s5 + $0xc] sm:$0xf]
    %v253 = vld [vmem:[%s5 + $0x10] sm:$0xf]
    %v254 = vld [vmem:[%s5 + $0x14] sm:$0xf]
    %v255 = vld [vmem:[%s5 + $0x18] sm:$0xf]
    %v256 = vld [vmem:[%s5 + $0x1c] sm:$0xf]
    %v257 = vld [vmem:[#allocation11] sm:$0x1]
    %v259 = vlaneseq
    %v260 = vshrl.u32 %v259, 7
    %v261 = vsub.s32 0, %v260
    %v262 = vrot.slane %v257, %v261
    %v272 = vunpack.c.l.b16 %v249
    %v273 = vunpack.c.l.b16 %v250
    %v274 = vunpack.c.l.b16 %v251
    %v275 = vunpack.c.l.b16 %v252
    %v276 = vunpack.c.l.b16 %v253
    %v277 = vunpack.c.l.b16 %v254
    %v278 = vunpack.c.l.b16 %v255
    %v279 = vunpack.c.l.b16 %v256
    %v280 = vpack.c.b16 %v273, %v272
    %v281 = vpack.c.b16 %v275, %v274
    %v282 = vpack.c.b16 %v277, %v276
    %v283 = vpack.c.b16 %v279, %v278
    %v289 = vsel %vm201, %v248, 0
    %291 = vmatprep.subr.bf16.mxu0 0
    %292 = vmatpush1.bf16.msra.mxu0 0
    %293 = vmatprep.subr.bf16.mxu0 0
    %294 = vmatpush1.bf16.msra.mxu0 0
    %295 = vmatprep.subr.bf16.mxu0 0
    %296 = vmatpush1.bf16.msra.mxu0 0
    %297 = vmatprep.subr.bf16.mxu0 0
    %298 = vmatpush1.bf16.msra.mxu0 0
    %299 = vmatprep.subr.bf16.mxu0 0
    %300 = vmatpush1.bf16.msra.mxu0 %v283
    %301 = vmatprep.subr.bf16.mxu0 0
    %302 = vmatpush1.bf16.msra.mxu0 %v282
    %303 = vmatprep.subr.bf16.mxu0 0
    %304 = vmatpush1.bf16.msra.mxu0 %v281
    %305 = vmatprep.subr.bf16.mxu0 0
    %306 = vmatpush1.bf16.msra.mxu0 %v280
    %307 = vmatprep.subr.bf16.mxu0 0
    %308 = vmatpush2.bf16.msra.mxu0 0
    %309 = vmatprep.subr.bf16.mxu0 0
    %310 = vmatpush2.bf16.msra.mxu0 0
    %311 = vmatprep.subr.bf16.mxu0 0
    %312 = vmatpush2.bf16.msra.mxu0 0
    %313 = vmatprep.subr.bf16.mxu0 0
    %314 = vmatpush2.bf16.msra.mxu0 0
    %315 = vmatprep.subr.bf16.mxu0 0
    %316 = vmatpush2.bf16.msra.mxu0 0
    %317 = vmatprep.subr.bf16.mxu0 0
    %318 = vmatpush2.bf16.msra.mxu0 0
    %319 = vmatprep.subr.bf16.mxu0 0
    %320 = vmatpush2.bf16.msra.mxu0 0
    %321 = vmatprep.subr.bf16.mxu0 0
    %322 = vmatpush2.bf16.msra.mxu0 0
    %323 = vmatprep.mubr.bf16.mxu0 0
    %324 = vmatmul.mubr.bf16.gmra.mxu0 %v289
    %v325 = vpop.f32.mrf.mxu0
    %v326 = vadd.f32 %v262, %v325
    %v327 = vpop.f32.mrf.mxu0
    %v328 = vpop.f32.mrf.mxu0
    %v329 = vadd.f32 %v262, %v328
    %v330 = vpop.f32.mrf.mxu0
    %331 = vdwg.mxu0
    %v332 = vld [vmem:[#allocation7] sm:$0xff]
    %v333 = vld [vmem:[#allocation7 + $0x8] sm:$0xff]
    %v334 = vpack.c.bf16 %v333, %v332
    %v335 = vld [vmem:[#allocation13] sm:$0xf]
    %v336 = vld [vmem:[#allocation13 + $0x4] sm:$0xf]
    %v337 = vld [vmem:[#allocation13 + $0x8] sm:$0xf]
    %v338 = vld [vmem:[#allocation13 + $0xc] sm:$0xf]
    %v339 = vld [vmem:[#allocation13 + $0x10] sm:$0xf]
    %v340 = vld [vmem:[#allocation13 + $0x14] sm:$0xf]
    %v341 = vld [vmem:[#allocation13 + $0x18] sm:$0xf]
    %v342 = vld [vmem:[#allocation13 + $0x1c] sm:$0xf]
    %v343 = vld [vmem:[#allocation14] sm:$0x1]
    %v345 = vlaneseq
    %v346 = vshrl.u32 %v345, 7
    %v347 = vsub.s32 0, %v346
    %v348 = vrot.slane %v343, %v347
    %v358 = vunpack.c.l.b16 %v335
    %v359 = vunpack.c.l.b16 %v336
    %v360 = vunpack.c.l.b16 %v337
    %v361 = vunpack.c.l.b16 %v338
    %v362 = vunpack.c.l.b16 %v339
    %v363 = vunpack.c.l.b16 %v340
    %v364 = vunpack.c.l.b16 %v341
    %v365 = vunpack.c.l.b16 %v342
    %v366 = vpack.c.b16 %v359, %v358
    %v367 = vpack.c.b16 %v361, %v360
    %v368 = vpack.c.b16 %v363, %v362
    %v369 = vpack.c.b16 %v365, %v364
    %v375 = vsel %vm201, %v334, 0
    %377 = vmatprep.subr.bf16.mxu0 0
    %378 = vmatpush1.bf16.msra.mxu0 0
    %379 = vmatprep.subr.bf16.mxu0 0
    %380 = vmatpush1.bf16.msra.mxu0 0
    %381 = vmatprep.subr.bf16.mxu0 0
    %382 = vmatpush1.bf16.msra.mxu0 0
    %383 = vmatprep.subr.bf16.mxu0 0
    %384 = vmatpush1.bf16.msra.mxu0 0
    %385 = vmatprep.subr.bf16.mxu0 0
    %386 = vmatpush1.bf16.msra.mxu0 %v369
    %387 = vmatprep.subr.bf16.mxu0 0
    %388 = vmatpush1.bf16.msra.mxu0 %v368
    %389 = vmatprep.subr.bf16.mxu0 0
    %390 = vmatpush1.bf16.msra.mxu0 %v367
    %391 = vmatprep.subr.bf16.mxu0 0
    %392 = vmatpush1.bf16.msra.mxu0 %v366
    %393 = vmatprep.subr.bf16.mxu0 0
    %394 = vmatpush2.bf16.msra.mxu0 0
    %395 = vmatprep.subr.bf16.mxu0 0
    %396 = vmatpush2.bf16.msra.mxu0 0
    %397 = vmatprep.subr.bf16.mxu0 0
    %398 = vmatpush2.bf16.msra.mxu0 0
    %399 = vmatprep.subr.bf16.mxu0 0
    %400 = vmatpush2.bf16.msra.mxu0 0
    %401 = vmatprep.subr.bf16.mxu0 0
    %402 = vmatpush2.bf16.msra.mxu0 0
    %403 = vmatprep.subr.bf16.mxu0 0
    %404 = vmatpush2.bf16.msra.mxu0 0
    %405 = vmatprep.subr.bf16.mxu0 0
    %406 = vmatpush2.bf16.msra.mxu0 0
    %407 = vmatprep.subr.bf16.mxu0 0
    %408 = vmatpush2.bf16.msra.mxu0 0
    %409 = vmatprep.mubr.bf16.mxu0 0
    %410 = vmatmul.mubr.bf16.gmra.mxu0 %v375
    %v411 = vpop.f32.mrf.mxu0
    %v412 = vadd.f32 %v348, %v411
    %v413 = vpop.f32.mrf.mxu0
    %v414 = vpop.f32.mrf.mxu0
    %v415 = vadd.f32 %v348, %v414
    %v416 = vpop.f32.mrf.mxu0
    %417 = vdwg.mxu0
    %v418 = vmul.f32 %v240, 0.35355338
    %v419 = vmul.f32 %v243, 0.35355338
    %v420 = vld [vmem:[%s11] sm:$0xff]
    %v421 = vld [vmem:[%s11 + $0x8] sm:$0x7f]
    %v422 = vpack.c.bf16 %v418, %v418
    %v423 = vpack.c.bf16 %v412, %v412
    %v424 = vpack.c.bf16 %v420, %v326
    %v425 = vpack.c.bf16 %v421, %v421
    %vm426 = vcmask 64512
    %v428 = vsel %vm426, %v422, 0
    %v431 = vsel %vm426, %v424, 0
    %v434 = vsel %vm426, %v425, 0
    %436 = vmatprep.subr.bf16.mxu0 0
    %437 = vmatpush1.bf16.xpose.msra.mxu0 0
    %438 = vmatprep.subr.bf16.mxu0 0
    %439 = vmatpush1.bf16.xpose.msra.mxu0 0
    %440 = vmatprep.subr.bf16.mxu0 0
    %441 = vmatpush1.bf16.xpose.msra.mxu0 0
    %442 = vmatprep.subr.bf16.mxu0 0
    %443 = vmatpush1.bf16.xpose.msra.mxu0 0
    %444 = vmatprep.subr.bf16.mxu0 0
    %445 = vmatpush1.bf16.xpose.msra.mxu0 0
    %446 = vmatprep.subr.bf16.mxu0 0
    %447 = vmatpush1.bf16.xpose.msra.mxu0 0
    %448 = vmatprep.subr.bf16.mxu0 0
    %449 = vmatpush1.bf16.xpose.msra.mxu0 %v434
    %450 = vmatprep.subr.bf16.mxu0 0
    %451 = vmatpush1.bf16.xpose.msra.mxu0 %v431
    %452 = vmatprep.subr.bf16.mxu0 0
    %453 = vmatpush2.bf16.xpose.msra.mxu0 0
    %454 = vmatprep.subr.bf16.mxu0 0
    %455 = vmatpush2.bf16.xpose.msra.mxu0 0
    %456 = vmatprep.subr.bf16.mxu0 0
    %457 = vmatpush2.bf16.xpose.msra.mxu0 0
    %458 = vmatprep.subr.bf16.mxu0 0
    %459 = vmatpush2.bf16.xpose.msra.mxu0 0
    %460 = vmatprep.subr.bf16.mxu0 0
    %461 = vmatpush2.bf16.xpose.msra.mxu0 0
    %462 = vmatprep.subr.bf16.mxu0 0
    %463 = vmatpush2.bf16.xpose.msra.mxu0 0
    %464 = vmatprep.subr.bf16.mxu0 0
    %465 = vmatpush2.bf16.xpose.msra.mxu0 0
    %466 = vmatprep.subr.bf16.mxu0 0
    %467 = vmatpush2.bf16.xpose.msra.mxu0 0
    %468 = vmatprep.mubr.bf16.mxu0 0
    %469 = vmatmul.mubr.bf16.gmra.mxu0 %v428
    %v470 = vpop.f32.mrf.mxu0
    %v471 = vadd.f32 0.0, %v470
    %v472 = vpop.f32.mrf.mxu0
    %v473 = vpop.f32.mrf.mxu0
    %v474 = vpop.f32.mrf.mxu0
    %475 = vdwg.mxu0
    %477 = vrot.lane.b32.xlu0 %v471, 1
    %v478 = vpop.permute.xlu0 %477
    %480 = vrot.lane.b32.xlu0 %v471, 2
    %v481 = vpop.permute.xlu0 %480
    %483 = vrot.lane.b32.xlu0 %v471, 3
    %v484 = vpop.permute.xlu0 %483
    %486 = vrot.lane.b32.xlu0 %v471, 4
    %v487 = vpop.permute.xlu0 %486
    %489 = vrot.lane.b32.xlu0 %v471, 5
    %v490 = vpop.permute.xlu0 %489
    %492 = vrot.lane.b32.xlu0 %v471, 6
    %v493 = vpop.permute.xlu0 %492
    %495 = vrot.lane.b32.xlu0 %v471, 7
    %v496 = vpop.permute.xlu0 %495
    %vm498 = vcmask 1040384
    %v499 = vsel %vm498, %v471, %v478
    %vm500 = vcmask 1041408
    %v501 = vsel %vm500, %v499, %v481
    %vm502 = vcmask 1042432
    %v503 = vsel %vm502, %v501, %v484
    %vm504 = vcmask 1043456
    %v505 = vsel %vm504, %v503, %v487
    %vm506 = vcmask 1044480
    %v507 = vsel %vm506, %v505, %v490
    %vm508 = vcmask 1045504
    %v509 = vsel %vm508, %v507, %v493
    %vm510 = vcmask 1046528
    %v511 = vsel %vm510, %v509, %v496
    %513 = vrot.lane.b32.xlu0 %v511, 113
    %v514 = vpop.permute.xlu0 %513
    %v516 = vadd.f32 %v471, %v514
    %v517 = vsel %vm426, %v516, -inf
    %518 = vmax.xlane.f32.xlu0 %v517
    %v519 = vpop.xlane.xlu0 %518
    %v520 = vsub.f32 %v516, %v519
    %v521 = vmul.f32 %v520, 1.442695
    %v522 = vpow.pop %v521
    %v523 = vsel %vm426, %v522, 0.0
    %524 = vadd.xlane.f32.xlu0 %v523
    %v525 = vpop.xlane.xlu0 %524
    %v526 = vrcp.pop %v525
    %v527 = vmul.f32 %v522, %v526
    %v528 = vpack.c.bf16 %v527, %v527
    %v530 = vsel %vm426, %v528, 0
    %v533 = vsel %vm504, %v423, 0
    %535 = vmatprep.subr.bf16.mxu0 0
    %536 = vmatpush1.bf16.msra.mxu0 0
    %537 = vmatprep.subr.bf16.mxu0 0
    %538 = vmatpush1.bf16.msra.mxu0 0
    %539 = vmatprep.subr.bf16.mxu0 0
    %540 = vmatpush1.bf16.msra.mxu0 0
    %541 = vmatprep.subr.bf16.mxu0 0
    %542 = vmatpush1.bf16.msra.mxu0 0
    %543 = vmatprep.subr.bf16.mxu0 0
    %544 = vmatpush1.bf16.msra.mxu0 0
    %545 = vmatprep.subr.bf16.mxu0 0
    %546 = vmatpush1.bf16.msra.mxu0 0
    %547 = vmatprep.subr.bf16.mxu0 0
    %548 = vmatpush1.bf16.msra.mxu0 0
    %549 = vmatprep.subr.bf16.mxu0 0
    %550 = vmatpush1.bf16.msra.mxu0 %v533
    %551 = vmatprep.subr.bf16.mxu0 0
    %552 = vmatpush2.bf16.msra.mxu0 0
    %553 = vmatprep.subr.bf16.mxu0 0
    %554 = vmatpush2.bf16.msra.mxu0 0
    %555 = vmatprep.subr.bf16.mxu0 0
    %556 = vmatpush2.bf16.msra.mxu0 0
    %557 = vmatprep.subr.bf16.mxu0 0
    %558 = vmatpush2.bf16.msra.mxu0 0
    %559 = vmatprep.subr.bf16.mxu0 0
    %560 = vmatpush2.bf16.msra.mxu0 0
    %561 = vmatprep.subr.bf16.mxu0 0
    %562 = vmatpush2.bf16.msra.mxu0 0
    %563 = vmatprep.subr.bf16.mxu0 0
    %564 = vmatpush2.bf16.msra.mxu0 0
    %565 = vmatprep.subr.bf16.mxu0 0
    %566 = vmatpush2.bf16.msra.mxu0 0
    %567 = vmatprep.mubr.bf16.mxu0 0
    %568 = vmatmul.mubr.bf16.gmra.mxu0 %v530
    %v569 = vpop.f32.mrf.mxu0
    %v570 = vadd.f32 0.0, %v569
    %v571 = vpop.f32.mrf.mxu0
    %v572 = vpop.f32.mrf.mxu0
    %v573 = vpop.f32.mrf.mxu0
    %574 = vdwg.mxu0
    %577 = vrot.lane.b32.xlu0 %v420, 8
    %v578 = vpop.permute.xlu0 %577
    %579 = vrot.lane.b32.xlu0 %v421, 8
    %v580 = vpop.permute.xlu0 %579
    %v583 = vpack.c.bf16 %v578, %v326
    %v584 = vpack.c.bf16 %v580, %v580
    %586 = vrot.lane.b32.xlu0 %v422, 120
    %v587 = vpop.permute.xlu0 %586
    %590 = vrot.lane.b32.xlu0 %v583, 120
    %v591 = vpop.permute.xlu0 %590
    %592 = vrot.lane.b32.xlu0 %v584, 120
    %v593 = vpop.permute.xlu0 %592
    %v595 = vsel %vm426, %v587, 0
    %v598 = vsel %vm426, %v591, 0
    %v601 = vsel %vm426, %v593, 0
    %603 = vmatprep.subr.bf16.mxu0 0
    %604 = vmatpush1.bf16.xpose.msra.mxu0 0
    %605 = vmatprep.subr.bf16.mxu0 0
    %606 = vmatpush1.bf16.xpose.msra.mxu0 0
    %607 = vmatprep.subr.bf16.mxu0 0
    %608 = vmatpush1.bf16.xpose.msra.mxu0 0
    %609 = vmatprep.subr.bf16.mxu0 0
    %610 = vmatpush1.bf16.xpose.msra.mxu0 0
    %611 = vmatprep.subr.bf16.mxu0 0
    %612 = vmatpush1.bf16.xpose.msra.mxu0 0
    %613 = vmatprep.subr.bf16.mxu0 0
    %614 = vmatpush1.bf16.xpose.msra.mxu0 0
    %615 = vmatprep.subr.bf16.mxu0 0
    %616 = vmatpush1.bf16.xpose.msra.mxu0 %v601
    %617 = vmatprep.subr.bf16.mxu0 0
    %618 = vmatpush1.bf16.xpose.msra.mxu0 %v598
    %619 = vmatprep.subr.bf16.mxu0 0
    %620 = vmatpush2.bf16.xpose.msra.mxu0 0
    %621 = vmatprep.subr.bf16.mxu0 0
    %622 = vmatpush2.bf16.xpose.msra.mxu0 0
    %623 = vmatprep.subr.bf16.mxu0 0
    %624 = vmatpush2.bf16.xpose.msra.mxu0 0
    %625 = vmatprep.subr.bf16.mxu0 0
    %626 = vmatpush2.bf16.xpose.msra.mxu0 0
    %627 = vmatprep.subr.bf16.mxu0 0
    %628 = vmatpush2.bf16.xpose.msra.mxu0 0
    %629 = vmatprep.subr.bf16.mxu0 0
    %630 = vmatpush2.bf16.xpose.msra.mxu0 0
    %631 = vmatprep.subr.bf16.mxu0 0
    %632 = vmatpush2.bf16.xpose.msra.mxu0 0
    %633 = vmatprep.subr.bf16.mxu0 0
    %634 = vmatpush2.bf16.xpose.msra.mxu0 0
    %635 = vmatprep.mubr.bf16.mxu0 0
    %636 = vmatmul.mubr.bf16.gmra.mxu0 %v595
    %v637 = vpop.f32.mrf.mxu0
    %v638 = vadd.f32 0.0, %v637
    %v639 = vpop.f32.mrf.mxu0
    %v640 = vpop.f32.mrf.mxu0
    %v641 = vpop.f32.mrf.mxu0
    %642 = vdwg.mxu0
    %644 = vrot.lane.b32.xlu0 %v638, 1
    %v645 = vpop.permute.xlu0 %644
    %647 = vrot.lane.b32.xlu0 %v638, 2
    %v648 = vpop.permute.xlu0 %647
    %650 = vrot.lane.b32.xlu0 %v638, 3
    %v651 = vpop.permute.xlu0 %650
    %653 = vrot.lane.b32.xlu0 %v638, 4
    %v654 = vpop.permute.xlu0 %653
    %656 = vrot.lane.b32.xlu0 %v638, 5
    %v657 = vpop.permute.xlu0 %656
    %659 = vrot.lane.b32.xlu0 %v638, 6
    %v660 = vpop.permute.xlu0 %659
    %662 = vrot.lane.b32.xlu0 %v638, 7
    %v663 = vpop.permute.xlu0 %662
    %v665 = vsel %vm498, %v638, %v645
    %v666 = vsel %vm500, %v665, %v648
    %v667 = vsel %vm502, %v666, %v651
    %v668 = vsel %vm504, %v667, %v654
    %v669 = vsel %vm506, %v668, %v657
    %v670 = vsel %vm508, %v669, %v660
    %v671 = vsel %vm510, %v670, %v663
    %673 = vrot.lane.b32.xlu0 %v671, 113
    %v674 = vpop.permute.xlu0 %673
    %v676 = vadd.f32 %v638, %v674
    %v677 = vsel %vm426, %v676, -inf
    %678 = vmax.xlane.f32.xlu0 %v677
    %v679 = vpop.xlane.xlu0 %678
    %v680 = vsub.f32 %v676, %v679
    %v681 = vmul.f32 %v680, 1.442695
    %v682 = vpow.pop %v681
    %v683 = vsel %vm426, %v682, 0.0
    %684 = vadd.xlane.f32.xlu0 %v683
    %v685 = vpop.xlane.xlu0 %684
    %v686 = vrcp.pop %v685
    %v687 = vmul.f32 %v682, %v686
    %v688 = vpack.c.bf16 %v687, %v687
    %690 = vrot.lane.b32.xlu0 %v423, 120
    %v691 = vpop.permute.xlu0 %690
    %v693 = vsel %vm426, %v688, 0
    %v696 = vsel %vm504, %v691, 0
    %698 = vmatprep.subr.bf16.mxu0 0
    %699 = vmatpush1.bf16.msra.mxu0 0
    %700 = vmatprep.subr.bf16.mxu0 0
    %701 = vmatpush1.bf16.msra.mxu0 0
    %702 = vmatprep.subr.bf16.mxu0 0
    %703 = vmatpush1.bf16.msra.mxu0 0
    %704 = vmatprep.subr.bf16.mxu0 0
    %705 = vmatpush1.bf16.msra.mxu0 0
    %706 = vmatprep.subr.bf16.mxu0 0
    %707 = vmatpush1.bf16.msra.mxu0 0
    %708 = vmatprep.subr.bf16.mxu0 0
    %709 = vmatpush1.bf16.msra.mxu0 0
    %710 = vmatprep.subr.bf16.mxu0 0
    %711 = vmatpush1.bf16.msra.mxu0 0
    %712 = vmatprep.subr.bf16.mxu0 0
    %713 = vmatpush1.bf16.msra.mxu0 %v696
    %714 = vmatprep.subr.bf16.mxu0 0
    %715 = vmatpush2.bf16.msra.mxu0 0
    %716 = vmatprep.subr.bf16.mxu0 0
    %717 = vmatpush2.bf16.msra.mxu0 0
    %718 = vmatprep.subr.bf16.mxu0 0
    %719 = vmatpush2.bf16.msra.mxu0 0
    %720 = vmatprep.subr.bf16.mxu0 0
    %721 = vmatpush2.bf16.msra.mxu0 0
    %722 = vmatprep.subr.bf16.mxu0 0
    %723 = vmatpush2.bf16.msra.mxu0 0
    %724 = vmatprep.subr.bf16.mxu0 0
    %725 = vmatpush2.bf16.msra.mxu0 0
    %726 = vmatprep.subr.bf16.mxu0 0
    %727 = vmatpush2.bf16.msra.mxu0 0
    %728 = vmatprep.subr.bf16.mxu0 0
    %729 = vmatpush2.bf16.msra.mxu0 0
    %730 = vmatprep.mubr.bf16.mxu0 0
    %731 = vmatmul.mubr.bf16.gmra.mxu0 %v693
    %v732 = vpop.f32.mrf.mxu0
    %v733 = vadd.f32 0.0, %v732
    %v734 = vpop.f32.mrf.mxu0
    %v735 = vpop.f32.mrf.mxu0
    %v736 = vpop.f32.mrf.mxu0
    %737 = vdwg.mxu0
    %738 = vrot.lane.b32.xlu0 %v420, 16
    %v739 = vpop.permute.xlu0 %738
    %740 = vrot.lane.b32.xlu0 %v421, 16
    %v741 = vpop.permute.xlu0 %740
    %v744 = vpack.c.bf16 %v739, %v326
    %v745 = vpack.c.bf16 %v741, %v741
    %746 = vrot.lane.b32.xlu0 %v422, 112
    %v747 = vpop.permute.xlu0 %746
    %750 = vrot.lane.b32.xlu0 %v744, 112
    %v751 = vpop.permute.xlu0 %750
    %752 = vrot.lane.b32.xlu0 %v745, 112
    %v753 = vpop.permute.xlu0 %752
    %v755 = vsel %vm426, %v747, 0
    %v758 = vsel %vm426, %v751, 0
    %v761 = vsel %vm426, %v753, 0
    %763 = vmatprep.subr.bf16.mxu0 0
    %764 = vmatpush1.bf16.xpose.msra.mxu0 0
    %765 = vmatprep.subr.bf16.mxu0 0
    %766 = vmatpush1.bf16.xpose.msra.mxu0 0
    %767 = vmatprep.subr.bf16.mxu0 0
    %768 = vmatpush1.bf16.xpose.msra.mxu0 0
    %769 = vmatprep.subr.bf16.mxu0 0
    %770 = vmatpush1.bf16.xpose.msra.mxu0 0
    %771 = vmatprep.subr.bf16.mxu0 0
    %772 = vmatpush1.bf16.xpose.msra.mxu0 0
    %773 = vmatprep.subr.bf16.mxu0 0
    %774 = vmatpush1.bf16.xpose.msra.mxu0 0
    %775 = vmatprep.subr.bf16.mxu0 0
    %776 = vmatpush1.bf16.xpose.msra.mxu0 %v761
    %777 = vmatprep.subr.bf16.mxu0 0
    %778 = vmatpush1.bf16.xpose.msra.mxu0 %v758
    %779 = vmatprep.subr.bf16.mxu0 0
    %780 = vmatpush2.bf16.xpose.msra.mxu0 0
    %781 = vmatprep.subr.bf16.mxu0 0
    %782 = vmatpush2.bf16.xpose.msra.mxu0 0
    %783 = vmatprep.subr.bf16.mxu0 0
    %784 = vmatpush2.bf16.xpose.msra.mxu0 0
    %785 = vmatprep.subr.bf16.mxu0 0
    %786 = vmatpush2.bf16.xpose.msra.mxu0 0
    %787 = vmatprep.subr.bf16.mxu0 0
    %788 = vmatpush2.bf16.xpose.msra.mxu0 0
    %789 = vmatprep.subr.bf16.mxu0 0
    %790 = vmatpush2.bf16.xpose.msra.mxu0 0
    %791 = vmatprep.subr.bf16.mxu0 0
    %792 = vmatpush2.bf16.xpose.msra.mxu0 0
    %793 = vmatprep.subr.bf16.mxu0 0
    %794 = vmatpush2.bf16.xpose.msra.mxu0 0
    %795 = vmatprep.mubr.bf16.mxu0 0
    %796 = vmatmul.mubr.bf16.gmra.mxu0 %v755
    %v797 = vpop.f32.mrf.mxu0
    %v798 = vadd.f32 0.0, %v797
    %v799 = vpop.f32.mrf.mxu0
    %v800 = vpop.f32.mrf.mxu0
    %v801 = vpop.f32.mrf.mxu0
    %802 = vdwg.mxu0
    %804 = vrot.lane.b32.xlu0 %v798, 1
    %v805 = vpop.permute.xlu0 %804
    %807 = vrot.lane.b32.xlu0 %v798, 2
    %v808 = vpop.permute.xlu0 %807
    %810 = vrot.lane.b32.xlu0 %v798, 3
    %v811 = vpop.permute.xlu0 %810
    %813 = vrot.lane.b32.xlu0 %v798, 4
    %v814 = vpop.permute.xlu0 %813
    %816 = vrot.lane.b32.xlu0 %v798, 5
    %v817 = vpop.permute.xlu0 %816
    %819 = vrot.lane.b32.xlu0 %v798, 6
    %v820 = vpop.permute.xlu0 %819
    %822 = vrot.lane.b32.xlu0 %v798, 7
    %v823 = vpop.permute.xlu0 %822
    %v825 = vsel %vm498, %v798, %v805
    %v826 = vsel %vm500, %v825, %v808
    %v827 = vsel %vm502, %v826, %v811
    %v828 = vsel %vm504, %v827, %v814
    %v829 = vsel %vm506, %v828, %v817
    %v830 = vsel %vm508, %v829, %v820
    %v831 = vsel %vm510, %v830, %v823
    %833 = vrot.lane.b32.xlu0 %v831, 113
    %v834 = vpop.permute.xlu0 %833
    %v836 = vadd.f32 %v798, %v834
    %v837 = vsel %vm426, %v836, -inf
    %838 = vmax.xlane.f32.xlu0 %v837
    %v839 = vpop.xlane.xlu0 %838
    %v840 = vsub.f32 %v836, %v839
    %v841 = vmul.f32 %v840, 1.442695
    %v842 = vpow.pop %v841
    %v843 = vsel %vm426, %v842, 0.0
    %844 = vadd.xlane.f32.xlu0 %v843
    %v845 = vpop.xlane.xlu0 %844
    %v846 = vrcp.pop %v845
    %v847 = vmul.f32 %v842, %v846
    %v848 = vpack.c.bf16 %v847, %v847
    %849 = vrot.lane.b32.xlu0 %v423, 112
    %v850 = vpop.permute.xlu0 %849
    %v852 = vsel %vm426, %v848, 0
    %v855 = vsel %vm504, %v850, 0
    %857 = vmatprep.subr.bf16.mxu0 0
    %858 = vmatpush1.bf16.msra.mxu0 0
    %859 = vmatprep.subr.bf16.mxu0 0
    %860 = vmatpush1.bf16.msra.mxu0 0
    %861 = vmatprep.subr.bf16.mxu0 0
    %862 = vmatpush1.bf16.msra.mxu0 0
    %863 = vmatprep.subr.bf16.mxu0 0
    %864 = vmatpush1.bf16.msra.mxu0 0
    %865 = vmatprep.subr.bf16.mxu0 0
    %866 = vmatpush1.bf16.msra.mxu0 0
    %867 = vmatprep.subr.bf16.mxu0 0
    %868 = vmatpush1.bf16.msra.mxu0 0
    %869 = vmatprep.subr.bf16.mxu0 0
    %870 = vmatpush1.bf16.msra.mxu0 0
    %871 = vmatprep.subr.bf16.mxu0 0
    %872 = vmatpush1.bf16.msra.mxu0 %v855
    %873 = vmatprep.subr.bf16.mxu0 0
    %874 = vmatpush2.bf16.msra.mxu0 0
    %875 = vmatprep.subr.bf16.mxu0 0
    %876 = vmatpush2.bf16.msra.mxu0 0
    %877 = vmatprep.subr.bf16.mxu0 0
    %878 = vmatpush2.bf16.msra.mxu0 0
    %879 = vmatprep.subr.bf16.mxu0 0
    %880 = vmatpush2.bf16.msra.mxu0 0
    %881 = vmatprep.subr.bf16.mxu0 0
    %882 = vmatpush2.bf16.msra.mxu0 0
    %883 = vmatprep.subr.bf16.mxu0 0
    %884 = vmatpush2.bf16.msra.mxu0 0
    %885 = vmatprep.subr.bf16.mxu0 0
    %886 = vmatpush2.bf16.msra.mxu0 0
    %887 = vmatprep.subr.bf16.mxu0 0
    %888 = vmatpush2.bf16.msra.mxu0 0
    %889 = vmatprep.mubr.bf16.mxu0 0
    %890 = vmatmul.mubr.bf16.gmra.mxu0 %v852
    %v891 = vpop.f32.mrf.mxu0
    %v892 = vadd.f32 0.0, %v891
    %v893 = vpop.f32.mrf.mxu0
    %v894 = vpop.f32.mrf.mxu0
    %v895 = vpop.f32.mrf.mxu0
    %896 = vdwg.mxu0
    %897 = vrot.lane.b32.xlu0 %v420, 24
    %v898 = vpop.permute.xlu0 %897
    %899 = vrot.lane.b32.xlu0 %v421, 24
    %v900 = vpop.permute.xlu0 %899
    %v903 = vpack.c.bf16 %v898, %v326
    %v904 = vpack.c.bf16 %v900, %v900
    %905 = vrot.lane.b32.xlu0 %v422, 104
    %v906 = vpop.permute.xlu0 %905
    %909 = vrot.lane.b32.xlu0 %v903, 104
    %v910 = vpop.permute.xlu0 %909
    %911 = vrot.lane.b32.xlu0 %v904, 104
    %v912 = vpop.permute.xlu0 %911
    %v914 = vsel %vm426, %v906, 0
    %v917 = vsel %vm426, %v910, 0
    %v920 = vsel %vm426, %v912, 0
    %922 = vmatprep.subr.bf16.mxu0 0
    %923 = vmatpush1.bf16.xpose.msra.mxu0 0
    %924 = vmatprep.subr.bf16.mxu0 0
    %925 = vmatpush1.bf16.xpose.msra.mxu0 0
    %926 = vmatprep.subr.bf16.mxu0 0
    %927 = vmatpush1.bf16.xpose.msra.mxu0 0
    %928 = vmatprep.subr.bf16.mxu0 0
    %929 = vmatpush1.bf16.xpose.msra.mxu0 0
    %930 = vmatprep.subr.bf16.mxu0 0
    %931 = vmatpush1.bf16.xpose.msra.mxu0 0
    %932 = vmatprep.subr.bf16.mxu0 0
    %933 = vmatpush1.bf16.xpose.msra.mxu0 0
    %934 = vmatprep.subr.bf16.mxu0 0
    %935 = vmatpush1.bf16.xpose.msra.mxu0 %v920
    %936 = vmatprep.subr.bf16.mxu0 0
    %937 = vmatpush1.bf16.xpose.msra.mxu0 %v917
    %938 = vmatprep.subr.bf16.mxu0 0
    %939 = vmatpush2.bf16.xpose.msra.mxu0 0
    %940 = vmatprep.subr.bf16.mxu0 0
    %941 = vmatpush2.bf16.xpose.msra.mxu0 0
    %942 = vmatprep.subr.bf16.mxu0 0
    %943 = vmatpush2.bf16.xpose.msra.mxu0 0
    %944 = vmatprep.subr.bf16.mxu0 0
    %945 = vmatpush2.bf16.xpose.msra.mxu0 0
    %946 = vmatprep.subr.bf16.mxu0 0
    %947 = vmatpush2.bf16.xpose.msra.mxu0 0
    %948 = vmatprep.subr.bf16.mxu0 0
    %949 = vmatpush2.bf16.xpose.msra.mxu0 0
    %950 = vmatprep.subr.bf16.mxu0 0
    %951 = vmatpush2.bf16.xpose.msra.mxu0 0
    %952 = vmatprep.subr.bf16.mxu0 0
    %953 = vmatpush2.bf16.xpose.msra.mxu0 0
    %954 = vmatprep.mubr.bf16.mxu0 0
    %955 = vmatmul.mubr.bf16.gmra.mxu0 %v914
    %v956 = vpop.f32.mrf.mxu0
    %v957 = vadd.f32 0.0, %v956
    %v958 = vpop.f32.mrf.mxu0
    %v959 = vpop.f32.mrf.mxu0
    %v960 = vpop.f32.mrf.mxu0
    %961 = vdwg.mxu0
    %963 = vrot.lane.b32.xlu0 %v957, 1
    %v964 = vpop.permute.xlu0 %963
    %966 = vrot.lane.b32.xlu0 %v957, 2
    %v967 = vpop.permute.xlu0 %966
    %969 = vrot.lane.b32.xlu0 %v957, 3
    %v970 = vpop.permute.xlu0 %969
    %972 = vrot.lane.b32.xlu0 %v957, 4
    %v973 = vpop.permute.xlu0 %972
    %975 = vrot.lane.b32.xlu0 %v957, 5
    %v976 = vpop.permute.xlu0 %975
    %978 = vrot.lane.b32.xlu0 %v957, 6
    %v979 = vpop.permute.xlu0 %978
    %981 = vrot.lane.b32.xlu0 %v957, 7
    %v982 = vpop.permute.xlu0 %981
    %v984 = vsel %vm498, %v957, %v964
    %v985 = vsel %vm500, %v984, %v967
    %v986 = vsel %vm502, %v985, %v970
    %v987 = vsel %vm504, %v986, %v973
    %v988 = vsel %vm506, %v987, %v976
    %v989 = vsel %vm508, %v988, %v979
    %v990 = vsel %vm510, %v989, %v982
    %992 = vrot.lane.b32.xlu0 %v990, 113
    %v993 = vpop.permute.xlu0 %992
    %v995 = vadd.f32 %v957, %v993
    %v996 = vsel %vm426, %v995, -inf
    %997 = vmax.xlane.f32.xlu0 %v996
    %v998 = vpop.xlane.xlu0 %997
    %v999 = vsub.f32 %v995, %v998
    %v1000 = vmul.f32 %v999, 1.442695
    %v1001 = vpow.pop %v1000
    %v1002 = vsel %vm426, %v1001, 0.0
    %1003 = vadd.xlane.f32.xlu0 %v1002
    %v1004 = vpop.xlane.xlu0 %1003
    %v1005 = vrcp.pop %v1004
    %v1006 = vmul.f32 %v1001, %v1005
    %v1007 = vpack.c.bf16 %v1006, %v1006
    %1008 = vrot.lane.b32.xlu0 %v423, 104
    %v1009 = vpop.permute.xlu0 %1008
    %v1011 = vsel %vm426, %v1007, 0
    %v1014 = vsel %vm504, %v1009, 0
    %1016 = vmatprep.subr.bf16.mxu0 0
    %1017 = vmatpush1.bf16.msra.mxu0 0
    %1018 = vmatprep.subr.bf16.mxu0 0
    %1019 = vmatpush1.bf16.msra.mxu0 0
    %1020 = vmatprep.subr.bf16.mxu0 0
    %1021 = vmatpush1.bf16.msra.mxu0 0
    %1022 = vmatprep.subr.bf16.mxu0 0
    %1023 = vmatpush1.bf16.msra.mxu0 0
    %1024 = vmatprep.subr.bf16.mxu0 0
    %1025 = vmatpush1.bf16.msra.mxu0 0
    %1026 = vmatprep.subr.bf16.mxu0 0
    %1027 = vmatpush1.bf16.msra.mxu0 0
    %1028 = vmatprep.subr.bf16.mxu0 0
    %1029 = vmatpush1.bf16.msra.mxu0 0
    %1030 = vmatprep.subr.bf16.mxu0 0
    %1031 = vmatpush1.bf16.msra.mxu0 %v1014
    %1032 = vmatprep.subr.bf16.mxu0 0
    %1033 = vmatpush2.bf16.msra.mxu0 0
    %1034 = vmatprep.subr.bf16.mxu0 0
    %1035 = vmatpush2.bf16.msra.mxu0 0
    %1036 = vmatprep.subr.bf16.mxu0 0
    %1037 = vmatpush2.bf16.msra.mxu0 0
    %1038 = vmatprep.subr.bf16.mxu0 0
    %1039 = vmatpush2.bf16.msra.mxu0 0
    %1040 = vmatprep.subr.bf16.mxu0 0
    %1041 = vmatpush2.bf16.msra.mxu0 0
    %1042 = vmatprep.subr.bf16.mxu0 0
    %1043 = vmatpush2.bf16.msra.mxu0 0
    %1044 = vmatprep.subr.bf16.mxu0 0
    %1045 = vmatpush2.bf16.msra.mxu0 0
    %1046 = vmatprep.subr.bf16.mxu0 0
    %1047 = vmatpush2.bf16.msra.mxu0 0
    %1048 = vmatprep.mubr.bf16.mxu0 0
    %1049 = vmatmul.mubr.bf16.gmra.mxu0 %v1011
    %v1050 = vpop.f32.mrf.mxu0
    %v1051 = vadd.f32 0.0, %v1050
    %v1052 = vpop.f32.mrf.mxu0
    %v1053 = vpop.f32.mrf.mxu0
    %v1054 = vpop.f32.mrf.mxu0
    %1055 = vdwg.mxu0
    %1056 = vrot.lane.b32.xlu0 %v420, 32
    %v1057 = vpop.permute.xlu0 %1056
    %1058 = vrot.lane.b32.xlu0 %v421, 32
    %v1059 = vpop.permute.xlu0 %1058
    %v1062 = vpack.c.bf16 %v1057, %v326
    %v1063 = vpack.c.bf16 %v1059, %v1059
    %1064 = vrot.lane.b32.xlu0 %v422, 96
    %v1065 = vpop.permute.xlu0 %1064
    %1068 = vrot.lane.b32.xlu0 %v1062, 96
    %v1069 = vpop.permute.xlu0 %1068
    %1070 = vrot.lane.b32.xlu0 %v1063, 96
    %v1071 = vpop.permute.xlu0 %1070
    %v1073 = vsel %vm426, %v1065, 0
    %v1076 = vsel %vm426, %v1069, 0
    %v1079 = vsel %vm426, %v1071, 0
    %1081 = vmatprep.subr.bf16.mxu0 0
    %1082 = vmatpush1.bf16.xpose.msra.mxu0 0
    %1083 = vmatprep.subr.bf16.mxu0 0
    %1084 = vmatpush1.bf16.xpose.msra.mxu0 0
    %1085 = vmatprep.subr.bf16.mxu0 0
    %1086 = vmatpush1.bf16.xpose.msra.mxu0 0
    %1087 = vmatprep.subr.bf16.mxu0 0
    %1088 = vmatpush1.bf16.xpose.msra.mxu0 0
    %1089 = vmatprep.subr.bf16.mxu0 0
    %1090 = vmatpush1.bf16.xpose.msra.mxu0 0
    %1091 = vmatprep.subr.bf16.mxu0 0
    %1092 = vmatpush1.bf16.xpose.msra.mxu0 0
    %1093 = vmatprep.subr.bf16.mxu0 0
    %1094 = vmatpush1.bf16.xpose.msra.mxu0 %v1079
    %1095 = vmatprep.subr.bf16.mxu0 0
    %1096 = vmatpush1.bf16.xpose.msra.mxu0 %v1076
    %1097 = vmatprep.subr.bf16.mxu0 0
    %1098 = vmatpush2.bf16.xpose.msra.mxu0 0
    %1099 = vmatprep.subr.bf16.mxu0 0
    %1100 = vmatpush2.bf16.xpose.msra.mxu0 0
    %1101 = vmatprep.subr.bf16.mxu0 0
    %1102 = vmatpush2.bf16.xpose.msra.mxu0 0
    %1103 = vmatprep.subr.bf16.mxu0 0
    %1104 = vmatpush2.bf16.xpose.msra.mxu0 0
    %1105 = vmatprep.subr.bf16.mxu0 0
    %1106 = vmatpush2.bf16.xpose.msra.mxu0 0
    %1107 = vmatprep.subr.bf16.mxu0 0
    %1108 = vmatpush2.bf16.xpose.msra.mxu0 0
    %1109 = vmatprep.subr.bf16.mxu0 0
    %1110 = vmatpush2.bf16.xpose.msra.mxu0 0
    %1111 = vmatprep.subr.bf16.mxu0 0
    %1112 = vmatpush2.bf16.xpose.msra.mxu0 0
    %1113 = vmatprep.mubr.bf16.mxu0 0
    %1114 = vmatmul.mubr.bf16.gmra.mxu0 %v1073
    %v1115 = vpop.f32.mrf.mxu0
    %v1116 = vadd.f32 0.0, %v1115
    %v1117 = vpop.f32.mrf.mxu0
    %v1118 = vpop.f32.mrf.mxu0
    %v1119 = vpop.f32.mrf.mxu0
    %1120 = vdwg.mxu0
    %1122 = vrot.lane.b32.xlu0 %v1116, 1
    %v1123 = vpop.permute.xlu0 %1122
    %1125 = vrot.lane.b32.xlu0 %v1116, 2
    %v1126 = vpop.permute.xlu0 %1125
    %1128 = vrot.lane.b32.xlu0 %v1116, 3
    %v1129 = vpop.permute.xlu0 %1128
    %1131 = vrot.lane.b32.xlu0 %v1116, 4
    %v1132 = vpop.permute.xlu0 %1131
    %1134 = vrot.lane.b32.xlu0 %v1116, 5
    %v1135 = vpop.permute.xlu0 %1134
    %1137 = vrot.lane.b32.xlu0 %v1116, 6
    %v1138 = vpop.permute.xlu0 %1137
    %1140 = vrot.lane.b32.xlu0 %v1116, 7
    %v1141 = vpop.permute.xlu0 %1140
    %v1143 = vsel %vm498, %v1116, %v1123
    %v1144 = vsel %vm500, %v1143, %v1126
    %v1145 = vsel %vm502, %v1144, %v1129
    %v1146 = vsel %vm504, %v1145, %v1132
    %v1147 = vsel %vm506, %v1146, %v1135
    %v1148 = vsel %vm508, %v1147, %v1138
    %v1149 = vsel %vm510, %v1148, %v1141
    %1151 = vrot.lane.b32.xlu0 %v1149, 113
    %v1152 = vpop.permute.xlu0 %1151
    %v1154 = vadd.f32 %v1116, %v1152
    %v1155 = vsel %vm426, %v1154, -inf
    %1156 = vmax.xlane.f32.xlu0 %v1155
    %v1157 = vpop.xlane.xlu0 %1156
    %v1158 = vsub.f32 %v1154, %v1157
    %v1159 = vmul.f32 %v1158, 1.442695
    %v1160 = vpow.pop %v1159
    %v1161 = vsel %vm426, %v1160, 0.0
    %1162 = vadd.xlane.f32.xlu0 %v1161
    %v1163 = vpop.xlane.xlu0 %1162
    %v1164 = vrcp.pop %v1163
    %v1165 = vmul.f32 %v1160, %v1164
    %v1166 = vpack.c.bf16 %v1165, %v1165
    %1167 = vrot.lane.b32.xlu0 %v423, 96
    %v1168 = vpop.permute.xlu0 %1167
    %v1170 = vsel %vm426, %v1166, 0
    %v1173 = vsel %vm504, %v1168, 0
    %1175 = vmatprep.subr.bf16.mxu0 0
    %1176 = vmatpush1.bf16.msra.mxu0 0
    %1177 = vmatprep.subr.bf16.mxu0 0
    %1178 = vmatpush1.bf16.msra.mxu0 0
    %1179 = vmatprep.subr.bf16.mxu0 0
    %1180 = vmatpush1.bf16.msra.mxu0 0
    %1181 = vmatprep.subr.bf16.mxu0 0
    %1182 = vmatpush1.bf16.msra.mxu0 0
    %1183 = vmatprep.subr.bf16.mxu0 0
    %1184 = vmatpush1.bf16.msra.mxu0 0
    %1185 = vmatprep.subr.bf16.mxu0 0
    %1186 = vmatpush1.bf16.msra.mxu0 0
    %1187 = vmatprep.subr.bf16.mxu0 0
    %1188 = vmatpush1.bf16.msra.mxu0 0
    %1189 = vmatprep.subr.bf16.mxu0 0
    %1190 = vmatpush1.bf16.msra.mxu0 %v1173
    %1191 = vmatprep.subr.bf16.mxu0 0
    %1192 = vmatpush2.bf16.msra.mxu0 0
    %1193 = vmatprep.subr.bf16.mxu0 0
    %1194 = vmatpush2.bf16.msra.mxu0 0
    %1195 = vmatprep.subr.bf16.mxu0 0
    %1196 = vmatpush2.bf16.msra.mxu0 0
    %1197 = vmatprep.subr.bf16.mxu0 0
    %1198 = vmatpush2.bf16.msra.mxu0 0
    %1199 = vmatprep.subr.bf16.mxu0 0
    %1200 = vmatpush2.bf16.msra.mxu0 0
    %1201 = vmatprep.subr.bf16.mxu0 0
    %1202 = vmatpush2.bf16.msra.mxu0 0
    %1203 = vmatprep.subr.bf16.mxu0 0
    %1204 = vmatpush2.bf16.msra.mxu0 0
    %1205 = vmatprep.subr.bf16.mxu0 0
    %1206 = vmatpush2.bf16.msra.mxu0 0
    %1207 = vmatprep.mubr.bf16.mxu0 0
    %1208 = vmatmul.mubr.bf16.gmra.mxu0 %v1170
    %v1209 = vpop.f32.mrf.mxu0
    %v1210 = vadd.f32 0.0, %v1209
    %v1211 = vpop.f32.mrf.mxu0
    %v1212 = vpop.f32.mrf.mxu0
    %v1213 = vpop.f32.mrf.mxu0
    %1214 = vdwg.mxu0
    %1215 = vrot.lane.b32.xlu0 %v420, 40
    %v1216 = vpop.permute.xlu0 %1215
    %1217 = vrot.lane.b32.xlu0 %v421, 40
    %v1218 = vpop.permute.xlu0 %1217
    %v1221 = vpack.c.bf16 %v1216, %v326
    %v1222 = vpack.c.bf16 %v1218, %v1218
    %1223 = vrot.lane.b32.xlu0 %v422, 88
    %v1224 = vpop.permute.xlu0 %1223
    %1227 = vrot.lane.b32.xlu0 %v1221, 88
    %v1228 = vpop.permute.xlu0 %1227
    %1229 = vrot.lane.b32.xlu0 %v1222, 88
    %v1230 = vpop.permute.xlu0 %1229
    %v1232 = vsel %vm426, %v1224, 0
    %v1235 = vsel %vm426, %v1228, 0
    %v1238 = vsel %vm426, %v1230, 0
    %1240 = vmatprep.subr.bf16.mxu0 0
    %1241 = vmatpush1.bf16.xpose.msra.mxu0 0
    %1242 = vmatprep.subr.bf16.mxu0 0
    %1243 = vmatpush1.bf16.xpose.msra.mxu0 0
    %1244 = vmatprep.subr.bf16.mxu0 0
    %1245 = vmatpush1.bf16.xpose.msra.mxu0 0
    %1246 = vmatprep.subr.bf16.mxu0 0
    %1247 = vmatpush1.bf16.xpose.msra.mxu0 0
    %1248 = vmatprep.subr.bf16.mxu0 0
    %1249 = vmatpush1.bf16.xpose.msra.mxu0 0
    %1250 = vmatprep.subr.bf16.mxu0 0
    %1251 = vmatpush1.bf16.xpose.msra.mxu0 0
    %1252 = vmatprep.subr.bf16.mxu0 0
    %1253 = vmatpush1.bf16.xpose.msra.mxu0 %v1238
    %1254 = vmatprep.subr.bf16.mxu0 0
    %1255 = vmatpush1.bf16.xpose.msra.mxu0 %v1235
    %1256 = vmatprep.subr.bf16.mxu0 0
    %1257 = vmatpush2.bf16.xpose.msra.mxu0 0
    %1258 = vmatprep.subr.bf16.mxu0 0
    %1259 = vmatpush2.bf16.xpose.msra.mxu0 0
    %1260 = vmatprep.subr.bf16.mxu0 0
    %1261 = vmatpush2.bf16.xpose.msra.mxu0 0
    %1262 = vmatprep.subr.bf16.mxu0 0
    %1263 = vmatpush2.bf16.xpose.msra.mxu0 0
    %1264 = vmatprep.subr.bf16.mxu0 0
    %1265 = vmatpush2.bf16.xpose.msra.mxu0 0
    %1266 = vmatprep.subr.bf16.mxu0 0
    %1267 = vmatpush2.bf16.xpose.msra.mxu0 0
    %1268 = vmatprep.subr.bf16.mxu0 0
    %1269 = vmatpush2.bf16.xpose.msra.mxu0 0
    %1270 = vmatprep.subr.bf16.mxu0 0
    %1271 = vmatpush2.bf16.xpose.msra.mxu0 0
    %1272 = vmatprep.mubr.bf16.mxu0 0
    %1273 = vmatmul.mubr.bf16.gmra.mxu0 %v1232
    %v1274 = vpop.f32.mrf.mxu0
    %v1275 = vadd.f32 0.0, %v1274
    %v1276 = vpop.f32.mrf.mxu0
    %v1277 = vpop.f32.mrf.mxu0
    %v1278 = vpop.f32.mrf.mxu0
    %1279 = vdwg.mxu0
    %1281 = vrot.lane.b32.xlu0 %v1275, 1
    %v1282 = vpop.permute.xlu0 %1281
    %1284 = vrot.lane.b32.xlu0 %v1275, 2
    %v1285 = vpop.permute.xlu0 %1284
    %1287 = vrot.lane.b32.xlu0 %v1275, 3
    %v1288 = vpop.permute.xlu0 %1287
    %1290 = vrot.lane.b32.xlu0 %v1275, 4
    %v1291 = vpop.permute.xlu0 %1290
    %1293 = vrot.lane.b32.xlu0 %v1275, 5
    %v1294 = vpop.permute.xlu0 %1293
    %1296 = vrot.lane.b32.xlu0 %v1275, 6
    %v1297 = vpop.permute.xlu0 %1296
    %1299 = vrot.lane.b32.xlu0 %v1275, 7
    %v1300 = vpop.permute.xlu0 %1299
    %v1302 = vsel %vm498, %v1275, %v1282
    %v1303 = vsel %vm500, %v1302, %v1285
    %v1304 = vsel %vm502, %v1303, %v1288
    %v1305 = vsel %vm504, %v1304, %v1291
    %v1306 = vsel %vm506, %v1305, %v1294
    %v1307 = vsel %vm508, %v1306, %v1297
    %v1308 = vsel %vm510, %v1307, %v1300
    %1310 = vrot.lane.b32.xlu0 %v1308, 113
    %v1311 = vpop.permute.xlu0 %1310
    %v1313 = vadd.f32 %v1275, %v1311
    %v1314 = vsel %vm426, %v1313, -inf
    %1315 = vmax.xlane.f32.xlu0 %v1314
    %v1316 = vpop.xlane.xlu0 %1315
    %v1317 = vsub.f32 %v1313, %v1316
    %v1318 = vmul.f32 %v1317, 1.442695
    %v1319 = vpow.pop %v1318
    %v1320 = vsel %vm426, %v1319, 0.0
    %1321 = vadd.xlane.f32.xlu0 %v1320
    %v1322 = vpop.xlane.xlu0 %1321
    %v1323 = vrcp.pop %v1322
    %v1324 = vmul.f32 %v1319, %v1323
    %v1325 = vpack.c.bf16 %v1324, %v1324
    %1326 = vrot.lane.b32.xlu0 %v423, 88
    %v1327 = vpop.permute.xlu0 %1326
    %v1329 = vsel %vm426, %v1325, 0
    %v1332 = vsel %vm504, %v1327, 0
    %1334 = vmatprep.subr.bf16.mxu0 0
    %1335 = vmatpush1.bf16.msra.mxu0 0
    %1336 = vmatprep.subr.bf16.mxu0 0
    %1337 = vmatpush1.bf16.msra.mxu0 0
    %1338 = vmatprep.subr.bf16.mxu0 0
    %1339 = vmatpush1.bf16.msra.mxu0 0
    %1340 = vmatprep.subr.bf16.mxu0 0
    %1341 = vmatpush1.bf16.msra.mxu0 0
    %1342 = vmatprep.subr.bf16.mxu0 0
    %1343 = vmatpush1.bf16.msra.mxu0 0
    %1344 = vmatprep.subr.bf16.mxu0 0
    %1345 = vmatpush1.bf16.msra.mxu0 0
    %1346 = vmatprep.subr.bf16.mxu0 0
    %1347 = vmatpush1.bf16.msra.mxu0 0
    %1348 = vmatprep.subr.bf16.mxu0 0
    %1349 = vmatpush1.bf16.msra.mxu0 %v1332
    %1350 = vmatprep.subr.bf16.mxu0 0
    %1351 = vmatpush2.bf16.msra.mxu0 0
    %1352 = vmatprep.subr.bf16.mxu0 0
    %1353 = vmatpush2.bf16.msra.mxu0 0
    %1354 = vmatprep.subr.bf16.mxu0 0
    %1355 = vmatpush2.bf16.msra.mxu0 0
    %1356 = vmatprep.subr.bf16.mxu0 0
    %1357 = vmatpush2.bf16.msra.mxu0 0
    %1358 = vmatprep.subr.bf16.mxu0 0
    %1359 = vmatpush2.bf16.msra.mxu0 0
    %1360 = vmatprep.subr.bf16.mxu0 0
    %1361 = vmatpush2.bf16.msra.mxu0 0
    %1362 = vmatprep.subr.bf16.mxu0 0
    %1363 = vmatpush2.bf16.msra.mxu0 0
    %1364 = vmatprep.subr.bf16.mxu0 0
    %1365 = vmatpush2.bf16.msra.mxu0 0
    %1366 = vmatprep.mubr.bf16.mxu0 0
    %1367 = vmatmul.mubr.bf16.gmra.mxu0 %v1329
    %v1368 = vpop.f32.mrf.mxu0
    %v1369 = vadd.f32 0.0, %v1368
    %v1370 = vpop.f32.mrf.mxu0
    %v1371 = vpop.f32.mrf.mxu0
    %v1372 = vpop.f32.mrf.mxu0
    %1373 = vdwg.mxu0
    %1374 = vrot.lane.b32.xlu0 %v420, 48
    %v1375 = vpop.permute.xlu0 %1374
    %1376 = vrot.lane.b32.xlu0 %v421, 48
    %v1377 = vpop.permute.xlu0 %1376
    %v1380 = vpack.c.bf16 %v1375, %v326
    %v1381 = vpack.c.bf16 %v1377, %v1377
    %1382 = vrot.lane.b32.xlu0 %v422, 80
    %v1383 = vpop.permute.xlu0 %1382
    %1386 = vrot.lane.b32.xlu0 %v1380, 80
    %v1387 = vpop.permute.xlu0 %1386
    %1388 = vrot.lane.b32.xlu0 %v1381, 80
    %v1389 = vpop.permute.xlu0 %1388
    %v1391 = vsel %vm426, %v1383, 0
    %v1394 = vsel %vm426, %v1387, 0
    %v1397 = vsel %vm426, %v1389, 0
    %1399 = vmatprep.subr.bf16.mxu0 0
    %1400 = vmatpush1.bf16.xpose.msra.mxu0 0
    %1401 = vmatprep.subr.bf16.mxu0 0
    %1402 = vmatpush1.bf16.xpose.msra.mxu0 0
    %1403 = vmatprep.subr.bf16.mxu0 0
    %1404 = vmatpush1.bf16.xpose.msra.mxu0 0
    %1405 = vmatprep.subr.bf16.mxu0 0
    %1406 = vmatpush1.bf16.xpose.msra.mxu0 0
    %1407 = vmatprep.subr.bf16.mxu0 0
    %1408 = vmatpush1.bf16.xpose.msra.mxu0 0
    %1409 = vmatprep.subr.bf16.mxu0 0
    %1410 = vmatpush1.bf16.xpose.msra.mxu0 0
    %1411 = vmatprep.subr.bf16.mxu0 0
    %1412 = vmatpush1.bf16.xpose.msra.mxu0 %v1397
    %1413 = vmatprep.subr.bf16.mxu0 0
    %1414 = vmatpush1.bf16.xpose.msra.mxu0 %v1394
    %1415 = vmatprep.subr.bf16.mxu0 0
    %1416 = vmatpush2.bf16.xpose.msra.mxu0 0
    %1417 = vmatprep.subr.bf16.mxu0 0
    %1418 = vmatpush2.bf16.xpose.msra.mxu0 0
    %1419 = vmatprep.subr.bf16.mxu0 0
    %1420 = vmatpush2.bf16.xpose.msra.mxu0 0
    %1421 = vmatprep.subr.bf16.mxu0 0
    %1422 = vmatpush2.bf16.xpose.msra.mxu0 0
    %1423 = vmatprep.subr.bf16.mxu0 0
    %1424 = vmatpush2.bf16.xpose.msra.mxu0 0
    %1425 = vmatprep.subr.bf16.mxu0 0
    %1426 = vmatpush2.bf16.xpose.msra.mxu0 0
    %1427 = vmatprep.subr.bf16.mxu0 0
    %1428 = vmatpush2.bf16.xpose.msra.mxu0 0
    %1429 = vmatprep.subr.bf16.mxu0 0
    %1430 = vmatpush2.bf16.xpose.msra.mxu0 0
    %1431 = vmatprep.mubr.bf16.mxu0 0
    %1432 = vmatmul.mubr.bf16.gmra.mxu0 %v1391
    %v1433 = vpop.f32.mrf.mxu0
    %v1434 = vadd.f32 0.0, %v1433
    %v1435 = vpop.f32.mrf.mxu0
    %v1436 = vpop.f32.mrf.mxu0
    %v1437 = vpop.f32.mrf.mxu0
    %1438 = vdwg.mxu0
    %1440 = vrot.lane.b32.xlu0 %v1434, 1
    %v1441 = vpop.permute.xlu0 %1440
    %1443 = vrot.lane.b32.xlu0 %v1434, 2
    %v1444 = vpop.permute.xlu0 %1443
    %1446 = vrot.lane.b32.xlu0 %v1434, 3
    %v1447 = vpop.permute.xlu0 %1446
    %1449 = vrot.lane.b32.xlu0 %v1434, 4
    %v1450 = vpop.permute.xlu0 %1449
    %1452 = vrot.lane.b32.xlu0 %v1434, 5
    %v1453 = vpop.permute.xlu0 %1452
    %1455 = vrot.lane.b32.xlu0 %v1434, 6
    %v1456 = vpop.permute.xlu0 %1455
    %1458 = vrot.lane.b32.xlu0 %v1434, 7
    %v1459 = vpop.permute.xlu0 %1458
    %v1461 = vsel %vm498, %v1434, %v1441
    %v1462 = vsel %vm500, %v1461, %v1444
    %v1463 = vsel %vm502, %v1462, %v1447
    %v1464 = vsel %vm504, %v1463, %v1450
    %v1465 = vsel %vm506, %v1464, %v1453
    %v1466 = vsel %vm508, %v1465, %v1456
    %v1467 = vsel %vm510, %v1466, %v1459
    %1469 = vrot.lane.b32.xlu0 %v1467, 113
    %v1470 = vpop.permute.xlu0 %1469
    %v1472 = vadd.f32 %v1434, %v1470
    %v1473 = vsel %vm426, %v1472, -inf
    %1474 = vmax.xlane.f32.xlu0 %v1473
    %v1475 = vpop.xlane.xlu0 %1474
    %v1476 = vsub.f32 %v1472, %v1475
    %v1477 = vmul.f32 %v1476, 1.442695
    %v1478 = vpow.pop %v1477
    %v1479 = vsel %vm426, %v1478, 0.0
    %1480 = vadd.xlane.f32.xlu0 %v1479
    %v1481 = vpop.xlane.xlu0 %1480
    %v1482 = vrcp.pop %v1481
    %v1483 = vmul.f32 %v1478, %v1482
    %v1484 = vpack.c.bf16 %v1483, %v1483
    %1485 = vrot.lane.b32.xlu0 %v423, 80
    %v1486 = vpop.permute.xlu0 %1485
    %v1488 = vsel %vm426, %v1484, 0
    %v1491 = vsel %vm504, %v1486, 0
    %1493 = vmatprep.subr.bf16.mxu0 0
    %1494 = vmatpush1.bf16.msra.mxu0 0
    %1495 = vmatprep.subr.bf16.mxu0 0
    %1496 = vmatpush1.bf16.msra.mxu0 0
    %1497 = vmatprep.subr.bf16.mxu0 0
    %1498 = vmatpush1.bf16.msra.mxu0 0
    %1499 = vmatprep.subr.bf16.mxu0 0
    %1500 = vmatpush1.bf16.msra.mxu0 0
    %1501 = vmatprep.subr.bf16.mxu0 0
    %1502 = vmatpush1.bf16.msra.mxu0 0
    %1503 = vmatprep.subr.bf16.mxu0 0
    %1504 = vmatpush1.bf16.msra.mxu0 0
    %1505 = vmatprep.subr.bf16.mxu0 0
    %1506 = vmatpush1.bf16.msra.mxu0 0
    %1507 = vmatprep.subr.bf16.mxu0 0
    %1508 = vmatpush1.bf16.msra.mxu0 %v1491
    %1509 = vmatprep.subr.bf16.mxu0 0
    %1510 = vmatpush2.bf16.msra.mxu0 0
    %1511 = vmatprep.subr.bf16.mxu0 0
    %1512 = vmatpush2.bf16.msra.mxu0 0
    %1513 = vmatprep.subr.bf16.mxu0 0
    %1514 = vmatpush2.bf16.msra.mxu0 0
    %1515 = vmatprep.subr.bf16.mxu0 0
    %1516 = vmatpush2.bf16.msra.mxu0 0
    %1517 = vmatprep.subr.bf16.mxu0 0
    %1518 = vmatpush2.bf16.msra.mxu0 0
    %1519 = vmatprep.subr.bf16.mxu0 0
    %1520 = vmatpush2.bf16.msra.mxu0 0
    %1521 = vmatprep.subr.bf16.mxu0 0
    %1522 = vmatpush2.bf16.msra.mxu0 0
    %1523 = vmatprep.subr.bf16.mxu0 0
    %1524 = vmatpush2.bf16.msra.mxu0 0
    %1525 = vmatprep.mubr.bf16.mxu0 0
    %1526 = vmatmul.mubr.bf16.gmra.mxu0 %v1488
    %v1527 = vpop.f32.mrf.mxu0
    %v1528 = vadd.f32 0.0, %v1527
    %v1529 = vpop.f32.mrf.mxu0
    %v1530 = vpop.f32.mrf.mxu0
    %v1531 = vpop.f32.mrf.mxu0
    %1532 = vdwg.mxu0
    %1533 = vrot.lane.b32.xlu0 %v420, 56
    %v1534 = vpop.permute.xlu0 %1533
    %1535 = vrot.lane.b32.xlu0 %v421, 56
    %v1536 = vpop.permute.xlu0 %1535
    %v1539 = vpack.c.bf16 %v1534, %v326
    %v1540 = vpack.c.bf16 %v1536, %v1536
    %1541 = vrot.lane.b32.xlu0 %v422, 72
    %v1542 = vpop.permute.xlu0 %1541
    %1545 = vrot.lane.b32.xlu0 %v1539, 72
    %v1546 = vpop.permute.xlu0 %1545
    %1547 = vrot.lane.b32.xlu0 %v1540, 72
    %v1548 = vpop.permute.xlu0 %1547
    %v1550 = vsel %vm426, %v1542, 0
    %v1553 = vsel %vm426, %v1546, 0
    %v1556 = vsel %vm426, %v1548, 0
    %1558 = vmatprep.subr.bf16.mxu0 0
    %1559 = vmatpush1.bf16.xpose.msra.mxu0 0
    %1560 = vmatprep.subr.bf16.mxu0 0
    %1561 = vmatpush1.bf16.xpose.msra.mxu0 0
    %1562 = vmatprep.subr.bf16.mxu0 0
    %1563 = vmatpush1.bf16.xpose.msra.mxu0 0
    %1564 = vmatprep.subr.bf16.mxu0 0
    %1565 = vmatpush1.bf16.xpose.msra.mxu0 0
    %1566 = vmatprep.subr.bf16.mxu0 0
    %1567 = vmatpush1.bf16.xpose.msra.mxu0 0
    %1568 = vmatprep.subr.bf16.mxu0 0
    %1569 = vmatpush1.bf16.xpose.msra.mxu0 0
    %1570 = vmatprep.subr.bf16.mxu0 0
    %1571 = vmatpush1.bf16.xpose.msra.mxu0 %v1556
    %1572 = vmatprep.subr.bf16.mxu0 0
    %1573 = vmatpush1.bf16.xpose.msra.mxu0 %v1553
    %1574 = vmatprep.subr.bf16.mxu0 0
    %1575 = vmatpush2.bf16.xpose.msra.mxu0 0
    %1576 = vmatprep.subr.bf16.mxu0 0
    %1577 = vmatpush2.bf16.xpose.msra.mxu0 0
    %1578 = vmatprep.subr.bf16.mxu0 0
    %1579 = vmatpush2.bf16.xpose.msra.mxu0 0
    %1580 = vmatprep.subr.bf16.mxu0 0
    %1581 = vmatpush2.bf16.xpose.msra.mxu0 0
    %1582 = vmatprep.subr.bf16.mxu0 0
    %1583 = vmatpush2.bf16.xpose.msra.mxu0 0
    %1584 = vmatprep.subr.bf16.mxu0 0
    %1585 = vmatpush2.bf16.xpose.msra.mxu0 0
    %1586 = vmatprep.subr.bf16.mxu0 0
    %1587 = vmatpush2.bf16.xpose.msra.mxu0 0
    %1588 = vmatprep.subr.bf16.mxu0 0
    %1589 = vmatpush2.bf16.xpose.msra.mxu0 0
    %1590 = vmatprep.mubr.bf16.mxu0 0
    %1591 = vmatmul.mubr.bf16.gmra.mxu0 %v1550
    %v1592 = vpop.f32.mrf.mxu0
    %v1593 = vadd.f32 0.0, %v1592
    %v1594 = vpop.f32.mrf.mxu0
    %v1595 = vpop.f32.mrf.mxu0
    %v1596 = vpop.f32.mrf.mxu0
    %1597 = vdwg.mxu0
    %1599 = vrot.lane.b32.xlu0 %v1593, 1
    %v1600 = vpop.permute.xlu0 %1599
    %1602 = vrot.lane.b32.xlu0 %v1593, 2
    %v1603 = vpop.permute.xlu0 %1602
    %1605 = vrot.lane.b32.xlu0 %v1593, 3
    %v1606 = vpop.permute.xlu0 %1605
    %1608 = vrot.lane.b32.xlu0 %v1593, 4
    %v1609 = vpop.permute.xlu0 %1608
    %1611 = vrot.lane.b32.xlu0 %v1593, 5
    %v1612 = vpop.permute.xlu0 %1611
    %1614 = vrot.lane.b32.xlu0 %v1593, 6
    %v1615 = vpop.permute.xlu0 %1614
    %1617 = vrot.lane.b32.xlu0 %v1593, 7
    %v1618 = vpop.permute.xlu0 %1617
    %v1620 = vsel %vm498, %v1593, %v1600
    %v1621 = vsel %vm500, %v1620, %v1603
    %v1622 = vsel %vm502, %v1621, %v1606
    %v1623 = vsel %vm504, %v1622, %v1609
    %v1624 = vsel %vm506, %v1623, %v1612
    %v1625 = vsel %vm508, %v1624, %v1615
    %v1626 = vsel %vm510, %v1625, %v1618
    %1628 = vrot.lane.b32.xlu0 %v1626, 113
    %v1629 = vpop.permute.xlu0 %1628
    %v1631 = vadd.f32 %v1593, %v1629
    %v1632 = vsel %vm426, %v1631, -inf
    %1633 = vmax.xlane.f32.xlu0 %v1632
    %v1634 = vpop.xlane.xlu0 %1633
    %v1635 = vsub.f32 %v1631, %v1634
    %v1636 = vmul.f32 %v1635, 1.442695
    %v1637 = vpow.pop %v1636
    %v1638 = vsel %vm426, %v1637, 0.0
    %1639 = vadd.xlane.f32.xlu0 %v1638
    %v1640 = vpop.xlane.xlu0 %1639
    %v1641 = vrcp.pop %v1640
    %v1642 = vmul.f32 %v1637, %v1641
    %v1643 = vpack.c.bf16 %v1642, %v1642
    %1644 = vrot.lane.b32.xlu0 %v423, 72
    %v1645 = vpop.permute.xlu0 %1644
    %v1647 = vsel %vm426, %v1643, 0
    %v1650 = vsel %vm504, %v1645, 0
    %1652 = vmatprep.subr.bf16.mxu0 0
    %1653 = vmatpush1.bf16.msra.mxu0 0
    %1654 = vmatprep.subr.bf16.mxu0 0
    %1655 = vmatpush1.bf16.msra.mxu0 0
    %1656 = vmatprep.subr.bf16.mxu0 0
    %1657 = vmatpush1.bf16.msra.mxu0 0
    %1658 = vmatprep.subr.bf16.mxu0 0
    %1659 = vmatpush1.bf16.msra.mxu0 0
    %1660 = vmatprep.subr.bf16.mxu0 0
    %1661 = vmatpush1.bf16.msra.mxu0 0
    %1662 = vmatprep.subr.bf16.mxu0 0
    %1663 = vmatpush1.bf16.msra.mxu0 0
    %1664 = vmatprep.subr.bf16.mxu0 0
    %1665 = vmatpush1.bf16.msra.mxu0 0
    %1666 = vmatprep.subr.bf16.mxu0 0
    %1667 = vmatpush1.bf16.msra.mxu0 %v1650
    %1668 = vmatprep.subr.bf16.mxu0 0
    %1669 = vmatpush2.bf16.msra.mxu0 0
    %1670 = vmatprep.subr.bf16.mxu0 0
    %1671 = vmatpush2.bf16.msra.mxu0 0
    %1672 = vmatprep.subr.bf16.mxu0 0
    %1673 = vmatpush2.bf16.msra.mxu0 0
    %1674 = vmatprep.subr.bf16.mxu0 0
    %1675 = vmatpush2.bf16.msra.mxu0 0
    %1676 = vmatprep.subr.bf16.mxu0 0
    %1677 = vmatpush2.bf16.msra.mxu0 0
    %1678 = vmatprep.subr.bf16.mxu0 0
    %1679 = vmatpush2.bf16.msra.mxu0 0
    %1680 = vmatprep.subr.bf16.mxu0 0
    %1681 = vmatpush2.bf16.msra.mxu0 0
    %1682 = vmatprep.subr.bf16.mxu0 0
    %1683 = vmatpush2.bf16.msra.mxu0 0
    %1684 = vmatprep.mubr.bf16.mxu0 0
    %1685 = vmatmul.mubr.bf16.gmra.mxu0 %v1647
    %v1686 = vpop.f32.mrf.mxu0
    %v1687 = vadd.f32 0.0, %v1686
    %v1688 = vpop.f32.mrf.mxu0
    %v1689 = vpop.f32.mrf.mxu0
    %v1690 = vpop.f32.mrf.mxu0
    %1691 = vdwg.mxu0
    %1693 = vrot.lane.b32.xlu0 %v733, 8
    %v1694 = vpop.permute.xlu0 %1693
    %1697 = vrot.lane.b32.xlu0 %v892, 16
    %v1698 = vpop.permute.xlu0 %1697
    %1701 = vrot.lane.b32.xlu0 %v1051, 24
    %v1702 = vpop.permute.xlu0 %1701
    %1705 = vrot.lane.b32.xlu0 %v1210, 32
    %v1706 = vpop.permute.xlu0 %1705
    %1709 = vrot.lane.b32.xlu0 %v1369, 40
    %v1710 = vpop.permute.xlu0 %1709
    %1713 = vrot.lane.b32.xlu0 %v1528, 48
    %v1714 = vpop.permute.xlu0 %1713
    %1717 = vrot.lane.b32.xlu0 %v1687, 56
    %v1718 = vpop.permute.xlu0 %1717
    %v1720 = vsel %vm426, %v570, %v1694
    %vm1721 = vcmask 130048
    %v1722 = vsel %vm1721, %v1720, %v1698
    %vm1723 = vcmask 195584
    %v1724 = vsel %vm1723, %v1722, %v1702
    %vm1725 = vcmask 261120
    %v1726 = vsel %vm1725, %v1724, %v1706
    %vm1727 = vcmask 326656
    %v1728 = vsel %vm1727, %v1726, %v1710
    %vm1729 = vcmask 392192
    %v1730 = vsel %vm1729, %v1728, %v1714
    %vm1731 = vcmask 457728
    %v1732 = vsel %vm1731, %v1730, %v1718
    %v1733 = vpack.c.bf16 %v419, %v419
    %v1734 = vpack.c.bf16 %v415, %v415
    %v1735 = vpack.c.bf16 %v420, %v329
    %v1737 = vsel %vm426, %v1733, 0
    %v1740 = vsel %vm426, %v1735, 0
    %1742 = vmatprep.subr.bf16.mxu0 0
    %1743 = vmatpush1.bf16.xpose.msra.mxu0 0
    %1744 = vmatprep.subr.bf16.mxu0 0
    %1745 = vmatpush1.bf16.xpose.msra.mxu0 0
    %1746 = vmatprep.subr.bf16.mxu0 0
    %1747 = vmatpush1.bf16.xpose.msra.mxu0 0
    %1748 = vmatprep.subr.bf16.mxu0 0
    %1749 = vmatpush1.bf16.xpose.msra.mxu0 0
    %1750 = vmatprep.subr.bf16.mxu0 0
    %1751 = vmatpush1.bf16.xpose.msra.mxu0 0
    %1752 = vmatprep.subr.bf16.mxu0 0
    %1753 = vmatpush1.bf16.xpose.msra.mxu0 0
    %1754 = vmatprep.subr.bf16.mxu0 0
    %1755 = vmatpush1.bf16.xpose.msra.mxu0 %v434
    %1756 = vmatprep.subr.bf16.mxu0 0
    %1757 = vmatpush1.bf16.xpose.msra.mxu0 %v1740
    %1758 = vmatprep.subr.bf16.mxu0 0
    %1759 = vmatpush2.bf16.xpose.msra.mxu0 0
    %1760 = vmatprep.subr.bf16.mxu0 0
    %1761 = vmatpush2.bf16.xpose.msra.mxu0 0
    %1762 = vmatprep.subr.bf16.mxu0 0
    %1763 = vmatpush2.bf16.xpose.msra.mxu0 0
    %1764 = vmatprep.subr.bf16.mxu0 0
    %1765 = vmatpush2.bf16.xpose.msra.mxu0 0
    %1766 = vmatprep.subr.bf16.mxu0 0
    %1767 = vmatpush2.bf16.xpose.msra.mxu0 0
    %1768 = vmatprep.subr.bf16.mxu0 0
    %1769 = vmatpush2.bf16.xpose.msra.mxu0 0
    %1770 = vmatprep.subr.bf16.mxu0 0
    %1771 = vmatpush2.bf16.xpose.msra.mxu0 0
    %1772 = vmatprep.subr.bf16.mxu0 0
    %1773 = vmatpush2.bf16.xpose.msra.mxu0 0
    %1774 = vmatprep.mubr.bf16.mxu0 0
    %1775 = vmatmul.mubr.bf16.gmra.mxu0 %v1737
    %v1776 = vpop.f32.mrf.mxu0
    %v1777 = vadd.f32 0.0, %v1776
    %v1778 = vpop.f32.mrf.mxu0
    %v1779 = vpop.f32.mrf.mxu0
    %v1780 = vpop.f32.mrf.mxu0
    %1781 = vdwg.mxu0
    %1783 = vrot.lane.b32.xlu0 %v1777, 1
    %v1784 = vpop.permute.xlu0 %1783
    %1786 = vrot.lane.b32.xlu0 %v1777, 2
    %v1787 = vpop.permute.xlu0 %1786
    %1789 = vrot.lane.b32.xlu0 %v1777, 3
    %v1790 = vpop.permute.xlu0 %1789
    %1792 = vrot.lane.b32.xlu0 %v1777, 4
    %v1793 = vpop.permute.xlu0 %1792
    %1795 = vrot.lane.b32.xlu0 %v1777, 5
    %v1796 = vpop.permute.xlu0 %1795
    %1798 = vrot.lane.b32.xlu0 %v1777, 6
    %v1799 = vpop.permute.xlu0 %1798
    %1801 = vrot.lane.b32.xlu0 %v1777, 7
    %v1802 = vpop.permute.xlu0 %1801
    %v1804 = vsel %vm498, %v1777, %v1784
    %v1805 = vsel %vm500, %v1804, %v1787
    %v1806 = vsel %vm502, %v1805, %v1790
    %v1807 = vsel %vm504, %v1806, %v1793
    %v1808 = vsel %vm506, %v1807, %v1796
    %v1809 = vsel %vm508, %v1808, %v1799
    %v1810 = vsel %vm510, %v1809, %v1802
    %1812 = vrot.lane.b32.xlu0 %v1810, 113
    %v1813 = vpop.permute.xlu0 %1812
    %v1815 = vadd.f32 %v1777, %v1813
    %v1816 = vsel %vm426, %v1815, -inf
    %1817 = vmax.xlane.f32.xlu0 %v1816
    %v1818 = vpop.xlane.xlu0 %1817
    %v1819 = vsub.f32 %v1815, %v1818
    %v1820 = vmul.f32 %v1819, 1.442695
    %v1821 = vpow.pop %v1820
    %v1822 = vsel %vm426, %v1821, 0.0
    %1823 = vadd.xlane.f32.xlu0 %v1822
    %v1824 = vpop.xlane.xlu0 %1823
    %v1825 = vrcp.pop %v1824
    %v1826 = vmul.f32 %v1821, %v1825
    %v1827 = vpack.c.bf16 %v1826, %v1826
    %v1829 = vsel %vm426, %v1827, 0
    %v1832 = vsel %vm504, %v1734, 0
    %1834 = vmatprep.subr.bf16.mxu0 0
    %1835 = vmatpush1.bf16.msra.mxu0 0
    %1836 = vmatprep.subr.bf16.mxu0 0
    %1837 = vmatpush1.bf16.msra.mxu0 0
    %1838 = vmatprep.subr.bf16.mxu0 0
    %1839 = vmatpush1.bf16.msra.mxu0 0
    %1840 = vmatprep.subr.bf16.mxu0 0
    %1841 = vmatpush1.bf16.msra.mxu0 0
    %1842 = vmatprep.subr.bf16.mxu0 0
    %1843 = vmatpush1.bf16.msra.mxu0 0
    %1844 = vmatprep.subr.bf16.mxu0 0
    %1845 = vmatpush1.bf16.msra.mxu0 0
    %1846 = vmatprep.subr.bf16.mxu0 0
    %1847 = vmatpush1.bf16.msra.mxu0 0
    %1848 = vmatprep.subr.bf16.mxu0 0
    %1849 = vmatpush1.bf16.msra.mxu0 %v1832
    %1850 = vmatprep.subr.bf16.mxu0 0
    %1851 = vmatpush2.bf16.msra.mxu0 0
    %1852 = vmatprep.subr.bf16.mxu0 0
    %1853 = vmatpush2.bf16.msra.mxu0 0
    %1854 = vmatprep.subr.bf16.mxu0 0
    %1855 = vmatpush2.bf16.msra.mxu0 0
    %1856 = vmatprep.subr.bf16.mxu0 0
    %1857 = vmatpush2.bf16.msra.mxu0 0
    %1858 = vmatprep.subr.bf16.mxu0 0
    %1859 = vmatpush2.bf16.msra.mxu0 0
    %1860 = vmatprep.subr.bf16.mxu0 0
    %1861 = vmatpush2.bf16.msra.mxu0 0
    %1862 = vmatprep.subr.bf16.mxu0 0
    %1863 = vmatpush2.bf16.msra.mxu0 0
    %1864 = vmatprep.subr.bf16.mxu0 0
    %1865 = vmatpush2.bf16.msra.mxu0 0
    %1866 = vmatprep.mubr.bf16.mxu0 0
    %1867 = vmatmul.mubr.bf16.gmra.mxu0 %v1829
    %v1868 = vpop.f32.mrf.mxu0
    %v1869 = vadd.f32 0.0, %v1868
    %v1870 = vpop.f32.mrf.mxu0
    %v1871 = vpop.f32.mrf.mxu0
    %v1872 = vpop.f32.mrf.mxu0
    %1873 = vdwg.mxu0
    %v1874 = vpack.c.bf16 %v578, %v329
    %1876 = vrot.lane.b32.xlu0 %v1733, 120
    %v1877 = vpop.permute.xlu0 %1876
    %1879 = vrot.lane.b32.xlu0 %v1874, 120
    %v1880 = vpop.permute.xlu0 %1879
    %v1882 = vsel %vm426, %v1877, 0
    %v1885 = vsel %vm426, %v1880, 0
    %1887 = vmatprep.subr.bf16.mxu0 0
    %1888 = vmatpush1.bf16.xpose.msra.mxu0 0
    %1889 = vmatprep.subr.bf16.mxu0 0
    %1890 = vmatpush1.bf16.xpose.msra.mxu0 0
    %1891 = vmatprep.subr.bf16.mxu0 0
    %1892 = vmatpush1.bf16.xpose.msra.mxu0 0
    %1893 = vmatprep.subr.bf16.mxu0 0
    %1894 = vmatpush1.bf16.xpose.msra.mxu0 0
    %1895 = vmatprep.subr.bf16.mxu0 0
    %1896 = vmatpush1.bf16.xpose.msra.mxu0 0
    %1897 = vmatprep.subr.bf16.mxu0 0
    %1898 = vmatpush1.bf16.xpose.msra.mxu0 0
    %1899 = vmatprep.subr.bf16.mxu0 0
    %1900 = vmatpush1.bf16.xpose.msra.mxu0 %v601
    %1901 = vmatprep.subr.bf16.mxu0 0
    %1902 = vmatpush1.bf16.xpose.msra.mxu0 %v1885
    %1903 = vmatprep.subr.bf16.mxu0 0
    %1904 = vmatpush2.bf16.xpose.msra.mxu0 0
    %1905 = vmatprep.subr.bf16.mxu0 0
    %1906 = vmatpush2.bf16.xpose.msra.mxu0 0
    %1907 = vmatprep.subr.bf16.mxu0 0
    %1908 = vmatpush2.bf16.xpose.msra.mxu0 0
    %1909 = vmatprep.subr.bf16.mxu0 0
    %1910 = vmatpush2.bf16.xpose.msra.mxu0 0
    %1911 = vmatprep.subr.bf16.mxu0 0
    %1912 = vmatpush2.bf16.xpose.msra.mxu0 0
    %1913 = vmatprep.subr.bf16.mxu0 0
    %1914 = vmatpush2.bf16.xpose.msra.mxu0 0
    %1915 = vmatprep.subr.bf16.mxu0 0
    %1916 = vmatpush2.bf16.xpose.msra.mxu0 0
    %1917 = vmatprep.subr.bf16.mxu0 0
    %1918 = vmatpush2.bf16.xpose.msra.mxu0 0
    %1919 = vmatprep.mubr.bf16.mxu0 0
    %1920 = vmatmul.mubr.bf16.gmra.mxu0 %v1882
    %v1921 = vpop.f32.mrf.mxu0
    %v1922 = vadd.f32 0.0, %v1921
    %v1923 = vpop.f32.mrf.mxu0
    %v1924 = vpop.f32.mrf.mxu0
    %v1925 = vpop.f32.mrf.mxu0
    %1926 = vdwg.mxu0
    %1928 = vrot.lane.b32.xlu0 %v1922, 1
    %v1929 = vpop.permute.xlu0 %1928
    %1931 = vrot.lane.b32.xlu0 %v1922, 2
    %v1932 = vpop.permute.xlu0 %1931
    %1934 = vrot.lane.b32.xlu0 %v1922, 3
    %v1935 = vpop.permute.xlu0 %1934
    %1937 = vrot.lane.b32.xlu0 %v1922, 4
    %v1938 = vpop.permute.xlu0 %1937
    %1940 = vrot.lane.b32.xlu0 %v1922, 5
    %v1941 = vpop.permute.xlu0 %1940
    %1943 = vrot.lane.b32.xlu0 %v1922, 6
    %v1944 = vpop.permute.xlu0 %1943
    %1946 = vrot.lane.b32.xlu0 %v1922, 7
    %v1947 = vpop.permute.xlu0 %1946
    %v1949 = vsel %vm498, %v1922, %v1929
    %v1950 = vsel %vm500, %v1949, %v1932
    %v1951 = vsel %vm502, %v1950, %v1935
    %v1952 = vsel %vm504, %v1951, %v1938
    %v1953 = vsel %vm506, %v1952, %v1941
    %v1954 = vsel %vm508, %v1953, %v1944
    %v1955 = vsel %vm510, %v1954, %v1947
    %1957 = vrot.lane.b32.xlu0 %v1955, 113
    %v1958 = vpop.permute.xlu0 %1957
    %v1960 = vadd.f32 %v1922, %v1958
    %v1961 = vsel %vm426, %v1960, -inf
    %1962 = vmax.xlane.f32.xlu0 %v1961
    %v1963 = vpop.xlane.xlu0 %1962
    %v1964 = vsub.f32 %v1960, %v1963
    %v1965 = vmul.f32 %v1964, 1.442695
    %v1966 = vpow.pop %v1965
    %v1967 = vsel %vm426, %v1966, 0.0
    %1968 = vadd.xlane.f32.xlu0 %v1967
    %v1969 = vpop.xlane.xlu0 %1968
    %v1970 = vrcp.pop %v1969
    %v1971 = vmul.f32 %v1966, %v1970
    %v1972 = vpack.c.bf16 %v1971, %v1971
    %1974 = vrot.lane.b32.xlu0 %v1734, 120
    %v1975 = vpop.permute.xlu0 %1974
    %v1977 = vsel %vm426, %v1972, 0
    %v1980 = vsel %vm504, %v1975, 0
    %1982 = vmatprep.subr.bf16.mxu0 0
    %1983 = vmatpush1.bf16.msra.mxu0 0
    %1984 = vmatprep.subr.bf16.mxu0 0
    %1985 = vmatpush1.bf16.msra.mxu0 0
    %1986 = vmatprep.subr.bf16.mxu0 0
    %1987 = vmatpush1.bf16.msra.mxu0 0
    %1988 = vmatprep.subr.bf16.mxu0 0
    %1989 = vmatpush1.bf16.msra.mxu0 0
    %1990 = vmatprep.subr.bf16.mxu0 0
    %1991 = vmatpush1.bf16.msra.mxu0 0
    %1992 = vmatprep.subr.bf16.mxu0 0
    %1993 = vmatpush1.bf16.msra.mxu0 0
    %1994 = vmatprep.subr.bf16.mxu0 0
    %1995 = vmatpush1.bf16.msra.mxu0 0
    %1996 = vmatprep.subr.bf16.mxu0 0
    %1997 = vmatpush1.bf16.msra.mxu0 %v1980
    %1998 = vmatprep.subr.bf16.mxu0 0
    %1999 = vmatpush2.bf16.msra.mxu0 0
    %2000 = vmatprep.subr.bf16.mxu0 0
    %2001 = vmatpush2.bf16.msra.mxu0 0
    %2002 = vmatprep.subr.bf16.mxu0 0
    %2003 = vmatpush2.bf16.msra.mxu0 0
    %2004 = vmatprep.subr.bf16.mxu0 0
    %2005 = vmatpush2.bf16.msra.mxu0 0
    %2006 = vmatprep.subr.bf16.mxu0 0
    %2007 = vmatpush2.bf16.msra.mxu0 0
    %2008 = vmatprep.subr.bf16.mxu0 0
    %2009 = vmatpush2.bf16.msra.mxu0 0
    %2010 = vmatprep.subr.bf16.mxu0 0
    %2011 = vmatpush2.bf16.msra.mxu0 0
    %2012 = vmatprep.subr.bf16.mxu0 0
    %2013 = vmatpush2.bf16.msra.mxu0 0
    %2014 = vmatprep.mubr.bf16.mxu0 0
    %2015 = vmatmul.mubr.bf16.gmra.mxu0 %v1977
    %v2016 = vpop.f32.mrf.mxu0
    %v2017 = vadd.f32 0.0, %v2016
    %v2018 = vpop.f32.mrf.mxu0
    %v2019 = vpop.f32.mrf.mxu0
    %v2020 = vpop.f32.mrf.mxu0
    %2021 = vdwg.mxu0
    %v2022 = vpack.c.bf16 %v739, %v329
    %2023 = vrot.lane.b32.xlu0 %v1733, 112
    %v2024 = vpop.permute.xlu0 %2023
    %2026 = vrot.lane.b32.xlu0 %v2022, 112
    %v2027 = vpop.permute.xlu0 %2026
    %v2029 = vsel %vm426, %v2024, 0
    %v2032 = vsel %vm426, %v2027, 0
    %2034 = vmatprep.subr.bf16.mxu0 0
    %2035 = vmatpush1.bf16.xpose.msra.mxu0 0
    %2036 = vmatprep.subr.bf16.mxu0 0
    %2037 = vmatpush1.bf16.xpose.msra.mxu0 0
    %2038 = vmatprep.subr.bf16.mxu0 0
    %2039 = vmatpush1.bf16.xpose.msra.mxu0 0
    %2040 = vmatprep.subr.bf16.mxu0 0
    %2041 = vmatpush1.bf16.xpose.msra.mxu0 0
    %2042 = vmatprep.subr.bf16.mxu0 0
    %2043 = vmatpush1.bf16.xpose.msra.mxu0 0
    %2044 = vmatprep.subr.bf16.mxu0 0
    %2045 = vmatpush1.bf16.xpose.msra.mxu0 0
    %2046 = vmatprep.subr.bf16.mxu0 0
    %2047 = vmatpush1.bf16.xpose.msra.mxu0 %v761
    %2048 = vmatprep.subr.bf16.mxu0 0
    %2049 = vmatpush1.bf16.xpose.msra.mxu0 %v2032
    %2050 = vmatprep.subr.bf16.mxu0 0
    %2051 = vmatpush2.bf16.xpose.msra.mxu0 0
    %2052 = vmatprep.subr.bf16.mxu0 0
    %2053 = vmatpush2.bf16.xpose.msra.mxu0 0
    %2054 = vmatprep.subr.bf16.mxu0 0
    %2055 = vmatpush2.bf16.xpose.msra.mxu0 0
    %2056 = vmatprep.subr.bf16.mxu0 0
    %2057 = vmatpush2.bf16.xpose.msra.mxu0 0
    %2058 = vmatprep.subr.bf16.mxu0 0
    %2059 = vmatpush2.bf16.xpose.msra.mxu0 0
    %2060 = vmatprep.subr.bf16.mxu0 0
    %2061 = vmatpush2.bf16.xpose.msra.mxu0 0
    %2062 = vmatprep.subr.bf16.mxu0 0
    %2063 = vmatpush2.bf16.xpose.msra.mxu0 0
    %2064 = vmatprep.subr.bf16.mxu0 0
    %2065 = vmatpush2.bf16.xpose.msra.mxu0 0
    %2066 = vmatprep.mubr.bf16.mxu0 0
    %2067 = vmatmul.mubr.bf16.gmra.mxu0 %v2029
    %v2068 = vpop.f32.mrf.mxu0
    %v2069 = vadd.f32 0.0, %v2068
    %v2070 = vpop.f32.mrf.mxu0
    %v2071 = vpop.f32.mrf.mxu0
    %v2072 = vpop.f32.mrf.mxu0
    %2073 = vdwg.mxu0
    %2075 = vrot.lane.b32.xlu0 %v2069, 1
    %v2076 = vpop.permute.xlu0 %2075
    %2078 = vrot.lane.b32.xlu0 %v2069, 2
    %v2079 = vpop.permute.xlu0 %2078
    %2081 = vrot.lane.b32.xlu0 %v2069, 3
    %v2082 = vpop.permute.xlu0 %2081
    %2084 = vrot.lane.b32.xlu0 %v2069, 4
    %v2085 = vpop.permute.xlu0 %2084
    %2087 = vrot.lane.b32.xlu0 %v2069, 5
    %v2088 = vpop.permute.xlu0 %2087
    %2090 = vrot.lane.b32.xlu0 %v2069, 6
    %v2091 = vpop.permute.xlu0 %2090
    %2093 = vrot.lane.b32.xlu0 %v2069, 7
    %v2094 = vpop.permute.xlu0 %2093
    %v2096 = vsel %vm498, %v2069, %v2076
    %v2097 = vsel %vm500, %v2096, %v2079
    %v2098 = vsel %vm502, %v2097, %v2082
    %v2099 = vsel %vm504, %v2098, %v2085
    %v2100 = vsel %vm506, %v2099, %v2088
    %v2101 = vsel %vm508, %v2100, %v2091
    %v2102 = vsel %vm510, %v2101, %v2094
    %2104 = vrot.lane.b32.xlu0 %v2102, 113
    %v2105 = vpop.permute.xlu0 %2104
    %v2107 = vadd.f32 %v2069, %v2105
    %v2108 = vsel %vm426, %v2107, -inf
    %2109 = vmax.xlane.f32.xlu0 %v2108
    %v2110 = vpop.xlane.xlu0 %2109
    %v2111 = vsub.f32 %v2107, %v2110
    %v2112 = vmul.f32 %v2111, 1.442695
    %v2113 = vpow.pop %v2112
    %v2114 = vsel %vm426, %v2113, 0.0
    %2115 = vadd.xlane.f32.xlu0 %v2114
    %v2116 = vpop.xlane.xlu0 %2115
    %v2117 = vrcp.pop %v2116
    %v2118 = vmul.f32 %v2113, %v2117
    %v2119 = vpack.c.bf16 %v2118, %v2118
    %2120 = vrot.lane.b32.xlu0 %v1734, 112
    %v2121 = vpop.permute.xlu0 %2120
    %v2123 = vsel %vm426, %v2119, 0
    %v2126 = vsel %vm504, %v2121, 0
    %2128 = vmatprep.subr.bf16.mxu0 0
    %2129 = vmatpush1.bf16.msra.mxu0 0
    %2130 = vmatprep.subr.bf16.mxu0 0
    %2131 = vmatpush1.bf16.msra.mxu0 0
    %2132 = vmatprep.subr.bf16.mxu0 0
    %2133 = vmatpush1.bf16.msra.mxu0 0
    %2134 = vmatprep.subr.bf16.mxu0 0
    %2135 = vmatpush1.bf16.msra.mxu0 0
    %2136 = vmatprep.subr.bf16.mxu0 0
    %2137 = vmatpush1.bf16.msra.mxu0 0
    %2138 = vmatprep.subr.bf16.mxu0 0
    %2139 = vmatpush1.bf16.msra.mxu0 0
    %2140 = vmatprep.subr.bf16.mxu0 0
    %2141 = vmatpush1.bf16.msra.mxu0 0
    %2142 = vmatprep.subr.bf16.mxu0 0
    %2143 = vmatpush1.bf16.msra.mxu0 %v2126
    %2144 = vmatprep.subr.bf16.mxu0 0
    %2145 = vmatpush2.bf16.msra.mxu0 0
    %2146 = vmatprep.subr.bf16.mxu0 0
    %2147 = vmatpush2.bf16.msra.mxu0 0
    %2148 = vmatprep.subr.bf16.mxu0 0
    %2149 = vmatpush2.bf16.msra.mxu0 0
    %2150 = vmatprep.subr.bf16.mxu0 0
    %2151 = vmatpush2.bf16.msra.mxu0 0
    %2152 = vmatprep.subr.bf16.mxu0 0
    %2153 = vmatpush2.bf16.msra.mxu0 0
    %2154 = vmatprep.subr.bf16.mxu0 0
    %2155 = vmatpush2.bf16.msra.mxu0 0
    %2156 = vmatprep.subr.bf16.mxu0 0
    %2157 = vmatpush2.bf16.msra.mxu0 0
    %2158 = vmatprep.subr.bf16.mxu0 0
    %2159 = vmatpush2.bf16.msra.mxu0 0
    %2160 = vmatprep.mubr.bf16.mxu0 0
    %2161 = vmatmul.mubr.bf16.gmra.mxu0 %v2123
    %v2162 = vpop.f32.mrf.mxu0
    %v2163 = vadd.f32 0.0, %v2162
    %v2164 = vpop.f32.mrf.mxu0
    %v2165 = vpop.f32.mrf.mxu0
    %v2166 = vpop.f32.mrf.mxu0
    %2167 = vdwg.mxu0
    %v2168 = vpack.c.bf16 %v898, %v329
    %2169 = vrot.lane.b32.xlu0 %v1733, 104
    %v2170 = vpop.permute.xlu0 %2169
    %2172 = vrot.lane.b32.xlu0 %v2168, 104
    %v2173 = vpop.permute.xlu0 %2172
    %v2175 = vsel %vm426, %v2170, 0
    %v2178 = vsel %vm426, %v2173, 0
    %2180 = vmatprep.subr.bf16.mxu0 0
    %2181 = vmatpush1.bf16.xpose.msra.mxu0 0
    %2182 = vmatprep.subr.bf16.mxu0 0
    %2183 = vmatpush1.bf16.xpose.msra.mxu0 0
    %2184 = vmatprep.subr.bf16.mxu0 0
    %2185 = vmatpush1.bf16.xpose.msra.mxu0 0
    %2186 = vmatprep.subr.bf16.mxu0 0
    %2187 = vmatpush1.bf16.xpose.msra.mxu0 0
    %2188 = vmatprep.subr.bf16.mxu0 0
    %2189 = vmatpush1.bf16.xpose.msra.mxu0 0
    %2190 = vmatprep.subr.bf16.mxu0 0
    %2191 = vmatpush1.bf16.xpose.msra.mxu0 0
    %2192 = vmatprep.subr.bf16.mxu0 0
    %2193 = vmatpush1.bf16.xpose.msra.mxu0 %v920
    %2194 = vmatprep.subr.bf16.mxu0 0
    %2195 = vmatpush1.bf16.xpose.msra.mxu0 %v2178
    %2196 = vmatprep.subr.bf16.mxu0 0
    %2197 = vmatpush2.bf16.xpose.msra.mxu0 0
    %2198 = vmatprep.subr.bf16.mxu0 0
    %2199 = vmatpush2.bf16.xpose.msra.mxu0 0
    %2200 = vmatprep.subr.bf16.mxu0 0
    %2201 = vmatpush2.bf16.xpose.msra.mxu0 0
    %2202 = vmatprep.subr.bf16.mxu0 0
    %2203 = vmatpush2.bf16.xpose.msra.mxu0 0
    %2204 = vmatprep.subr.bf16.mxu0 0
    %2205 = vmatpush2.bf16.xpose.msra.mxu0 0
    %2206 = vmatprep.subr.bf16.mxu0 0
    %2207 = vmatpush2.bf16.xpose.msra.mxu0 0
    %2208 = vmatprep.subr.bf16.mxu0 0
    %2209 = vmatpush2.bf16.xpose.msra.mxu0 0
    %2210 = vmatprep.subr.bf16.mxu0 0
    %2211 = vmatpush2.bf16.xpose.msra.mxu0 0
    %2212 = vmatprep.mubr.bf16.mxu0 0
    %2213 = vmatmul.mubr.bf16.gmra.mxu0 %v2175
    %v2214 = vpop.f32.mrf.mxu0
    %v2215 = vadd.f32 0.0, %v2214
    %v2216 = vpop.f32.mrf.mxu0
    %v2217 = vpop.f32.mrf.mxu0
    %v2218 = vpop.f32.mrf.mxu0
    %2219 = vdwg.mxu0
    %2221 = vrot.lane.b32.xlu0 %v2215, 1
    %v2222 = vpop.permute.xlu0 %2221
    %2224 = vrot.lane.b32.xlu0 %v2215, 2
    %v2225 = vpop.permute.xlu0 %2224
    %2227 = vrot.lane.b32.xlu0 %v2215, 3
    %v2228 = vpop.permute.xlu0 %2227
    %2230 = vrot.lane.b32.xlu0 %v2215, 4
    %v2231 = vpop.permute.xlu0 %2230
    %2233 = vrot.lane.b32.xlu0 %v2215, 5
    %v2234 = vpop.permute.xlu0 %2233
    %2236 = vrot.lane.b32.xlu0 %v2215, 6
    %v2237 = vpop.permute.xlu0 %2236
    %2239 = vrot.lane.b32.xlu0 %v2215, 7
    %v2240 = vpop.permute.xlu0 %2239
    %v2242 = vsel %vm498, %v2215, %v2222
    %v2243 = vsel %vm500, %v2242, %v2225
    %v2244 = vsel %vm502, %v2243, %v2228
    %v2245 = vsel %vm504, %v2244, %v2231
    %v2246 = vsel %vm506, %v2245, %v2234
    %v2247 = vsel %vm508, %v2246, %v2237
    %v2248 = vsel %vm510, %v2247, %v2240
    %2250 = vrot.lane.b32.xlu0 %v2248, 113
    %v2251 = vpop.permute.xlu0 %2250
    %v2253 = vadd.f32 %v2215, %v2251
    %v2254 = vsel %vm426, %v2253, -inf
    %2255 = vmax.xlane.f32.xlu0 %v2254
    %v2256 = vpop.xlane.xlu0 %2255
    %v2257 = vsub.f32 %v2253, %v2256
    %v2258 = vmul.f32 %v2257, 1.442695
    %v2259 = vpow.pop %v2258
    %v2260 = vsel %vm426, %v2259, 0.0
    %2261 = vadd.xlane.f32.xlu0 %v2260
    %v2262 = vpop.xlane.xlu0 %2261
    %v2263 = vrcp.pop %v2262
    %v2264 = vmul.f32 %v2259, %v2263
    %v2265 = vpack.c.bf16 %v2264, %v2264
    %2266 = vrot.lane.b32.xlu0 %v1734, 104
    %v2267 = vpop.permute.xlu0 %2266
    %v2269 = vsel %vm426, %v2265, 0
    %v2272 = vsel %vm504, %v2267, 0
    %2274 = vmatprep.subr.bf16.mxu0 0
    %2275 = vmatpush1.bf16.msra.mxu0 0
    %2276 = vmatprep.subr.bf16.mxu0 0
    %2277 = vmatpush1.bf16.msra.mxu0 0
    %2278 = vmatprep.subr.bf16.mxu0 0
    %2279 = vmatpush1.bf16.msra.mxu0 0
    %2280 = vmatprep.subr.bf16.mxu0 0
    %2281 = vmatpush1.bf16.msra.mxu0 0
    %2282 = vmatprep.subr.bf16.mxu0 0
    %2283 = vmatpush1.bf16.msra.mxu0 0
    %2284 = vmatprep.subr.bf16.mxu0 0
    %2285 = vmatpush1.bf16.msra.mxu0 0
    %2286 = vmatprep.subr.bf16.mxu0 0
    %2287 = vmatpush1.bf16.msra.mxu0 0
    %2288 = vmatprep.subr.bf16.mxu0 0
    %2289 = vmatpush1.bf16.msra.mxu0 %v2272
    %2290 = vmatprep.subr.bf16.mxu0 0
    %2291 = vmatpush2.bf16.msra.mxu0 0
    %2292 = vmatprep.subr.bf16.mxu0 0
    %2293 = vmatpush2.bf16.msra.mxu0 0
    %2294 = vmatprep.subr.bf16.mxu0 0
    %2295 = vmatpush2.bf16.msra.mxu0 0
    %2296 = vmatprep.subr.bf16.mxu0 0
    %2297 = vmatpush2.bf16.msra.mxu0 0
    %2298 = vmatprep.subr.bf16.mxu0 0
    %2299 = vmatpush2.bf16.msra.mxu0 0
    %2300 = vmatprep.subr.bf16.mxu0 0
    %2301 = vmatpush2.bf16.msra.mxu0 0
    %2302 = vmatprep.subr.bf16.mxu0 0
    %2303 = vmatpush2.bf16.msra.mxu0 0
    %2304 = vmatprep.subr.bf16.mxu0 0
    %2305 = vmatpush2.bf16.msra.mxu0 0
    %2306 = vmatprep.mubr.bf16.mxu0 0
    %2307 = vmatmul.mubr.bf16.gmra.mxu0 %v2269
    %v2308 = vpop.f32.mrf.mxu0
    %v2309 = vadd.f32 0.0, %v2308
    %v2310 = vpop.f32.mrf.mxu0
    %v2311 = vpop.f32.mrf.mxu0
    %v2312 = vpop.f32.mrf.mxu0
    %2313 = vdwg.mxu0
    %v2314 = vpack.c.bf16 %v1057, %v329
    %2315 = vrot.lane.b32.xlu0 %v1733, 96
    %v2316 = vpop.permute.xlu0 %2315
    %2318 = vrot.lane.b32.xlu0 %v2314, 96
    %v2319 = vpop.permute.xlu0 %2318
    %v2321 = vsel %vm426, %v2316, 0
    %v2324 = vsel %vm426, %v2319, 0
    %2326 = vmatprep.subr.bf16.mxu0 0
    %2327 = vmatpush1.bf16.xpose.msra.mxu0 0
    %2328 = vmatprep.subr.bf16.mxu0 0
    %2329 = vmatpush1.bf16.xpose.msra.mxu0 0
    %2330 = vmatprep.subr.bf16.mxu0 0
    %2331 = vmatpush1.bf16.xpose.msra.mxu0 0
    %2332 = vmatprep.subr.bf16.mxu0 0
    %2333 = vmatpush1.bf16.xpose.msra.mxu0 0
    %2334 = vmatprep.subr.bf16.mxu0 0
    %2335 = vmatpush1.bf16.xpose.msra.mxu0 0
    %2336 = vmatprep.subr.bf16.mxu0 0
    %2337 = vmatpush1.bf16.xpose.msra.mxu0 0
    %2338 = vmatprep.subr.bf16.mxu0 0
    %2339 = vmatpush1.bf16.xpose.msra.mxu0 %v1079
    %2340 = vmatprep.subr.bf16.mxu0 0
    %2341 = vmatpush1.bf16.xpose.msra.mxu0 %v2324
    %2342 = vmatprep.subr.bf16.mxu0 0
    %2343 = vmatpush2.bf16.xpose.msra.mxu0 0
    %2344 = vmatprep.subr.bf16.mxu0 0
    %2345 = vmatpush2.bf16.xpose.msra.mxu0 0
    %2346 = vmatprep.subr.bf16.mxu0 0
    %2347 = vmatpush2.bf16.xpose.msra.mxu0 0
    %2348 = vmatprep.subr.bf16.mxu0 0
    %2349 = vmatpush2.bf16.xpose.msra.mxu0 0
    %2350 = vmatprep.subr.bf16.mxu0 0
    %2351 = vmatpush2.bf16.xpose.msra.mxu0 0
    %2352 = vmatprep.subr.bf16.mxu0 0
    %2353 = vmatpush2.bf16.xpose.msra.mxu0 0
    %2354 = vmatprep.subr.bf16.mxu0 0
    %2355 = vmatpush2.bf16.xpose.msra.mxu0 0
    %2356 = vmatprep.subr.bf16.mxu0 0
    %2357 = vmatpush2.bf16.xpose.msra.mxu0 0
    %2358 = vmatprep.mubr.bf16.mxu0 0
    %2359 = vmatmul.mubr.bf16.gmra.mxu0 %v2321
    %v2360 = vpop.f32.mrf.mxu0
    %v2361 = vadd.f32 0.0, %v2360
    %v2362 = vpop.f32.mrf.mxu0
    %v2363 = vpop.f32.mrf.mxu0
    %v2364 = vpop.f32.mrf.mxu0
    %2365 = vdwg.mxu0
    %2367 = vrot.lane.b32.xlu0 %v2361, 1
    %v2368 = vpop.permute.xlu0 %2367
    %2370 = vrot.lane.b32.xlu0 %v2361, 2
    %v2371 = vpop.permute.xlu0 %2370
    %2373 = vrot.lane.b32.xlu0 %v2361, 3
    %v2374 = vpop.permute.xlu0 %2373
    %2376 = vrot.lane.b32.xlu0 %v2361, 4
    %v2377 = vpop.permute.xlu0 %2376
    %2379 = vrot.lane.b32.xlu0 %v2361, 5
    %v2380 = vpop.permute.xlu0 %2379
    %2382 = vrot.lane.b32.xlu0 %v2361, 6
    %v2383 = vpop.permute.xlu0 %2382
    %2385 = vrot.lane.b32.xlu0 %v2361, 7
    %v2386 = vpop.permute.xlu0 %2385
    %v2388 = vsel %vm498, %v2361, %v2368
    %v2389 = vsel %vm500, %v2388, %v2371
    %v2390 = vsel %vm502, %v2389, %v2374
    %v2391 = vsel %vm504, %v2390, %v2377
    %v2392 = vsel %vm506, %v2391, %v2380
    %v2393 = vsel %vm508, %v2392, %v2383
    %v2394 = vsel %vm510, %v2393, %v2386
    %2396 = vrot.lane.b32.xlu0 %v2394, 113
    %v2397 = vpop.permute.xlu0 %2396
    %v2399 = vadd.f32 %v2361, %v2397
    %v2400 = vsel %vm426, %v2399, -inf
    %2401 = vmax.xlane.f32.xlu0 %v2400
    %v2402 = vpop.xlane.xlu0 %2401
    %v2403 = vsub.f32 %v2399, %v2402
    %v2404 = vmul.f32 %v2403, 1.442695
    %v2405 = vpow.pop %v2404
    %v2406 = vsel %vm426, %v2405, 0.0
    %2407 = vadd.xlane.f32.xlu0 %v2406
    %v2408 = vpop.xlane.xlu0 %2407
    %v2409 = vrcp.pop %v2408
    %v2410 = vmul.f32 %v2405, %v2409
    %v2411 = vpack.c.bf16 %v2410, %v2410
    %2412 = vrot.lane.b32.xlu0 %v1734, 96
    %v2413 = vpop.permute.xlu0 %2412
    %v2415 = vsel %vm426, %v2411, 0
    %v2418 = vsel %vm504, %v2413, 0
    %2420 = vmatprep.subr.bf16.mxu0 0
    %2421 = vmatpush1.bf16.msra.mxu0 0
    %2422 = vmatprep.subr.bf16.mxu0 0
    %2423 = vmatpush1.bf16.msra.mxu0 0
    %2424 = vmatprep.subr.bf16.mxu0 0
    %2425 = vmatpush1.bf16.msra.mxu0 0
    %2426 = vmatprep.subr.bf16.mxu0 0
    %2427 = vmatpush1.bf16.msra.mxu0 0
    %2428 = vmatprep.subr.bf16.mxu0 0
    %2429 = vmatpush1.bf16.msra.mxu0 0
    %2430 = vmatprep.subr.bf16.mxu0 0
    %2431 = vmatpush1.bf16.msra.mxu0 0
    %2432 = vmatprep.subr.bf16.mxu0 0
    %2433 = vmatpush1.bf16.msra.mxu0 0
    %2434 = vmatprep.subr.bf16.mxu0 0
    %2435 = vmatpush1.bf16.msra.mxu0 %v2418
    %2436 = vmatprep.subr.bf16.mxu0 0
    %2437 = vmatpush2.bf16.msra.mxu0 0
    %2438 = vmatprep.subr.bf16.mxu0 0
    %2439 = vmatpush2.bf16.msra.mxu0 0
    %2440 = vmatprep.subr.bf16.mxu0 0
    %2441 = vmatpush2.bf16.msra.mxu0 0
    %2442 = vmatprep.subr.bf16.mxu0 0
    %2443 = vmatpush2.bf16.msra.mxu0 0
    %2444 = vmatprep.subr.bf16.mxu0 0
    %2445 = vmatpush2.bf16.msra.mxu0 0
    %2446 = vmatprep.subr.bf16.mxu0 0
    %2447 = vmatpush2.bf16.msra.mxu0 0
    %2448 = vmatprep.subr.bf16.mxu0 0
    %2449 = vmatpush2.bf16.msra.mxu0 0
    %2450 = vmatprep.subr.bf16.mxu0 0
    %2451 = vmatpush2.bf16.msra.mxu0 0
    %2452 = vmatprep.mubr.bf16.mxu0 0
    %2453 = vmatmul.mubr.bf16.gmra.mxu0 %v2415
    %v2454 = vpop.f32.mrf.mxu0
    %v2455 = vadd.f32 0.0, %v2454
    %v2456 = vpop.f32.mrf.mxu0
    %v2457 = vpop.f32.mrf.mxu0
    %v2458 = vpop.f32.mrf.mxu0
    %2459 = vdwg.mxu0
    %v2460 = vpack.c.bf16 %v1216, %v329
    %2461 = vrot.lane.b32.xlu0 %v1733, 88
    %v2462 = vpop.permute.xlu0 %2461
    %2464 = vrot.lane.b32.xlu0 %v2460, 88
    %v2465 = vpop.permute.xlu0 %2464
    %v2467 = vsel %vm426, %v2462, 0
    %v2470 = vsel %vm426, %v2465, 0
    %2472 = vmatprep.subr.bf16.mxu0 0
    %2473 = vmatpush1.bf16.xpose.msra.mxu0 0
    %2474 = vmatprep.subr.bf16.mxu0 0
    %2475 = vmatpush1.bf16.xpose.msra.mxu0 0
    %2476 = vmatprep.subr.bf16.mxu0 0
    %2477 = vmatpush1.bf16.xpose.msra.mxu0 0
    %2478 = vmatprep.subr.bf16.mxu0 0
    %2479 = vmatpush1.bf16.xpose.msra.mxu0 0
    %2480 = vmatprep.subr.bf16.mxu0 0
    %2481 = vmatpush1.bf16.xpose.msra.mxu0 0
    %2482 = vmatprep.subr.bf16.mxu0 0
    %2483 = vmatpush1.bf16.xpose.msra.mxu0 0
    %2484 = vmatprep.subr.bf16.mxu0 0
    %2485 = vmatpush1.bf16.xpose.msra.mxu0 %v1238
    %2486 = vmatprep.subr.bf16.mxu0 0
    %2487 = vmatpush1.bf16.xpose.msra.mxu0 %v2470
    %2488 = vmatprep.subr.bf16.mxu0 0
    %2489 = vmatpush2.bf16.xpose.msra.mxu0 0
    %2490 = vmatprep.subr.bf16.mxu0 0
    %2491 = vmatpush2.bf16.xpose.msra.mxu0 0
    %2492 = vmatprep.subr.bf16.mxu0 0
    %2493 = vmatpush2.bf16.xpose.msra.mxu0 0
    %2494 = vmatprep.subr.bf16.mxu0 0
    %2495 = vmatpush2.bf16.xpose.msra.mxu0 0
    %2496 = vmatprep.subr.bf16.mxu0 0
    %2497 = vmatpush2.bf16.xpose.msra.mxu0 0
    %2498 = vmatprep.subr.bf16.mxu0 0
    %2499 = vmatpush2.bf16.xpose.msra.mxu0 0
    %2500 = vmatprep.subr.bf16.mxu0 0
    %2501 = vmatpush2.bf16.xpose.msra.mxu0 0
    %2502 = vmatprep.subr.bf16.mxu0 0
    %2503 = vmatpush2.bf16.xpose.msra.mxu0 0
    %2504 = vmatprep.mubr.bf16.mxu0 0
    %2505 = vmatmul.mubr.bf16.gmra.mxu0 %v2467
    %v2506 = vpop.f32.mrf.mxu0
    %v2507 = vadd.f32 0.0, %v2506
    %v2508 = vpop.f32.mrf.mxu0
    %v2509 = vpop.f32.mrf.mxu0
    %v2510 = vpop.f32.mrf.mxu0
    %2511 = vdwg.mxu0
    %2513 = vrot.lane.b32.xlu0 %v2507, 1
    %v2514 = vpop.permute.xlu0 %2513
    %2516 = vrot.lane.b32.xlu0 %v2507, 2
    %v2517 = vpop.permute.xlu0 %2516
    %2519 = vrot.lane.b32.xlu0 %v2507, 3
    %v2520 = vpop.permute.xlu0 %2519
    %2522 = vrot.lane.b32.xlu0 %v2507, 4
    %v2523 = vpop.permute.xlu0 %2522
    %2525 = vrot.lane.b32.xlu0 %v2507, 5
    %v2526 = vpop.permute.xlu0 %2525
    %2528 = vrot.lane.b32.xlu0 %v2507, 6
    %v2529 = vpop.permute.xlu0 %2528
    %2531 = vrot.lane.b32.xlu0 %v2507, 7
    %v2532 = vpop.permute.xlu0 %2531
    %v2534 = vsel %vm498, %v2507, %v2514
    %v2535 = vsel %vm500, %v2534, %v2517
    %v2536 = vsel %vm502, %v2535, %v2520
    %v2537 = vsel %vm504, %v2536, %v2523
    %v2538 = vsel %vm506, %v2537, %v2526
    %v2539 = vsel %vm508, %v2538, %v2529
    %v2540 = vsel %vm510, %v2539, %v2532
    %2542 = vrot.lane.b32.xlu0 %v2540, 113
    %v2543 = vpop.permute.xlu0 %2542
    %v2545 = vadd.f32 %v2507, %v2543
    %v2546 = vsel %vm426, %v2545, -inf
    %2547 = vmax.xlane.f32.xlu0 %v2546
    %v2548 = vpop.xlane.xlu0 %2547
    %v2549 = vsub.f32 %v2545, %v2548
    %v2550 = vmul.f32 %v2549, 1.442695
    %v2551 = vpow.pop %v2550
    %v2552 = vsel %vm426, %v2551, 0.0
    %2553 = vadd.xlane.f32.xlu0 %v2552
    %v2554 = vpop.xlane.xlu0 %2553
    %v2555 = vrcp.pop %v2554
    %v2556 = vmul.f32 %v2551, %v2555
    %v2557 = vpack.c.bf16 %v2556, %v2556
    %2558 = vrot.lane.b32.xlu0 %v1734, 88
    %v2559 = vpop.permute.xlu0 %2558
    %v2561 = vsel %vm426, %v2557, 0
    %v2564 = vsel %vm504, %v2559, 0
    %2566 = vmatprep.subr.bf16.mxu0 0
    %2567 = vmatpush1.bf16.msra.mxu0 0
    %2568 = vmatprep.subr.bf16.mxu0 0
    %2569 = vmatpush1.bf16.msra.mxu0 0
    %2570 = vmatprep.subr.bf16.mxu0 0
    %2571 = vmatpush1.bf16.msra.mxu0 0
    %2572 = vmatprep.subr.bf16.mxu0 0
    %2573 = vmatpush1.bf16.msra.mxu0 0
    %2574 = vmatprep.subr.bf16.mxu0 0
    %2575 = vmatpush1.bf16.msra.mxu0 0
    %2576 = vmatprep.subr.bf16.mxu0 0
    %2577 = vmatpush1.bf16.msra.mxu0 0
    %2578 = vmatprep.subr.bf16.mxu0 0
    %2579 = vmatpush1.bf16.msra.mxu0 0
    %2580 = vmatprep.subr.bf16.mxu0 0
    %2581 = vmatpush1.bf16.msra.mxu0 %v2564
    %2582 = vmatprep.subr.bf16.mxu0 0
    %2583 = vmatpush2.bf16.msra.mxu0 0
    %2584 = vmatprep.subr.bf16.mxu0 0
    %2585 = vmatpush2.bf16.msra.mxu0 0
    %2586 = vmatprep.subr.bf16.mxu0 0
    %2587 = vmatpush2.bf16.msra.mxu0 0
    %2588 = vmatprep.subr.bf16.mxu0 0
    %2589 = vmatpush2.bf16.msra.mxu0 0
    %2590 = vmatprep.subr.bf16.mxu0 0
    %2591 = vmatpush2.bf16.msra.mxu0 0
    %2592 = vmatprep.subr.bf16.mxu0 0
    %2593 = vmatpush2.bf16.msra.mxu0 0
    %2594 = vmatprep.subr.bf16.mxu0 0
    %2595 = vmatpush2.bf16.msra.mxu0 0
    %2596 = vmatprep.subr.bf16.mxu0 0
    %2597 = vmatpush2.bf16.msra.mxu0 0
    %2598 = vmatprep.mubr.bf16.mxu0 0
    %2599 = vmatmul.mubr.bf16.gmra.mxu0 %v2561
    %v2600 = vpop.f32.mrf.mxu0
    %v2601 = vadd.f32 0.0, %v2600
    %v2602 = vpop.f32.mrf.mxu0
    %v2603 = vpop.f32.mrf.mxu0
    %v2604 = vpop.f32.mrf.mxu0
    %2605 = vdwg.mxu0
    %v2606 = vpack.c.bf16 %v1375, %v329
    %2607 = vrot.lane.b32.xlu0 %v1733, 80
    %v2608 = vpop.permute.xlu0 %2607
    %2610 = vrot.lane.b32.xlu0 %v2606, 80
    %v2611 = vpop.permute.xlu0 %2610
    %v2613 = vsel %vm426, %v2608, 0
    %v2616 = vsel %vm426, %v2611, 0
    %2618 = vmatprep.subr.bf16.mxu0 0
    %2619 = vmatpush1.bf16.xpose.msra.mxu0 0
    %2620 = vmatprep.subr.bf16.mxu0 0
    %2621 = vmatpush1.bf16.xpose.msra.mxu0 0
    %2622 = vmatprep.subr.bf16.mxu0 0
    %2623 = vmatpush1.bf16.xpose.msra.mxu0 0
    %2624 = vmatprep.subr.bf16.mxu0 0
    %2625 = vmatpush1.bf16.xpose.msra.mxu0 0
    %2626 = vmatprep.subr.bf16.mxu0 0
    %2627 = vmatpush1.bf16.xpose.msra.mxu0 0
    %2628 = vmatprep.subr.bf16.mxu0 0
    %2629 = vmatpush1.bf16.xpose.msra.mxu0 0
    %2630 = vmatprep.subr.bf16.mxu0 0
    %2631 = vmatpush1.bf16.xpose.msra.mxu0 %v1397
    %2632 = vmatprep.subr.bf16.mxu0 0
    %2633 = vmatpush1.bf16.xpose.msra.mxu0 %v2616
    %2634 = vmatprep.subr.bf16.mxu0 0
    %2635 = vmatpush2.bf16.xpose.msra.mxu0 0
    %2636 = vmatprep.subr.bf16.mxu0 0
    %2637 = vmatpush2.bf16.xpose.msra.mxu0 0
    %2638 = vmatprep.subr.bf16.mxu0 0
    %2639 = vmatpush2.bf16.xpose.msra.mxu0 0
    %2640 = vmatprep.subr.bf16.mxu0 0
    %2641 = vmatpush2.bf16.xpose.msra.mxu0 0
    %2642 = vmatprep.subr.bf16.mxu0 0
    %2643 = vmatpush2.bf16.xpose.msra.mxu0 0
    %2644 = vmatprep.subr.bf16.mxu0 0
    %2645 = vmatpush2.bf16.xpose.msra.mxu0 0
    %2646 = vmatprep.subr.bf16.mxu0 0
    %2647 = vmatpush2.bf16.xpose.msra.mxu0 0
    %2648 = vmatprep.subr.bf16.mxu0 0
    %2649 = vmatpush2.bf16.xpose.msra.mxu0 0
    %2650 = vmatprep.mubr.bf16.mxu0 0
    %2651 = vmatmul.mubr.bf16.gmra.mxu0 %v2613
    %v2652 = vpop.f32.mrf.mxu0
    %v2653 = vadd.f32 0.0, %v2652
    %v2654 = vpop.f32.mrf.mxu0
    %v2655 = vpop.f32.mrf.mxu0
    %v2656 = vpop.f32.mrf.mxu0
    %2657 = vdwg.mxu0
    %2659 = vrot.lane.b32.xlu0 %v2653, 1
    %v2660 = vpop.permute.xlu0 %2659
    %2662 = vrot.lane.b32.xlu0 %v2653, 2
    %v2663 = vpop.permute.xlu0 %2662
    %2665 = vrot.lane.b32.xlu0 %v2653, 3
    %v2666 = vpop.permute.xlu0 %2665
    %2668 = vrot.lane.b32.xlu0 %v2653, 4
    %v2669 = vpop.permute.xlu0 %2668
    %2671 = vrot.lane.b32.xlu0 %v2653, 5
    %v2672 = vpop.permute.xlu0 %2671
    %2674 = vrot.lane.b32.xlu0 %v2653, 6
    %v2675 = vpop.permute.xlu0 %2674
    %2677 = vrot.lane.b32.xlu0 %v2653, 7
    %v2678 = vpop.permute.xlu0 %2677
    %v2680 = vsel %vm498, %v2653, %v2660
    %v2681 = vsel %vm500, %v2680, %v2663
    %v2682 = vsel %vm502, %v2681, %v2666
    %v2683 = vsel %vm504, %v2682, %v2669
    %v2684 = vsel %vm506, %v2683, %v2672
    %v2685 = vsel %vm508, %v2684, %v2675
    %v2686 = vsel %vm510, %v2685, %v2678
    %2688 = vrot.lane.b32.xlu0 %v2686, 113
    %v2689 = vpop.permute.xlu0 %2688
    %v2691 = vadd.f32 %v2653, %v2689
    %v2692 = vsel %vm426, %v2691, -inf
    %2693 = vmax.xlane.f32.xlu0 %v2692
    %v2694 = vpop.xlane.xlu0 %2693
    %v2695 = vsub.f32 %v2691, %v2694
    %v2696 = vmul.f32 %v2695, 1.442695
    %v2697 = vpow.pop %v2696
    %v2698 = vsel %vm426, %v2697, 0.0
    %2699 = vadd.xlane.f32.xlu0 %v2698
    %v2700 = vpop.xlane.xlu0 %2699
    %v2701 = vrcp.pop %v2700
    %v2702 = vmul.f32 %v2697, %v2701
    %v2703 = vpack.c.bf16 %v2702, %v2702
    %2704 = vrot.lane.b32.xlu0 %v1734, 80
    %v2705 = vpop.permute.xlu0 %2704
    %v2707 = vsel %vm426, %v2703, 0
    %v2710 = vsel %vm504, %v2705, 0
    %2712 = vmatprep.subr.bf16.mxu0 0
    %2713 = vmatpush1.bf16.msra.mxu0 0
    %2714 = vmatprep.subr.bf16.mxu0 0
    %2715 = vmatpush1.bf16.msra.mxu0 0
    %2716 = vmatprep.subr.bf16.mxu0 0
    %2717 = vmatpush1.bf16.msra.mxu0 0
    %2718 = vmatprep.subr.bf16.mxu0 0
    %2719 = vmatpush1.bf16.msra.mxu0 0
    %2720 = vmatprep.subr.bf16.mxu0 0
    %2721 = vmatpush1.bf16.msra.mxu0 0
    %2722 = vmatprep.subr.bf16.mxu0 0
    %2723 = vmatpush1.bf16.msra.mxu0 0
    %2724 = vmatprep.subr.bf16.mxu0 0
    %2725 = vmatpush1.bf16.msra.mxu0 0
    %2726 = vmatprep.subr.bf16.mxu0 0
    %2727 = vmatpush1.bf16.msra.mxu0 %v2710
    %2728 = vmatprep.subr.bf16.mxu0 0
    %2729 = vmatpush2.bf16.msra.mxu0 0
    %2730 = vmatprep.subr.bf16.mxu0 0
    %2731 = vmatpush2.bf16.msra.mxu0 0
    %2732 = vmatprep.subr.bf16.mxu0 0
    %2733 = vmatpush2.bf16.msra.mxu0 0
    %2734 = vmatprep.subr.bf16.mxu0 0
    %2735 = vmatpush2.bf16.msra.mxu0 0
    %2736 = vmatprep.subr.bf16.mxu0 0
    %2737 = vmatpush2.bf16.msra.mxu0 0
    %2738 = vmatprep.subr.bf16.mxu0 0
    %2739 = vmatpush2.bf16.msra.mxu0 0
    %2740 = vmatprep.subr.bf16.mxu0 0
    %2741 = vmatpush2.bf16.msra.mxu0 0
    %2742 = vmatprep.subr.bf16.mxu0 0
    %2743 = vmatpush2.bf16.msra.mxu0 0
    %2744 = vmatprep.mubr.bf16.mxu0 0
    %2745 = vmatmul.mubr.bf16.gmra.mxu0 %v2707
    %v2746 = vpop.f32.mrf.mxu0
    %v2747 = vadd.f32 0.0, %v2746
    %v2748 = vpop.f32.mrf.mxu0
    %v2749 = vpop.f32.mrf.mxu0
    %v2750 = vpop.f32.mrf.mxu0
    %2751 = vdwg.mxu0
    %v2752 = vpack.c.bf16 %v1534, %v329
    %2753 = vrot.lane.b32.xlu0 %v1733, 72
    %v2754 = vpop.permute.xlu0 %2753
    %2756 = vrot.lane.b32.xlu0 %v2752, 72
    %v2757 = vpop.permute.xlu0 %2756
    %v2759 = vsel %vm426, %v2754, 0
    %v2762 = vsel %vm426, %v2757, 0
    %2764 = vmatprep.subr.bf16.mxu0 0
    %2765 = vmatpush1.bf16.xpose.msra.mxu0 0
    %2766 = vmatprep.subr.bf16.mxu0 0
    %2767 = vmatpush1.bf16.xpose.msra.mxu0 0
    %2768 = vmatprep.subr.bf16.mxu0 0
    %2769 = vmatpush1.bf16.xpose.msra.mxu0 0
    %2770 = vmatprep.subr.bf16.mxu0 0
    %2771 = vmatpush1.bf16.xpose.msra.mxu0 0
    %2772 = vmatprep.subr.bf16.mxu0 0
    %2773 = vmatpush1.bf16.xpose.msra.mxu0 0
    %2774 = vmatprep.subr.bf16.mxu0 0
    %2775 = vmatpush1.bf16.xpose.msra.mxu0 0
    %2776 = vmatprep.subr.bf16.mxu0 0
    %2777 = vmatpush1.bf16.xpose.msra.mxu0 %v1556
    %2778 = vmatprep.subr.bf16.mxu0 0
    %2779 = vmatpush1.bf16.xpose.msra.mxu0 %v2762
    %2780 = vmatprep.subr.bf16.mxu0 0
    %2781 = vmatpush2.bf16.xpose.msra.mxu0 0
    %2782 = vmatprep.subr.bf16.mxu0 0
    %2783 = vmatpush2.bf16.xpose.msra.mxu0 0
    %2784 = vmatprep.subr.bf16.mxu0 0
    %2785 = vmatpush2.bf16.xpose.msra.mxu0 0
    %2786 = vmatprep.subr.bf16.mxu0 0
    %2787 = vmatpush2.bf16.xpose.msra.mxu0 0
    %2788 = vmatprep.subr.bf16.mxu0 0
    %2789 = vmatpush2.bf16.xpose.msra.mxu0 0
    %2790 = vmatprep.subr.bf16.mxu0 0
    %2791 = vmatpush2.bf16.xpose.msra.mxu0 0
    %2792 = vmatprep.subr.bf16.mxu0 0
    %2793 = vmatpush2.bf16.xpose.msra.mxu0 0
    %2794 = vmatprep.subr.bf16.mxu0 0
    %2795 = vmatpush2.bf16.xpose.msra.mxu0 0
    %2796 = vmatprep.mubr.bf16.mxu0 0
    %2797 = vmatmul.mubr.bf16.gmra.mxu0 %v2759
    %v2798 = vpop.f32.mrf.mxu0
    %v2799 = vadd.f32 0.0, %v2798
    %v2800 = vpop.f32.mrf.mxu0
    %v2801 = vpop.f32.mrf.mxu0
    %v2802 = vpop.f32.mrf.mxu0
    %2803 = vdwg.mxu0
    %2805 = vrot.lane.b32.xlu0 %v2799, 1
    %v2806 = vpop.permute.xlu0 %2805
    %2808 = vrot.lane.b32.xlu0 %v2799, 2
    %v2809 = vpop.permute.xlu0 %2808
    %2811 = vrot.lane.b32.xlu0 %v2799, 3
    %v2812 = vpop.permute.xlu0 %2811
    %2814 = vrot.lane.b32.xlu0 %v2799, 4
    %v2815 = vpop.permute.xlu0 %2814
    %2817 = vrot.lane.b32.xlu0 %v2799, 5
    %v2818 = vpop.permute.xlu0 %2817
    %2820 = vrot.lane.b32.xlu0 %v2799, 6
    %v2821 = vpop.permute.xlu0 %2820
    %2823 = vrot.lane.b32.xlu0 %v2799, 7
    %v2824 = vpop.permute.xlu0 %2823
    %v2826 = vsel %vm498, %v2799, %v2806
    %v2827 = vsel %vm500, %v2826, %v2809
    %v2828 = vsel %vm502, %v2827, %v2812
    %v2829 = vsel %vm504, %v2828, %v2815
    %v2830 = vsel %vm506, %v2829, %v2818
    %v2831 = vsel %vm508, %v2830, %v2821
    %v2832 = vsel %vm510, %v2831, %v2824
    %2834 = vrot.lane.b32.xlu0 %v2832, 113
    %v2835 = vpop.permute.xlu0 %2834
    %v2837 = vadd.f32 %v2799, %v2835
    %v2838 = vsel %vm426, %v2837, -inf
    %2839 = vmax.xlane.f32.xlu0 %v2838
    %v2840 = vpop.xlane.xlu0 %2839
    %v2841 = vsub.f32 %v2837, %v2840
    %v2842 = vmul.f32 %v2841, 1.442695
    %v2843 = vpow.pop %v2842
    %v2844 = vsel %vm426, %v2843, 0.0
    %2845 = vadd.xlane.f32.xlu0 %v2844
    %v2846 = vpop.xlane.xlu0 %2845
    %v2847 = vrcp.pop %v2846
    %v2848 = vmul.f32 %v2843, %v2847
    %v2849 = vpack.c.bf16 %v2848, %v2848
    %2850 = vrot.lane.b32.xlu0 %v1734, 72
    %v2851 = vpop.permute.xlu0 %2850
    %v2853 = vsel %vm426, %v2849, 0
    %v2856 = vsel %vm504, %v2851, 0
    %2858 = vmatprep.subr.bf16.mxu0 0
    %2859 = vmatpush1.bf16.msra.mxu0 0
    %2860 = vmatprep.subr.bf16.mxu0 0
    %2861 = vmatpush1.bf16.msra.mxu0 0
    %2862 = vmatprep.subr.bf16.mxu0 0
    %2863 = vmatpush1.bf16.msra.mxu0 0
    %2864 = vmatprep.subr.bf16.mxu0 0
    %2865 = vmatpush1.bf16.msra.mxu0 0
    %2866 = vmatprep.subr.bf16.mxu0 0
    %2867 = vmatpush1.bf16.msra.mxu0 0
    %2868 = vmatprep.subr.bf16.mxu0 0
    %2869 = vmatpush1.bf16.msra.mxu0 0
    %2870 = vmatprep.subr.bf16.mxu0 0
    %2871 = vmatpush1.bf16.msra.mxu0 0
    %2872 = vmatprep.subr.bf16.mxu0 0
    %2873 = vmatpush1.bf16.msra.mxu0 %v2856
    %2874 = vmatprep.subr.bf16.mxu0 0
    %2875 = vmatpush2.bf16.msra.mxu0 0
    %2876 = vmatprep.subr.bf16.mxu0 0
    %2877 = vmatpush2.bf16.msra.mxu0 0
    %2878 = vmatprep.subr.bf16.mxu0 0
    %2879 = vmatpush2.bf16.msra.mxu0 0
    %2880 = vmatprep.subr.bf16.mxu0 0
    %2881 = vmatpush2.bf16.msra.mxu0 0
    %2882 = vmatprep.subr.bf16.mxu0 0
    %2883 = vmatpush2.bf16.msra.mxu0 0
    %2884 = vmatprep.subr.bf16.mxu0 0
    %2885 = vmatpush2.bf16.msra.mxu0 0
    %2886 = vmatprep.subr.bf16.mxu0 0
    %2887 = vmatpush2.bf16.msra.mxu0 0
    %2888 = vmatprep.subr.bf16.mxu0 0
    %2889 = vmatpush2.bf16.msra.mxu0 0
    %2890 = vmatprep.mubr.bf16.mxu0 0
    %2891 = vmatmul.mubr.bf16.gmra.mxu0 %v2853
    %v2892 = vpop.f32.mrf.mxu0
    %v2893 = vadd.f32 0.0, %v2892
    %v2894 = vpop.f32.mrf.mxu0
    %v2895 = vpop.f32.mrf.mxu0
    %v2896 = vpop.f32.mrf.mxu0
    %2897 = vdwg.mxu0
    %2899 = vrot.lane.b32.xlu0 %v2017, 8
    %v2900 = vpop.permute.xlu0 %2899
    %2903 = vrot.lane.b32.xlu0 %v2163, 16
    %v2904 = vpop.permute.xlu0 %2903
    %2907 = vrot.lane.b32.xlu0 %v2309, 24
    %v2908 = vpop.permute.xlu0 %2907
    %2911 = vrot.lane.b32.xlu0 %v2455, 32
    %v2912 = vpop.permute.xlu0 %2911
    %2915 = vrot.lane.b32.xlu0 %v2601, 40
    %v2916 = vpop.permute.xlu0 %2915
    %2919 = vrot.lane.b32.xlu0 %v2747, 48
    %v2920 = vpop.permute.xlu0 %2919
    %2923 = vrot.lane.b32.xlu0 %v2893, 56
    %v2924 = vpop.permute.xlu0 %2923
    %v2926 = vsel %vm426, %v1869, %v2900
    %v2927 = vsel %vm1721, %v2926, %v2904
    %v2928 = vsel %vm1723, %v2927, %v2908
    %v2929 = vsel %vm1725, %v2928, %v2912
    %v2930 = vsel %vm1727, %v2929, %v2916
    %v2931 = vsel %vm1729, %v2930, %v2920
    %v2932 = vsel %vm1731, %v2931, %v2924
    %v2933 = vpack.c.bf16 %v2932, %v1732
    %v2934 = vld [vmem:[#allocation16] sm:$0xf]
    %v2935 = vld [vmem:[#allocation16 + $0x4] sm:$0xf]
    %v2936 = vld [vmem:[#allocation16 + $0x8] sm:$0xf]
    %v2937 = vld [vmem:[#allocation16 + $0xc] sm:$0xf]
    %v2938 = vld [vmem:[#allocation16 + $0x10] sm:$0xf]
    %v2939 = vld [vmem:[#allocation16 + $0x14] sm:$0xf]
    %v2940 = vld [vmem:[#allocation16 + $0x18] sm:$0xf]
    %v2941 = vld [vmem:[#allocation16 + $0x1c] sm:$0xf]
    %v2942 = vld [vmem:[%s10] sm:$0x1]
    %v2944 = vlaneseq
    %v2945 = vshrl.u32 %v2944, 7
    %v2946 = vsub.s32 0, %v2945
    %v2947 = vrot.slane %v2942, %v2946
    %v2957 = vunpack.c.l.b16 %v2934
    %v2958 = vunpack.c.l.b16 %v2935
    %v2959 = vunpack.c.l.b16 %v2936
    %v2960 = vunpack.c.l.b16 %v2937
    %v2961 = vunpack.c.l.b16 %v2938
    %v2962 = vunpack.c.l.b16 %v2939
    %v2963 = vunpack.c.l.b16 %v2940
    %v2964 = vunpack.c.l.b16 %v2941
    %v2965 = vpack.c.b16 %v2958, %v2957
    %v2966 = vpack.c.b16 %v2960, %v2959
    %v2967 = vpack.c.b16 %v2962, %v2961
    %v2968 = vpack.c.b16 %v2964, %v2963
    %v2974 = vsel %vm201, %v2933, 0
    %2976 = vmatprep.subr.bf16.mxu0 0
    %2977 = vmatpush1.bf16.msra.mxu0 0
    %2978 = vmatprep.subr.bf16.mxu0 0
    %2979 = vmatpush1.bf16.msra.mxu0 0
    %2980 = vmatprep.subr.bf16.mxu0 0
    %2981 = vmatpush1.bf16.msra.mxu0 0
    %2982 = vmatprep.subr.bf16.mxu0 0
    %2983 = vmatpush1.bf16.msra.mxu0 0
    %2984 = vmatprep.subr.bf16.mxu0 0
    %2985 = vmatpush1.bf16.msra.mxu0 %v2968
    %2986 = vmatprep.subr.bf16.mxu0 0
    %2987 = vmatpush1.bf16.msra.mxu0 %v2967
    %2988 = vmatprep.subr.bf16.mxu0 0
    %2989 = vmatpush1.bf16.msra.mxu0 %v2966
    %2990 = vmatprep.subr.bf16.mxu0 0
    %2991 = vmatpush1.bf16.msra.mxu0 %v2965
    %2992 = vmatprep.subr.bf16.mxu0 0
    %2993 = vmatpush2.bf16.msra.mxu0 0
    %2994 = vmatprep.subr.bf16.mxu0 0
    %2995 = vmatpush2.bf16.msra.mxu0 0
    %2996 = vmatprep.subr.bf16.mxu0 0
    %2997 = vmatpush2.bf16.msra.mxu0 0
    %2998 = vmatprep.subr.bf16.mxu0 0
    %2999 = vmatpush2.bf16.msra.mxu0 0
    %3000 = vmatprep.subr.bf16.mxu0 0
    %3001 = vmatpush2.bf16.msra.mxu0 0
    %3002 = vmatprep.subr.bf16.mxu0 0
    %3003 = vmatpush2.bf16.msra.mxu0 0
    %3004 = vmatprep.subr.bf16.mxu0 0
    %3005 = vmatpush2.bf16.msra.mxu0 0
    %3006 = vmatprep.subr.bf16.mxu0 0
    %3007 = vmatpush2.bf16.msra.mxu0 0
    %3008 = vmatprep.mubr.bf16.mxu0 0
    %3009 = vmatmul.mubr.bf16.gmra.mxu0 %v2974
    %v3010 = vpop.f32.mrf.mxu0
    %v3011 = vadd.f32 %v2947, %v3010
    %v3012 = vpop.f32.mrf.mxu0
    %v3013 = vpop.f32.mrf.mxu0
    %v3014 = vadd.f32 %v2947, %v3013
    %v3015 = vpop.f32.mrf.mxu0
    %3016 = vdwg.mxu0
    %3017 = vst.msk [vmem:[#allocation17] sm:$0xff] %vm201, %v3011
    %3018 = vst.msk [vmem:[#allocation17 + $0x8] sm:$0xff] %vm201, %v3014
    // Predicated region
    $region86: #{tpu_custom_call.1} parent=1 // pred_check
      _
    $region87: #{tpu_custom_call.1} parent=1 // pred_check_branch
      %3020 = sbr.rel (0) target = $region89
    $region88: #{tpu_custom_call.1} parent=1 // pred_region
      %s3022 = ssub.s32 256, 256
      %3023 = vsyncadd [#allocation4], %s3022
      %s3024 = sshll.u32 [#allocation17], 4
      %s3025 = int_to_ptr.vmem [resolvable:$true] %s3024
      %3030 = dma.vmem_to_hbm [thread:$0]  %s3025, 256, %s12, [#allocation4], 128, 128, 8
    $region89: #{tpu_custom_call.1} parent=1 // pred_fallthru
      _
    // Predicated region
    $region90: #{tpu_custom_call.1} parent=1 // pred_check
      _
    $region91: #{tpu_custom_call.1} parent=1 // pred_check_branch
      %3032 = sbr.rel (0) target = $region93
    $region92: #{tpu_custom_call.1} parent=1 // pred_region
      %3033 = dma.done [#allocation4], 256
    $region93: #{tpu_custom_call.1} parent=1 // pred_fallthru
      _
    %3034 = vsyncpa [#allocation3], 1
    %3035 = vsyncpa [#allocation6], 1
    %3036 = vsyncpa [#allocation9], 1
    %3037 = vsyncpa [#allocation12], 1
    %3038 = vsyncpa [#allocation15], 1
    %3039 = vsyncpa [#allocation4], 1

</llo_original>
